<compile_context>
chip_gen: v7x
topology: tpu7x:2x2x1
jax: 0.10.0
libtpu: 0.0.40
codegen_flags: <defaults>
</compile_context>

<pallas_src>
import functools

import jax
import jax.numpy as jnp
from jax.experimental import pallas as pl
from jax.experimental.pallas import tpu as pltpu

LANES = 512  # wide, lane-dense slab (multiple of the 128-lane vreg axis)


# ----------------------------------------------------------------------------
# Pallas kernel: fused AdaptiveRegularizer state update (elementwise hot path)
# ----------------------------------------------------------------------------

def _adareg_kernel(grad_err_ref, grad_reg_ref, reg_w_ref, eas_ref,
                   grad_out_ref, eas_out_ref, reg_w_out_ref,
                   *, beta, threshold, reg_multiplier):
    g_err = grad_err_ref[...]                       # f32
    g_reg = grad_reg_ref[...]                       # f32
    rw = reg_w_ref[...].astype(jnp.float32)         # bf16 storage -> f32 math
    eas = eas_ref[...]                              # f32

    # combined gradient: error grad + reg_weights * reg grad
    g = g_err + rw * g_reg

    # exponential moving average of squared gradient
    new_eas = beta * eas + (1.0 - beta) * g * g

    # adapt regularization weights where the grad signal is small.
    # NOTE: threshold test uses the NEW exp_avg_sq but scales the OLD
    # reg_weights — this matches the PyTorch ordering; do not swap.
    new_rw = jnp.where(new_eas < threshold, rw * reg_multiplier, rw)

    grad_out_ref[...] = g
    eas_out_ref[...] = new_eas
    reg_w_out_ref[...] = new_rw.astype(jnp.bfloat16)


def adareg_update(grad_err, grad_reg, reg_weights, exp_avg_sq,
                  *, beta, threshold, reg_multiplier,
                  block_rows=512, buffering=None):
    """Fused AdaptiveRegularizer update on (R, LANES) slabs.

    grad_err, grad_reg, exp_avg_sq: float32 (R, LANES); reg_weights: bfloat16
    (R, LANES); R % block_rows == 0 and R/block_rows is even.  Returns
    (combined_grad f32, new_exp_avg_sq f32, new_reg_weights bf16).  grad_err /
    exp_avg_sq / reg_weights are aliased to the outputs — donate them.
    """
    R, L = grad_err.shape
    assert L == LANES and R % block_rows == 0, (R, L, block_rows)
    assert reg_weights.dtype == jnp.bfloat16
    assert grad_err.dtype == grad_reg.dtype == exp_avg_sq.dtype == jnp.float32

    grid = (R // block_rows,)

    def make_spec(deep):
        if deep is None:
            return pl.BlockSpec((block_rows, LANES), lambda i: (i, 0))
        # v6e sweep knob: 3-deep input buffering to hide tile-boundary DMA.
        return pl.BlockSpec((block_rows, LANES), lambda i: (i, 0),
                            pipeline_mode=pl.Buffered(deep))

    in_spec = make_spec(buffering)
    out_spec = pl.BlockSpec((block_rows, LANES), lambda i: (i, 0))

    kernel = functools.partial(_adareg_kernel, beta=beta, threshold=threshold,
                               reg_multiplier=reg_multiplier)

    n = R * L
    f32_sds = jax.ShapeDtypeStruct((R, L), jnp.float32)
    bf16_sds = jax.ShapeDtypeStruct((R, L), jnp.bfloat16)

    return pl.pallas_call(
        kernel,
        out_shape=(f32_sds, f32_sds, bf16_sds),
        grid=grid,
        in_specs=[in_spec, in_spec, in_spec, in_spec],
        out_specs=(out_spec, out_spec, out_spec),
        # In-place state update: grad_err -> grad (f32), exp_avg_sq ->
        # exp_avg_sq (f32), reg_weights -> reg_weights (bf16).
        input_output_aliases={0: 0, 3: 1, 2: 2},
        cost_estimate=pl.CostEstimate(
            # reads: 4+4+2+4 B/elem, writes: 4+4+2 B/elem = 24 B/elem
            flops=7 * n, transcendentals=0, bytes_accessed=24 * n),
        compiler_params=pltpu.CompilerParams(
            dimension_semantics=("parallel",),
            # 7 streams x 2 bufs x 512x512 tiles ~= 13 MiB: fits every
            # generation's scoped limit; leaves headroom on v7x's 64 MiB part.
            vmem_limit_bytes=32 * 1024 * 1024),
    )(grad_err, grad_reg, reg_weights, exp_avg_sq)


# ----------------------------------------------------------------------------
# Slab layout helpers: state lives permanently in (R, LANES) slab form.
# ----------------------------------------------------------------------------

def make_slab_layout(params, block_rows, lanes=LANES):
    """Build pack/unpack fns and the padded slab shape for a param tree.

    Pads to an EVEN number of blocks (>= 2) so the "parallel" grid axis splits
    evenly across v7x's two TensorCores.
    """
    names = sorted(params.keys())
    sizes = [int(params[n].size) for n in names]
    shapes = [params[n].shape for n in names]
    total = sum(sizes)

    block_elems = block_rows * lanes
    n_blocks = -(-total // block_elems)            # ceil
    n_blocks = max(2, n_blocks + (n_blocks % 2))   # even and >= 2
    rows = n_blocks * block_rows
    pad_to = rows * lanes

    def pack(tree, dtype=jnp.float32):
        vec = jnp.concatenate([tree[n].reshape(-1) for n in names])
        vec = jnp.pad(vec, (0, pad_to - total)).astype(dtype)
        return vec.reshape(rows, lanes)

    def unpack(slab):
        v = slab.reshape(-1)[:total].astype(jnp.float32)
        out, off = {}, 0
        for n, s, sh in zip(names, sizes, shapes):
            out[n] = v[off:off + s].reshape(sh)
            off += s
        return out

    return pack, unpack, (rows, lanes)


if __name__ == "__main__":
    key = jax.random.PRNGKey(0)
    k1, k2, k3, k4 = jax.random.split(key, 4)

    # Tiny synthetic model: one linear layer (like nn.Linear(16, 32)).
    W = jax.random.normal(k1, (32, 16), jnp.float32) * 0.1
    b = jnp.zeros((32,), jnp.float32)
    params = {"linear_weight": W, "linear_bias": b}

    # Synthetic data for the two losses.
    x = jax.random.normal(k2, (2, 16), jnp.float32)
    y = jax.random.normal(k3, (2, 32), jnp.float32)

    def error_loss(p):
        pred = x @ p["linear_weight"].T + p["linear_bias"]
        return jnp.mean((pred - y) ** 2)

    def reg_loss(p):
        return 0.5 * (jnp.sum(p["linear_weight"] ** 2)
                      + jnp.sum(p["linear_bias"] ** 2))

    # TODO(synk): `self.backward(...)` / optimizer plumbing is framework-level
    # autograd with no Pallas equivalent; gradients come from jax.grad here.
    grad_err = jax.grad(error_loss)(params)
    grad_reg = jax.grad(reg_loss)(params)

    # AdaptiveRegularizer hyperparameters (module defaults).
    reg_multiplier = 10.0
    threshold = 0.01
    beta = 0.99
    init_reg_strength = 1.0

    # Demo tile: 256 rows x 512 lanes (sweep 256-1024 rows at real sizes;
    # bigger on v7x, smaller is fine on v5e).
    BLOCK_ROWS = 256

    pack, unpack, slab_shape = make_slab_layout(params, BLOCK_ROWS)

    # Persistent optimizer-side state, created ONCE directly in slab layout:
    # reg_weights stored as bf16 (review: safe, saves HBM bytes), exp_avg_sq
    # kept in f32 (EMA precision near the 0.01 threshold).
    rw_slab = jnp.full(slab_shape, init_reg_strength, jnp.bfloat16)
    eas_slab = jnp.zeros(slab_shape, jnp.float32)

    # Per-step gradient packing (glue; real training would keep grads in slab
    # form too so this conversion never touches HBM separately).
    ge_slab = pack(grad_err)
    gr_slab = pack(grad_reg)

    # Jit + donate the aliased state buffers so the update is truly in place.
    update_fn = jax.jit(
        functools.partial(adareg_update, beta=beta, threshold=threshold,
                          reg_multiplier=reg_multiplier,
                          block_rows=BLOCK_ROWS),
        donate_argnums=(0, 2, 3))

    grad_slab, new_eas_slab, new_rw_slab = update_fn(
        ge_slab, gr_slab, rw_slab, eas_slab)
    jax.block_until_ready((grad_slab, new_eas_slab, new_rw_slab))

    # Un-flatten back to per-parameter tensors (p.grad, exp_avg_sq, reg_weights).
    combined_grads = unpack(grad_slab)
    new_exp_avg_sq = unpack(new_eas_slab)
    new_reg_weights = unpack(new_rw_slab)

    # Plain-JAX reference of the same math (reg_weights quantized to bf16 to
    # match the storage dtype used by the kernel).
    ok = True
    for n in params:
        rw0 = (init_reg_strength
               * jnp.ones_like(params[n])).astype(jnp.bfloat16).astype(jnp.float32)
        eas0 = jnp.zeros_like(params[n])
        g_ref = grad_err[n] + rw0 * grad_reg[n]
        eas_ref = beta * eas0 + (1.0 - beta) * g_ref * g_ref
        rw_ref = jnp.where(eas_ref < threshold, rw0 * reg_multiplier, rw0)
        ok &= bool(jnp.allclose(combined_grads[n], g_ref, atol=1e-6))
        ok &= bool(jnp.allclose(new_exp_avg_sq[n], eas_ref, atol=1e-6))
        ok &= bool(jnp.allclose(new_reg_weights[n], rw_ref, rtol=1e-2, atol=1e-6))

    if ok:
        print("KERNEL_OK")
    else:
        print("KERNEL_MISMATCH")
</pallas_src>

<mosaic_0001>
module attributes {stable_mosaic.version = 11 : i64} {
  func.func @_adareg_kernel(%arg0: i32, %arg1: memref<256x512xf32, #tpu.memory_space<vmem>>, %arg2: memref<256x512xf32, #tpu.memory_space<vmem>>, %arg3: memref<256x512xbf16, #tpu.memory_space<vmem>>, %arg4: memref<256x512xf32, #tpu.memory_space<vmem>>, %arg5: memref<256x512xf32, #tpu.memory_space<vmem>>, %arg6: memref<256x512xf32, #tpu.memory_space<vmem>>, %arg7: memref<256x512xbf16, #tpu.memory_space<vmem>>) attributes {dimension_semantics = [#tpu.dimension_semantics<parallel>], iteration_bounds = array<i64: 2>, scalar_prefetch = 0 : i64, scratch_operands = 0 : i64, tpu.core_type = #tpu.core_type<tc>, window_params = [{transform_indices = @transform_0, window_bounds = array<i64: 256, 512>}, {transform_indices = @transform_1, window_bounds = array<i64: 256, 512>}, {transform_indices = @transform_2, window_bounds = array<i64: 256, 512>}, {transform_indices = @transform_3, window_bounds = array<i64: 256, 512>}, {transform_indices = @transform_4, window_bounds = array<i64: 256, 512>}, {transform_indices = @transform_5, window_bounds = array<i64: 256, 512>}, {transform_indices = @transform_6, window_bounds = array<i64: 256, 512>}]} {
    %c0 = arith.constant 0 : index
    %c0_0 = arith.constant 0 : index
    %0 = vector.load %arg1[%c0, %c0_0] : memref<256x512xf32, #tpu.memory_space<vmem>>, vector<256x512xf32>
    %c0_1 = arith.constant 0 : index
    %c0_2 = arith.constant 0 : index
    %1 = vector.load %arg2[%c0_1, %c0_2] : memref<256x512xf32, #tpu.memory_space<vmem>>, vector<256x512xf32>
    %c0_3 = arith.constant 0 : index
    %c0_4 = arith.constant 0 : index
    %2 = vector.load %arg3[%c0_3, %c0_4] : memref<256x512xbf16, #tpu.memory_space<vmem>>, vector<256x512xbf16>
    %3 = arith.extf %2 : vector<256x512xbf16> to vector<256x512xf32>
    %c0_5 = arith.constant 0 : index
    %c0_6 = arith.constant 0 : index
    %4 = vector.load %arg4[%c0_5, %c0_6] : memref<256x512xf32, #tpu.memory_space<vmem>>, vector<256x512xf32>
    %5 = arith.mulf %3, %1 : vector<256x512xf32>
    %6 = arith.addf %0, %5 : vector<256x512xf32>
    %cst = arith.constant 9.900000e-01 : f32
    %7 = vector.broadcast %cst : f32 to vector<256x512xf32>
    %8 = arith.mulf %7, %4 : vector<256x512xf32>
    %cst_7 = arith.constant 0.00999999977 : f32
    %9 = vector.broadcast %cst_7 : f32 to vector<256x512xf32>
    %10 = arith.mulf %9, %6 : vector<256x512xf32>
    %11 = arith.mulf %10, %6 : vector<256x512xf32>
    %12 = arith.addf %8, %11 : vector<256x512xf32>
    %cst_8 = arith.constant 0.00999999977 : f32
    %13 = vector.broadcast %cst_8 : f32 to vector<256x512xf32>
    %14 = arith.cmpf olt, %12, %13 : vector<256x512xf32>
    %cst_9 = arith.constant 1.000000e+01 : f32
    %15 = vector.broadcast %cst_9 : f32 to vector<256x512xf32>
    %16 = arith.mulf %3, %15 : vector<256x512xf32>
    %17 = arith.select %14, %16, %3 : vector<256x512xi1>, vector<256x512xf32>
    %c0_10 = arith.constant 0 : index
    %c0_11 = arith.constant 0 : index
    %18 = vector.load %arg5[%c0_10, %c0_11] : memref<256x512xf32, #tpu.memory_space<vmem>>, vector<256x512xf32>
    tpu.vector_store %arg5[%c0_10, %c0_11], %6 {strides = array<i32>} : memref<256x512xf32, #tpu.memory_space<vmem>>, vector<256x512xf32>,
    %c0_12 = arith.constant 0 : index
    %c0_13 = arith.constant 0 : index
    %19 = vector.load %arg6[%c0_12, %c0_13] : memref<256x512xf32, #tpu.memory_space<vmem>>, vector<256x512xf32>
    tpu.vector_store %arg6[%c0_12, %c0_13], %12 {strides = array<i32>} : memref<256x512xf32, #tpu.memory_space<vmem>>, vector<256x512xf32>,
    %20 = arith.truncf %17 : vector<256x512xf32> to vector<256x512xbf16>
    %c0_14 = arith.constant 0 : index
    %c0_15 = arith.constant 0 : index
    %21 = vector.load %arg7[%c0_14, %c0_15] : memref<256x512xbf16, #tpu.memory_space<vmem>>, vector<256x512xbf16>
    tpu.vector_store %arg7[%c0_14, %c0_15], %20 {strides = array<i32>} : memref<256x512xbf16, #tpu.memory_space<vmem>>, vector<256x512xbf16>,
    return
  }
  func.func @transform_0(%arg0: i32) -> (i32, i32) {
    %c0_i32 = arith.constant 0 : i32
    %c0_i32_0 = arith.constant 0 : i32
    return %arg0, %c0_i32 : i32, i32
  }
  func.func @transform_1(%arg0: i32) -> (i32, i32) {
    %c0_i32 = arith.constant 0 : i32
    %c0_i32_0 = arith.constant 0 : i32
    return %arg0, %c0_i32 : i32, i32
  }
  func.func @transform_2(%arg0: i32) -> (i32, i32) {
    %c0_i32 = arith.constant 0 : i32
    %c0_i32_0 = arith.constant 0 : i32
    return %arg0, %c0_i32 : i32, i32
  }
  func.func @transform_3(%arg0: i32) -> (i32, i32) {
    %c0_i32 = arith.constant 0 : i32
    %c0_i32_0 = arith.constant 0 : i32
    return %arg0, %c0_i32 : i32, i32
  }
  func.func @transform_4(%arg0: i32) -> (i32, i32) {
    %c0_i32 = arith.constant 0 : i32
    %c0_i32_0 = arith.constant 0 : i32
    return %arg0, %c0_i32 : i32, i32
  }
  func.func @transform_5(%arg0: i32) -> (i32, i32) {
    %c0_i32 = arith.constant 0 : i32
    %c0_i32_0 = arith.constant 0 : i32
    return %arg0, %c0_i32 : i32, i32
  }
  func.func @transform_6(%arg0: i32) -> (i32, i32) {
    %c0_i32 = arith.constant 0 : i32
    %c0_i32_0 = arith.constant 0 : i32
    return %arg0, %c0_i32 : i32, i32
  }
}

</mosaic_0001>

<llo_original>
// kernel: adareg_update.1
$region0: #{adareg_update.1}
  #allocation0 [shape = 'u32[]', space=smem, size = 0x4, offset = 0x4, fixed_abs, tag = 'smem constant byte address 0x4 - core index']
  #allocation1 [shape = 'u32[144,128]{1,0:T(1,128)}', space=vmem, size = 0x12000, scoped, tag = 'internal scratch']
  %s0 = inlined_call_operand.hbm [shape: f32[512,512], index: 0, kind: input, shape index: {}, may-alias: {0,4}]
  %s1 = inlined_call_operand.hbm [shape: f32[512,512], index: 1, kind: input, shape index: {}]
  %s2 = inlined_call_operand.hbm [shape: bf16[512,512], index: 2, kind: input, shape index: {}, may-alias: {2,6}]
  %s3 = inlined_call_operand.hbm [shape: f32[512,512], index: 3, kind: input, shape index: {}, may-alias: {3,5}]
  %s4 = inlined_call_operand.hbm [shape: f32[512,512], index: 4, kind: output, shape index: {0}, may-alias: {0,4}]
  %s5 = inlined_call_operand.hbm [shape: f32[512,512], index: 5, kind: output, shape index: {1}, may-alias: {3,5}]
  %s6 = inlined_call_operand.hbm [shape: bf16[512,512], index: 6, kind: output, shape index: {2}, may-alias: {2,6}]
  %7 = xla_tuple %s4, %s5, %s6
  %s8 = sld [smem:[#allocation0]]
  $region81: #{adareg_update.1} parent=0
    _
  %s10 = ssub.s32 1, %s8
  %s11 = scalar_select 0, %s10, %s8
  $region1: #{adareg_update.1} parent=0
    #allocation2 [shape = 'u8[1048576]{0}', space=vmem, size = 0x100000, scoped, tag = 'input window, operand 0']
    #allocation3 [shape = 's32[2]{0}', space=sflag, size = 0x8, scoped, tag = 'scoped memory for adareg_update.1']
    #allocation4 [shape = 's32[2]{0}', space=sflag, size = 0x8, scoped, tag = 'scoped memory for adareg_update.1']
    #allocation5 [shape = 'u8[1048576]{0}', space=vmem, size = 0x100000, scoped, tag = 'input window, operand 1']
    #allocation6 [shape = 's32[2]{0}', space=sflag, size = 0x8, scoped, tag = 'scoped memory for adareg_update.1']
    #allocation7 [shape = 'u8[524288]{0}', space=vmem, size = 0x80000, scoped, tag = 'input window, operand 2']
    #allocation8 [shape = 'u8[1048576]{0}', space=vmem, size = 0x100000, scoped, tag = 'input window, operand 3']
    #allocation9 [shape = 's32[2]{0}', space=sflag, size = 0x8, scoped, tag = 'scoped memory for adareg_update.1']
    #allocation10 [shape = 'u8[1048576]{0}', space=vmem, size = 0x100000, scoped, tag = 'output window, operand 0']
    #allocation11 [shape = 'u8[1048576]{0}', space=vmem, size = 0x100000, scoped, tag = 'output window, operand 1']
    #allocation12 [shape = 's32[2]{0}', space=sflag, size = 0x8, scoped, tag = 'scoped memory for adareg_update.1']
    #allocation13 [shape = 'u8[524288]{0}', space=vmem, size = 0x80000, scoped, tag = 'output window, operand 2']
    %12 = vsyncpa [#allocation3], 0
    %s13 = scalar_lea.sflag [#allocation3], 1
    %14 = vsyncpa %s13, 0
    %15 = vsyncpa [#allocation6], 0
    %s16 = scalar_lea.sflag [#allocation6], 1
    %17 = vsyncpa %s16, 0
    %18 = vsyncpa [#allocation9], 0
    %s19 = scalar_lea.sflag [#allocation9], 1
    %20 = vsyncpa %s19, 0
    %21 = vsyncpa [#allocation4], 0
    %s22 = scalar_lea.sflag [#allocation4], 1
    %23 = vsyncpa %s22, 0
    %24 = vsyncpa [#allocation12], 0
    %s25 = scalar_lea.sflag [#allocation12], 1
    %26 = vsyncpa %s25, 0
    loop: start=0, step=1, limit=4
    $region2: #{adareg_update.1} parent=1 // loop_pre_header
      _
    $region3: #{adareg_update.1} parent=1 // loop_header
      %s28 = sphi 0, %s32
      %p29 = scmp.ge.s32.totalorder %s28, 4
      %s38 = sphi 0, %s40
      %s41 = sphi 0, %s38
      %s42 = sphi 0, %s41
      %s58 = sphi 0, %s42
      %s64 = sphi 0, %s66
      %s67 = sphi 0, %s64
      %s68 = sphi 0, %s67
      %s84 = sphi 0, %s68
      %s90 = sphi 0, %s92
      %s93 = sphi 0, %s90
      %s94 = sphi 0, %s93
      %s110 = sphi 0, %s94
      %s116 = sphi 0, %s118
      %s119 = sphi 0, %s116
      %s120 = sphi 0, %s119
      %s136 = sphi 0, %s120
      %s142 = sphi 0, %s144
      %s145 = sphi 0, %s142
      %s146 = sphi 0, %s145
      %s162 = sphi 0, %s146
      %s168 = sphi 0, %s170
      %s171 = sphi 0, %s168
      %s172 = sphi 0, %s171
      %s188 = sphi 0, %s172
      %s194 = sphi 0, %s196
      %s197 = sphi 0, %s194
      %s198 = sphi 0, %s197
      %s214 = sphi 0, %s198
    $region4: #{adareg_update.1} parent=1 // loop_header_branch
      %31 = sbr.rel (%p29) target = $region8
    $region5: #{adareg_update.1} parent=1 // loop_body
      %s33 = ssub.s32 %s28, 1
      %s34 = ssub.s32 %s28, 2
      %s35 = sadd.s32 %s28, 1
      %s36 = ssub.s32 %s28, %s35
      %p37 = scmp.eq.s32.totalorder %s36, 0
      %s39 = sadd.s32 %s38, 1
      %s40 = scalar_select %p37, %s38, %s39
      %p43 = pneg %p37
      %p44 = scmp.eq.s32.totalorder %s28, 1
      %p45 = por %p43, %p44
      %p46 = scmp.ne.s32.totalorder %s38, %s41
      %p47 = scmp.eq.s32.totalorder %s28, 0
      %p48 = por %p46, %p47
      %p49 = scmp.ne.s32.totalorder %s38, %s41
      %p50 = scmp.eq.s32.totalorder %s33, 1
      %p51 = por %p49, %p50
      %p52 = scmp.ne.s32.totalorder %s41, %s42
      %p53 = scmp.eq.s32.totalorder %s33, 0
      %p54 = por %p52, %p53
      %p55 = scmp.ne.s32.totalorder %s41, %s42
      %p56 = scmp.eq.s32.totalorder %s34, 1
      %p57 = por %p55, %p56
      %p59 = scmp.ne.s32.totalorder %s42, %s58
      %p60 = scmp.eq.s32.totalorder %s34, 0
      %p61 = por %p59, %p60
      %s62 = ssub.s32 %s28, %s35
      %p63 = scmp.eq.s32.totalorder %s62, 0
      %s65 = sadd.s32 %s64, 1
      %s66 = scalar_select %p63, %s64, %s65
      %p69 = pneg %p63
      %p70 = scmp.eq.s32.totalorder %s28, 1
      %p71 = por %p69, %p70
      %p72 = scmp.ne.s32.totalorder %s64, %s67
      %p73 = scmp.eq.s32.totalorder %s28, 0
      %p74 = por %p72, %p73
      %p75 = scmp.ne.s32.totalorder %s64, %s67
      %p76 = scmp.eq.s32.totalorder %s33, 1
      %p77 = por %p75, %p76
      %p78 = scmp.ne.s32.totalorder %s67, %s68
      %p79 = scmp.eq.s32.totalorder %s33, 0
      %p80 = por %p78, %p79
      %p81 = scmp.ne.s32.totalorder %s67, %s68
      %p82 = scmp.eq.s32.totalorder %s34, 1
      %p83 = por %p81, %p82
      %p85 = scmp.ne.s32.totalorder %s68, %s84
      %p86 = scmp.eq.s32.totalorder %s34, 0
      %p87 = por %p85, %p86
      %s88 = ssub.s32 %s28, %s35
      %p89 = scmp.eq.s32.totalorder %s88, 0
      %s91 = sadd.s32 %s90, 1
      %s92 = scalar_select %p89, %s90, %s91
      %p95 = pneg %p89
      %p96 = scmp.eq.s32.totalorder %s28, 1
      %p97 = por %p95, %p96
      %p98 = scmp.ne.s32.totalorder %s90, %s93
      %p99 = scmp.eq.s32.totalorder %s28, 0
      %p100 = por %p98, %p99
      %p101 = scmp.ne.s32.totalorder %s90, %s93
      %p102 = scmp.eq.s32.totalorder %s33, 1
      %p103 = por %p101, %p102
      %p104 = scmp.ne.s32.totalorder %s93, %s94
      %p105 = scmp.eq.s32.totalorder %s33, 0
      %p106 = por %p104, %p105
      %p107 = scmp.ne.s32.totalorder %s93, %s94
      %p108 = scmp.eq.s32.totalorder %s34, 1
      %p109 = por %p107, %p108
      %p111 = scmp.ne.s32.totalorder %s94, %s110
      %p112 = scmp.eq.s32.totalorder %s34, 0
      %p113 = por %p111, %p112
      %s114 = ssub.s32 %s28, %s35
      %p115 = scmp.eq.s32.totalorder %s114, 0
      %s117 = sadd.s32 %s116, 1
      %s118 = scalar_select %p115, %s116, %s117
      %p121 = pneg %p115
      %p122 = scmp.eq.s32.totalorder %s28, 1
      %p123 = por %p121, %p122
      %p124 = scmp.ne.s32.totalorder %s116, %s119
      %p125 = scmp.eq.s32.totalorder %s28, 0
      %p126 = por %p124, %p125
      %p127 = scmp.ne.s32.totalorder %s116, %s119
      %p128 = scmp.eq.s32.totalorder %s33, 1
      %p129 = por %p127, %p128
      %p130 = scmp.ne.s32.totalorder %s119, %s120
      %p131 = scmp.eq.s32.totalorder %s33, 0
      %p132 = por %p130, %p131
      %p133 = scmp.ne.s32.totalorder %s119, %s120
      %p134 = scmp.eq.s32.totalorder %s34, 1
      %p135 = por %p133, %p134
      %p137 = scmp.ne.s32.totalorder %s120, %s136
      %p138 = scmp.eq.s32.totalorder %s34, 0
      %p139 = por %p137, %p138
      %s140 = ssub.s32 %s28, %s35
      %p141 = scmp.eq.s32.totalorder %s140, 0
      %s143 = sadd.s32 %s142, 1
      %s144 = scalar_select %p141, %s142, %s143
      %p147 = pneg %p141
      %p148 = scmp.eq.s32.totalorder %s28, 1
      %p149 = por %p147, %p148
      %p150 = scmp.ne.s32.totalorder %s142, %s145
      %p151 = scmp.eq.s32.totalorder %s28, 0
      %p152 = por %p150, %p151
      %p153 = scmp.ne.s32.totalorder %s142, %s145
      %p154 = scmp.eq.s32.totalorder %s33, 1
      %p155 = por %p153, %p154
      %p156 = scmp.ne.s32.totalorder %s145, %s146
      %p157 = scmp.eq.s32.totalorder %s33, 0
      %p158 = por %p156, %p157
      %p159 = scmp.ne.s32.totalorder %s145, %s146
      %p160 = scmp.eq.s32.totalorder %s34, 1
      %p161 = por %p159, %p160
      %p163 = scmp.ne.s32.totalorder %s146, %s162
      %p164 = scmp.eq.s32.totalorder %s34, 0
      %p165 = por %p163, %p164
      %s166 = ssub.s32 %s28, %s35
      %p167 = scmp.eq.s32.totalorder %s166, 0
      %s169 = sadd.s32 %s168, 1
      %s170 = scalar_select %p167, %s168, %s169
      %p173 = pneg %p167
      %p174 = scmp.eq.s32.totalorder %s28, 1
      %p175 = por %p173, %p174
      %p176 = scmp.ne.s32.totalorder %s168, %s171
      %p177 = scmp.eq.s32.totalorder %s28, 0
      %p178 = por %p176, %p177
      %p179 = scmp.ne.s32.totalorder %s168, %s171
      %p180 = scmp.eq.s32.totalorder %s33, 1
      %p181 = por %p179, %p180
      %p182 = scmp.ne.s32.totalorder %s171, %s172
      %p183 = scmp.eq.s32.totalorder %s33, 0
      %p184 = por %p182, %p183
      %p185 = scmp.ne.s32.totalorder %s171, %s172
      %p186 = scmp.eq.s32.totalorder %s34, 1
      %p187 = por %p185, %p186
      %p189 = scmp.ne.s32.totalorder %s172, %s188
      %p190 = scmp.eq.s32.totalorder %s34, 0
      %p191 = por %p189, %p190
      %s192 = ssub.s32 %s28, %s35
      %p193 = scmp.eq.s32.totalorder %s192, 0
      %s195 = sadd.s32 %s194, 1
      %s196 = scalar_select %p193, %s194, %s195
      %p199 = pneg %p193
      %p200 = scmp.eq.s32.totalorder %s28, 1
      %p201 = por %p199, %p200
      %p202 = scmp.ne.s32.totalorder %s194, %s197
      %p203 = scmp.eq.s32.totalorder %s28, 0
      %p204 = por %p202, %p203
      %p205 = scmp.ne.s32.totalorder %s194, %s197
      %p206 = scmp.eq.s32.totalorder %s33, 1
      %p207 = por %p205, %p206
      %p208 = scmp.ne.s32.totalorder %s197, %s198
      %p209 = scmp.eq.s32.totalorder %s33, 0
      %p210 = por %p208, %p209
      %p211 = scmp.ne.s32.totalorder %s197, %s198
      %p212 = scmp.eq.s32.totalorder %s34, 1
      %p213 = por %p211, %p212
      %p215 = scmp.ne.s32.totalorder %s198, %s214
      %p216 = scmp.eq.s32.totalorder %s34, 0
      %p217 = por %p215, %p216
      %p218 = scmp.le.s32.totalorder 1, %s28
      %p219 = scmp.lt.s32.totalorder %s28, 3
      %p220 = pnand %p218, %p219
      %p221 = pneg %p220
      // Predicated region
      $region9: #{adareg_update.1} parent=5 // pred_check
        _
      $region10: #{adareg_update.1} parent=5 // pred_check_branch
        %223 = sbr.rel (%p220) target = $region12
      $region11: #{adareg_update.1} parent=5 // pred_region
        %s224 = ssub.s32 %s28, 1
      $region12: #{adareg_update.1} parent=5 // pred_fallthru
        _
      %p225 = scmp.lt.s32.totalorder %s28, 2
      // Predicated region
      $region13: #{adareg_update.1} parent=5 // pred_check
        %p226 = pneg %p225
      $region14: #{adareg_update.1} parent=5 // pred_check_branch
        %228 = sbr.rel (%p226) target = $region16
      $region15: #{adareg_update.1} parent=5 // pred_region
        // Predicated region
        $region17: #{adareg_update.1} parent=15 // pred_check
          %p229 = pneg %p48
        $region18: #{adareg_update.1} parent=15 // pred_check_branch
          %231 = sbr.rel (%p229) target = $region20
        $region19: #{adareg_update.1} parent=15 // pred_region
          %s232 = sand.u32 %s38, 1
          %s233 = scalar_lea.sflag [#allocation3], %s232
          %s234 = sand.u32 %s38, 1
          %s235 = smul.addr %s234, 1024
          %s236 = scalar_lea.vmem [#allocation2], %s235
          %s237 = smul.u32 32, %s28
          %s239 = ssub.s32 16384, 16384
          %240 = vsyncadd %s233, %s239
          %s241 = smul.addr %s237, 4
          %s242 = smul.addr %s241, 128
          %s243 = scalar_lea.hbm %s0, %s242
          %s244 = sshll.u32 %s236, 4
          %s245 = int_to_ptr.vmem [resolvable:$true] %s244
          %250 = dma.hbm_to_vmem [thread:$0]  %s243, 16384, %s245, %s233, 512, 512, 32
        $region20: #{adareg_update.1} parent=15 // pred_fallthru
          _
        // Predicated region
        $region21: #{adareg_update.1} parent=15 // pred_check
          %p251 = pneg %p74
        $region22: #{adareg_update.1} parent=15 // pred_check_branch
          %253 = sbr.rel (%p251) target = $region24
        $region23: #{adareg_update.1} parent=15 // pred_region
          %s254 = sand.u32 %s28, 1
          %s255 = scalar_lea.sflag [#allocation6], %s254
          %s256 = sand.u32 %s64, 1
          %s257 = smul.addr %s256, 1024
          %s258 = scalar_lea.vmem [#allocation5], %s257
          %s259 = smul.u32 32, %s28
          %s261 = ssub.s32 16384, 16384
          %262 = vsyncadd %s255, %s261
          %s263 = smul.addr %s259, 4
          %s264 = smul.addr %s263, 128
          %s265 = scalar_lea.hbm %s1, %s264
          %s266 = sshll.u32 %s258, 4
          %s267 = int_to_ptr.vmem [resolvable:$true] %s266
          %272 = dma.hbm_to_vmem [thread:$0]  %s265, 16384, %s267, %s255, 512, 512, 32
        $region24: #{adareg_update.1} parent=15 // pred_fallthru
          _
        // Predicated region
        $region25: #{adareg_update.1} parent=15 // pred_check
          %p273 = pneg %p100
        $region26: #{adareg_update.1} parent=15 // pred_check_branch
          %275 = sbr.rel (%p273) target = $region28
        $region27: #{adareg_update.1} parent=15 // pred_region
          %s276 = sand.u32 %s28, 1
          %s277 = scalar_lea.sflag [#allocation6], %s276
          %s278 = sand.u32 %s90, 1
          %s279 = smul.addr %s278, 512
          %s280 = scalar_lea.vmem [#allocation7], %s279
          %s281 = smul.u32 32, %s28
          %s283 = ssub.s32 8192, 8192
          %284 = vsyncadd %s277, %s283
          %s285 = smul.addr %s281, 4
          %s286 = smul.addr %s285, 64
          %s287 = scalar_lea.hbm %s2, %s286
          %s288 = sshll.u32 %s280, 4
          %s289 = int_to_ptr.vmem [resolvable:$true] %s288
          %294 = dma.hbm_to_vmem [thread:$0]  %s287, 8192, %s289, %s277, 256, 256, 16
        $region28: #{adareg_update.1} parent=15 // pred_fallthru
          _
        // Predicated region
        $region29: #{adareg_update.1} parent=15 // pred_check
          %p295 = pneg %p126
        $region30: #{adareg_update.1} parent=15 // pred_check_branch
          %297 = sbr.rel (%p295) target = $region32
        $region31: #{adareg_update.1} parent=15 // pred_region
          %s298 = sand.u32 %s116, 1
          %s299 = scalar_lea.sflag [#allocation9], %s298
          %s300 = sand.u32 %s116, 1
          %s301 = smul.addr %s300, 1024
          %s302 = scalar_lea.vmem [#allocation8], %s301
          %s303 = smul.u32 32, %s28
          %s305 = ssub.s32 16384, 16384
          %306 = vsyncadd %s299, %s305
          %s307 = smul.addr %s303, 4
          %s308 = smul.addr %s307, 128
          %s309 = scalar_lea.hbm %s3, %s308
          %s310 = sshll.u32 %s302, 4
          %s311 = int_to_ptr.vmem [resolvable:$true] %s310
          %316 = dma.hbm_to_vmem [thread:$0]  %s309, 16384, %s311, %s299, 512, 512, 32
        $region32: #{adareg_update.1} parent=15 // pred_fallthru
          _
      $region16: #{adareg_update.1} parent=5 // pred_fallthru
        _
      %p317 = scmp.le.s32.totalorder 1, %s28
      %p318 = scmp.lt.s32.totalorder %s28, 3
      %p319 = pnand %p317, %p318
      %p320 = pneg %p319
      // Predicated region
      $region33: #{adareg_update.1} parent=5 // pred_check
        _
      $region34: #{adareg_update.1} parent=5 // pred_check_branch
        %322 = sbr.rel (%p319) target = $region36
      $region35: #{adareg_update.1} parent=5 // pred_region
        %s323 = ssub.s32 %s28, 1
        %s324 = sand.u32 %s41, 1
        %s325 = scalar_lea.sflag [#allocation3], %s324
        %s326 = sand.u32 %s41, 1
        %s327 = smul.addr %s326, 1024
        %s328 = scalar_lea.vmem [#allocation2], %s327
        // Predicated region
        $region37: #{adareg_update.1} parent=35 // pred_check
          %p329 = pneg %p54
        $region38: #{adareg_update.1} parent=35 // pred_check_branch
          %331 = sbr.rel (%p329) target = $region40
        $region39: #{adareg_update.1} parent=35 // pred_region
          %332 = dma.done %s325, 16384
        $region40: #{adareg_update.1} parent=35 // pred_fallthru
          _
        %s333 = sand.u32 %s33, 1
        %s334 = scalar_lea.sflag [#allocation6], %s333
        %s335 = sand.u32 %s67, 1
        %s336 = smul.addr %s335, 1024
        %s337 = scalar_lea.vmem [#allocation5], %s336
        // Predicated region
        $region41: #{adareg_update.1} parent=35 // pred_check
          %p338 = pneg %p80
        $region42: #{adareg_update.1} parent=35 // pred_check_branch
          %340 = sbr.rel (%p338) target = $region44
        $region43: #{adareg_update.1} parent=35 // pred_region
          %341 = dma.done %s334, 16384
        $region44: #{adareg_update.1} parent=35 // pred_fallthru
          _
        %s342 = sand.u32 %s33, 1
        %s343 = scalar_lea.sflag [#allocation6], %s342
        %s344 = sand.u32 %s93, 1
        %s345 = smul.addr %s344, 512
        %s346 = scalar_lea.vmem [#allocation7], %s345
        // Predicated region
        $region45: #{adareg_update.1} parent=35 // pred_check
          %p347 = pneg %p106
        $region46: #{adareg_update.1} parent=35 // pred_check_branch
          %349 = sbr.rel (%p347) target = $region48
        $region47: #{adareg_update.1} parent=35 // pred_region
          %350 = dma.done %s343, 8192
        $region48: #{adareg_update.1} parent=35 // pred_fallthru
          _
        %s351 = sand.u32 %s119, 1
        %s352 = scalar_lea.sflag [#allocation9], %s351
        %s353 = sand.u32 %s119, 1
        %s354 = smul.addr %s353, 1024
        %s355 = scalar_lea.vmem [#allocation8], %s354
        // Predicated region
        $region49: #{adareg_update.1} parent=35 // pred_check
          %p356 = pneg %p132
        $region50: #{adareg_update.1} parent=35 // pred_check_branch
          %358 = sbr.rel (%p356) target = $region52
        $region51: #{adareg_update.1} parent=35 // pred_region
          %359 = dma.done %s352, 16384
        $region52: #{adareg_update.1} parent=35 // pred_fallthru
          _
        %s360 = sand.u32 %s41, 1
        %s361 = scalar_lea.sflag [#allocation3], %s360
        %s362 = sand.u32 %s41, 1
        %s363 = smul.addr %s362, 1024
        %s364 = scalar_lea.vmem [#allocation2], %s363
        %p365 = pneg %p54
        %p366 = pneg %p51
        %s367 = sand.u32 %s33, 1
        %s368 = scalar_lea.sflag [#allocation6], %s367
        %s369 = sand.u32 %s67, 1
        %s370 = smul.addr %s369, 1024
        %s371 = scalar_lea.vmem [#allocation5], %s370
        %p372 = pneg %p80
        %p373 = pneg %p77
        %s374 = sand.u32 %s33, 1
        %s375 = scalar_lea.sflag [#allocation6], %s374
        %s376 = sand.u32 %s93, 1
        %s377 = smul.addr %s376, 512
        %s378 = scalar_lea.vmem [#allocation7], %s377
        %p379 = pneg %p106
        %p380 = pneg %p103
        %s381 = sand.u32 %s119, 1
        %s382 = scalar_lea.sflag [#allocation9], %s381
        %s383 = sand.u32 %s119, 1
        %s384 = smul.addr %s383, 1024
        %s385 = scalar_lea.vmem [#allocation8], %s384
        %p386 = pneg %p132
        %p387 = pneg %p129
        %p388 = pneg %p158
        %p389 = pneg %p155
        %s390 = sand.u32 %s145, 1
        %s391 = scalar_lea.sflag [#allocation4], %s390
        %s392 = sand.u32 %s145, 1
        %s393 = smul.addr %s392, 1024
        %s394 = scalar_lea.vmem [#allocation10], %s393
        %p395 = pneg %p184
        %p396 = pneg %p181
        %s397 = sand.u32 %s33, 1
        %s398 = scalar_lea.sflag [#allocation12], %s397
        %s399 = sand.u32 %s171, 1
        %s400 = smul.addr %s399, 1024
        %s401 = scalar_lea.vmem [#allocation11], %s400
        %p402 = pneg %p210
        %p403 = pneg %p207
        %s404 = sand.u32 %s33, 1
        %s405 = scalar_lea.sflag [#allocation12], %s404
        %s406 = sand.u32 %s197, 1
        %s407 = smul.addr %s406, 512
        %s408 = scalar_lea.vmem [#allocation13], %s407
        %s409 = smul.u32 32, %s33
        %s410 = smul.u32 32, %s33
        %s411 = smul.u32 32, %s33
        %s412 = smul.u32 32, %s33
        %s413 = smul.u32 32, %s33
        %s414 = smul.u32 32, %s33
        %s415 = smul.u32 32, %s33
        %v416 = vld [vmem:[%s328] sm:$0xff]
        %v417 = vld [vmem:[%s328 + $0x8] sm:$0xff]
        %v418 = vld [vmem:[%s328 + $0x10] sm:$0xff]
        %v419 = vld [vmem:[%s328 + $0x18] sm:$0xff]
        %v420 = vld [vmem:[%s328 + $0x20] sm:$0xff]
        %v421 = vld [vmem:[%s328 + $0x28] sm:$0xff]
        %v422 = vld [vmem:[%s328 + $0x30] sm:$0xff]
        %v423 = vld [vmem:[%s328 + $0x38] sm:$0xff]
        %v424 = vld [vmem:[%s328 + $0x40] sm:$0xff]
        %v425 = vld [vmem:[%s328 + $0x48] sm:$0xff]
        %v426 = vld [vmem:[%s328 + $0x50] sm:$0xff]
        %v427 = vld [vmem:[%s328 + $0x58] sm:$0xff]
        %v428 = vld [vmem:[%s328 + $0x60] sm:$0xff]
        %v429 = vld [vmem:[%s328 + $0x68] sm:$0xff]
        %v430 = vld [vmem:[%s328 + $0x70] sm:$0xff]
        %v431 = vld [vmem:[%s328 + $0x78] sm:$0xff]
        %v432 = vld [vmem:[%s328 + $0x80] sm:$0xff]
        %v433 = vld [vmem:[%s328 + $0x88] sm:$0xff]
        %v434 = vld [vmem:[%s328 + $0x90] sm:$0xff]
        %v435 = vld [vmem:[%s328 + $0x98] sm:$0xff]
        %v436 = vld [vmem:[%s328 + $0xa0] sm:$0xff]
        %v437 = vld [vmem:[%s328 + $0xa8] sm:$0xff]
        %v438 = vld [vmem:[%s328 + $0xb0] sm:$0xff]
        %v439 = vld [vmem:[%s328 + $0xb8] sm:$0xff]
        %v440 = vld [vmem:[%s328 + $0xc0] sm:$0xff]
        %v441 = vld [vmem:[%s328 + $0xc8] sm:$0xff]
        %v442 = vld [vmem:[%s328 + $0xd0] sm:$0xff]
        %v443 = vld [vmem:[%s328 + $0xd8] sm:$0xff]
        %v444 = vld [vmem:[%s328 + $0xe0] sm:$0xff]
        %v445 = vld [vmem:[%s328 + $0xe8] sm:$0xff]
        %v446 = vld [vmem:[%s328 + $0xf0] sm:$0xff]
        %v447 = vld [vmem:[%s328 + $0xf8] sm:$0xff]
        %v448 = vld [vmem:[%s328 + $0x100] sm:$0xff]
        %v449 = vld [vmem:[%s328 + $0x108] sm:$0xff]
        %v450 = vld [vmem:[%s328 + $0x110] sm:$0xff]
        %v451 = vld [vmem:[%s328 + $0x118] sm:$0xff]
        %v452 = vld [vmem:[%s328 + $0x120] sm:$0xff]
        %v453 = vld [vmem:[%s328 + $0x128] sm:$0xff]
        %v454 = vld [vmem:[%s328 + $0x130] sm:$0xff]
        %v455 = vld [vmem:[%s328 + $0x138] sm:$0xff]
        %v456 = vld [vmem:[%s328 + $0x140] sm:$0xff]
        %v457 = vld [vmem:[%s328 + $0x148] sm:$0xff]
        %v458 = vld [vmem:[%s328 + $0x150] sm:$0xff]
        %v459 = vld [vmem:[%s328 + $0x158] sm:$0xff]
        %v460 = vld [vmem:[%s328 + $0x160] sm:$0xff]
        %v461 = vld [vmem:[%s328 + $0x168] sm:$0xff]
        %v462 = vld [vmem:[%s328 + $0x170] sm:$0xff]
        %v463 = vld [vmem:[%s328 + $0x178] sm:$0xff]
        %v464 = vld [vmem:[%s328 + $0x180] sm:$0xff]
        %v465 = vld [vmem:[%s328 + $0x188] sm:$0xff]
        %v466 = vld [vmem:[%s328 + $0x190] sm:$0xff]
        %v467 = vld [vmem:[%s328 + $0x198] sm:$0xff]
        %v468 = vld [vmem:[%s328 + $0x1a0] sm:$0xff]
        %v469 = vld [vmem:[%s328 + $0x1a8] sm:$0xff]
        %v470 = vld [vmem:[%s328 + $0x1b0] sm:$0xff]
        %v471 = vld [vmem:[%s328 + $0x1b8] sm:$0xff]
        %v472 = vld [vmem:[%s328 + $0x1c0] sm:$0xff]
        %v473 = vld [vmem:[%s328 + $0x1c8] sm:$0xff]
        %v474 = vld [vmem:[%s328 + $0x1d0] sm:$0xff]
        %v475 = vld [vmem:[%s328 + $0x1d8] sm:$0xff]
        %v476 = vld [vmem:[%s328 + $0x1e0] sm:$0xff]
        %v477 = vld [vmem:[%s328 + $0x1e8] sm:$0xff]
        %v478 = vld [vmem:[%s328 + $0x1f0] sm:$0xff]
        %v479 = vld [vmem:[%s328 + $0x1f8] sm:$0xff]
        %v480 = vld [vmem:[%s328 + $0x200] sm:$0xff]
        %v481 = vld [vmem:[%s328 + $0x208] sm:$0xff]
        %v482 = vld [vmem:[%s328 + $0x210] sm:$0xff]
        %v483 = vld [vmem:[%s328 + $0x218] sm:$0xff]
        %v484 = vld [vmem:[%s328 + $0x220] sm:$0xff]
        %v485 = vld [vmem:[%s328 + $0x228] sm:$0xff]
        %v486 = vld [vmem:[%s328 + $0x230] sm:$0xff]
        %v487 = vld [vmem:[%s328 + $0x238] sm:$0xff]
        %v488 = vld [vmem:[%s328 + $0x240] sm:$0xff]
        %v489 = vld [vmem:[%s328 + $0x248] sm:$0xff]
        %v490 = vld [vmem:[%s328 + $0x250] sm:$0xff]
        %v491 = vld [vmem:[%s328 + $0x258] sm:$0xff]
        %v492 = vld [vmem:[%s328 + $0x260] sm:$0xff]
        %v493 = vld [vmem:[%s328 + $0x268] sm:$0xff]
        %v494 = vld [vmem:[%s328 + $0x270] sm:$0xff]
        %v495 = vld [vmem:[%s328 + $0x278] sm:$0xff]
        %v496 = vld [vmem:[%s328 + $0x280] sm:$0xff]
        %v497 = vld [vmem:[%s328 + $0x288] sm:$0xff]
        %v498 = vld [vmem:[%s328 + $0x290] sm:$0xff]
        %v499 = vld [vmem:[%s328 + $0x298] sm:$0xff]
        %v500 = vld [vmem:[%s328 + $0x2a0] sm:$0xff]
        %v501 = vld [vmem:[%s328 + $0x2a8] sm:$0xff]
        %v502 = vld [vmem:[%s328 + $0x2b0] sm:$0xff]
        %v503 = vld [vmem:[%s328 + $0x2b8] sm:$0xff]
        %v504 = vld [vmem:[%s328 + $0x2c0] sm:$0xff]
        %v505 = vld [vmem:[%s328 + $0x2c8] sm:$0xff]
        %v506 = vld [vmem:[%s328 + $0x2d0] sm:$0xff]
        %v507 = vld [vmem:[%s328 + $0x2d8] sm:$0xff]
        %v508 = vld [vmem:[%s328 + $0x2e0] sm:$0xff]
        %v509 = vld [vmem:[%s328 + $0x2e8] sm:$0xff]
        %v510 = vld [vmem:[%s328 + $0x2f0] sm:$0xff]
        %v511 = vld [vmem:[%s328 + $0x2f8] sm:$0xff]
        %v512 = vld [vmem:[%s328 + $0x300] sm:$0xff]
        %v513 = vld [vmem:[%s328 + $0x308] sm:$0xff]
        %v514 = vld [vmem:[%s328 + $0x310] sm:$0xff]
        %v515 = vld [vmem:[%s328 + $0x318] sm:$0xff]
        %v516 = vld [vmem:[%s328 + $0x320] sm:$0xff]
        %v517 = vld [vmem:[%s328 + $0x328] sm:$0xff]
        %v518 = vld [vmem:[%s328 + $0x330] sm:$0xff]
        %v519 = vld [vmem:[%s328 + $0x338] sm:$0xff]
        %v520 = vld [vmem:[%s328 + $0x340] sm:$0xff]
        %v521 = vld [vmem:[%s328 + $0x348] sm:$0xff]
        %v522 = vld [vmem:[%s328 + $0x350] sm:$0xff]
        %v523 = vld [vmem:[%s328 + $0x358] sm:$0xff]
        %v524 = vld [vmem:[%s328 + $0x360] sm:$0xff]
        %v525 = vld [vmem:[%s328 + $0x368] sm:$0xff]
        %v526 = vld [vmem:[%s328 + $0x370] sm:$0xff]
        %v527 = vld [vmem:[%s328 + $0x378] sm:$0xff]
        %v528 = vld [vmem:[%s328 + $0x380] sm:$0xff]
        %v529 = vld [vmem:[%s328 + $0x388] sm:$0xff]
        %v530 = vld [vmem:[%s328 + $0x390] sm:$0xff]
        %v531 = vld [vmem:[%s328 + $0x398] sm:$0xff]
        %v532 = vld [vmem:[%s328 + $0x3a0] sm:$0xff]
        %v533 = vld [vmem:[%s328 + $0x3a8] sm:$0xff]
        %v534 = vld [vmem:[%s328 + $0x3b0] sm:$0xff]
        %v535 = vld [vmem:[%s328 + $0x3b8] sm:$0xff]
        %v536 = vld [vmem:[%s328 + $0x3c0] sm:$0xff]
        %v537 = vld [vmem:[%s328 + $0x3c8] sm:$0xff]
        %v538 = vld [vmem:[%s328 + $0x3d0] sm:$0xff]
        %v539 = vld [vmem:[%s328 + $0x3d8] sm:$0xff]
        %v540 = vld [vmem:[%s328 + $0x3e0] sm:$0xff]
        %v541 = vld [vmem:[%s328 + $0x3e8] sm:$0xff]
        %v542 = vld [vmem:[%s328 + $0x3f0] sm:$0xff]
        %v543 = vld [vmem:[%s328 + $0x3f8] sm:$0xff]
        %v544 = vld [vmem:[%s337] sm:$0xff]
        %v545 = vld [vmem:[%s337 + $0x8] sm:$0xff]
        %v546 = vld [vmem:[%s337 + $0x10] sm:$0xff]
        %v547 = vld [vmem:[%s337 + $0x18] sm:$0xff]
        %v548 = vld [vmem:[%s337 + $0x20] sm:$0xff]
        %v549 = vld [vmem:[%s337 + $0x28] sm:$0xff]
        %v550 = vld [vmem:[%s337 + $0x30] sm:$0xff]
        %v551 = vld [vmem:[%s337 + $0x38] sm:$0xff]
        %v552 = vld [vmem:[%s337 + $0x40] sm:$0xff]
        %v553 = vld [vmem:[%s337 + $0x48] sm:$0xff]
        %v554 = vld [vmem:[%s337 + $0x50] sm:$0xff]
        %v555 = vld [vmem:[%s337 + $0x58] sm:$0xff]
        %v556 = vld [vmem:[%s337 + $0x60] sm:$0xff]
        %v557 = vld [vmem:[%s337 + $0x68] sm:$0xff]
        %v558 = vld [vmem:[%s337 + $0x70] sm:$0xff]
        %v559 = vld [vmem:[%s337 + $0x78] sm:$0xff]
        %v560 = vld [vmem:[%s337 + $0x80] sm:$0xff]
        %v561 = vld [vmem:[%s337 + $0x88] sm:$0xff]
        %v562 = vld [vmem:[%s337 + $0x90] sm:$0xff]
        %v563 = vld [vmem:[%s337 + $0x98] sm:$0xff]
        %v564 = vld [vmem:[%s337 + $0xa0] sm:$0xff]
        %v565 = vld [vmem:[%s337 + $0xa8] sm:$0xff]
        %v566 = vld [vmem:[%s337 + $0xb0] sm:$0xff]
        %v567 = vld [vmem:[%s337 + $0xb8] sm:$0xff]
        %v568 = vld [vmem:[%s337 + $0xc0] sm:$0xff]
        %v569 = vld [vmem:[%s337 + $0xc8] sm:$0xff]
        %v570 = vld [vmem:[%s337 + $0xd0] sm:$0xff]
        %v571 = vld [vmem:[%s337 + $0xd8] sm:$0xff]
        %v572 = vld [vmem:[%s337 + $0xe0] sm:$0xff]
        %v573 = vld [vmem:[%s337 + $0xe8] sm:$0xff]
        %v574 = vld [vmem:[%s337 + $0xf0] sm:$0xff]
        %v575 = vld [vmem:[%s337 + $0xf8] sm:$0xff]
        %v576 = vld [vmem:[%s337 + $0x100] sm:$0xff]
        %v577 = vld [vmem:[%s337 + $0x108] sm:$0xff]
        %v578 = vld [vmem:[%s337 + $0x110] sm:$0xff]
        %v579 = vld [vmem:[%s337 + $0x118] sm:$0xff]
        %v580 = vld [vmem:[%s337 + $0x120] sm:$0xff]
        %v581 = vld [vmem:[%s337 + $0x128] sm:$0xff]
        %v582 = vld [vmem:[%s337 + $0x130] sm:$0xff]
        %v583 = vld [vmem:[%s337 + $0x138] sm:$0xff]
        %v584 = vld [vmem:[%s337 + $0x140] sm:$0xff]
        %v585 = vld [vmem:[%s337 + $0x148] sm:$0xff]
        %v586 = vld [vmem:[%s337 + $0x150] sm:$0xff]
        %v587 = vld [vmem:[%s337 + $0x158] sm:$0xff]
        %v588 = vld [vmem:[%s337 + $0x160] sm:$0xff]
        %v589 = vld [vmem:[%s337 + $0x168] sm:$0xff]
        %v590 = vld [vmem:[%s337 + $0x170] sm:$0xff]
        %v591 = vld [vmem:[%s337 + $0x178] sm:$0xff]
        %v592 = vld [vmem:[%s337 + $0x180] sm:$0xff]
        %v593 = vld [vmem:[%s337 + $0x188] sm:$0xff]
        %v594 = vld [vmem:[%s337 + $0x190] sm:$0xff]
        %v595 = vld [vmem:[%s337 + $0x198] sm:$0xff]
        %v596 = vld [vmem:[%s337 + $0x1a0] sm:$0xff]
        %v597 = vld [vmem:[%s337 + $0x1a8] sm:$0xff]
        %v598 = vld [vmem:[%s337 + $0x1b0] sm:$0xff]
        %v599 = vld [vmem:[%s337 + $0x1b8] sm:$0xff]
        %v600 = vld [vmem:[%s337 + $0x1c0] sm:$0xff]
        %v601 = vld [vmem:[%s337 + $0x1c8] sm:$0xff]
        %v602 = vld [vmem:[%s337 + $0x1d0] sm:$0xff]
        %v603 = vld [vmem:[%s337 + $0x1d8] sm:$0xff]
        %v604 = vld [vmem:[%s337 + $0x1e0] sm:$0xff]
        %v605 = vld [vmem:[%s337 + $0x1e8] sm:$0xff]
        %v606 = vld [vmem:[%s337 + $0x1f0] sm:$0xff]
        %v607 = vld [vmem:[%s337 + $0x1f8] sm:$0xff]
        %v608 = vld [vmem:[%s337 + $0x200] sm:$0xff]
        %v609 = vld [vmem:[%s337 + $0x208] sm:$0xff]
        %v610 = vld [vmem:[%s337 + $0x210] sm:$0xff]
        %v611 = vld [vmem:[%s337 + $0x218] sm:$0xff]
        %v612 = vld [vmem:[%s337 + $0x220] sm:$0xff]
        %v613 = vld [vmem:[%s337 + $0x228] sm:$0xff]
        %v614 = vld [vmem:[%s337 + $0x230] sm:$0xff]
        %v615 = vld [vmem:[%s337 + $0x238] sm:$0xff]
        %v616 = vld [vmem:[%s337 + $0x240] sm:$0xff]
        %v617 = vld [vmem:[%s337 + $0x248] sm:$0xff]
        %v618 = vld [vmem:[%s337 + $0x250] sm:$0xff]
        %v619 = vld [vmem:[%s337 + $0x258] sm:$0xff]
        %v620 = vld [vmem:[%s337 + $0x260] sm:$0xff]
        %v621 = vld [vmem:[%s337 + $0x268] sm:$0xff]
        %v622 = vld [vmem:[%s337 + $0x270] sm:$0xff]
        %v623 = vld [vmem:[%s337 + $0x278] sm:$0xff]
        %v624 = vld [vmem:[%s337 + $0x280] sm:$0xff]
        %v625 = vld [vmem:[%s337 + $0x288] sm:$0xff]
        %v626 = vld [vmem:[%s337 + $0x290] sm:$0xff]
        %v627 = vld [vmem:[%s337 + $0x298] sm:$0xff]
        %v628 = vld [vmem:[%s337 + $0x2a0] sm:$0xff]
        %v629 = vld [vmem:[%s337 + $0x2a8] sm:$0xff]
        %v630 = vld [vmem:[%s337 + $0x2b0] sm:$0xff]
        %v631 = vld [vmem:[%s337 + $0x2b8] sm:$0xff]
        %v632 = vld [vmem:[%s337 + $0x2c0] sm:$0xff]
        %v633 = vld [vmem:[%s337 + $0x2c8] sm:$0xff]
        %v634 = vld [vmem:[%s337 + $0x2d0] sm:$0xff]
        %v635 = vld [vmem:[%s337 + $0x2d8] sm:$0xff]
        %v636 = vld [vmem:[%s337 + $0x2e0] sm:$0xff]
        %v637 = vld [vmem:[%s337 + $0x2e8] sm:$0xff]
        %v638 = vld [vmem:[%s337 + $0x2f0] sm:$0xff]
        %v639 = vld [vmem:[%s337 + $0x2f8] sm:$0xff]
        %v640 = vld [vmem:[%s337 + $0x300] sm:$0xff]
        %v641 = vld [vmem:[%s337 + $0x308] sm:$0xff]
        %v642 = vld [vmem:[%s337 + $0x310] sm:$0xff]
        %v643 = vld [vmem:[%s337 + $0x318] sm:$0xff]
        %v644 = vld [vmem:[%s337 + $0x320] sm:$0xff]
        %v645 = vld [vmem:[%s337 + $0x328] sm:$0xff]
        %v646 = vld [vmem:[%s337 + $0x330] sm:$0xff]
        %v647 = vld [vmem:[%s337 + $0x338] sm:$0xff]
        %v648 = vld [vmem:[%s337 + $0x340] sm:$0xff]
        %v649 = vld [vmem:[%s337 + $0x348] sm:$0xff]
        %v650 = vld [vmem:[%s337 + $0x350] sm:$0xff]
        %v651 = vld [vmem:[%s337 + $0x358] sm:$0xff]
        %v652 = vld [vmem:[%s337 + $0x360] sm:$0xff]
        %v653 = vld [vmem:[%s337 + $0x368] sm:$0xff]
        %v654 = vld [vmem:[%s337 + $0x370] sm:$0xff]
        %v655 = vld [vmem:[%s337 + $0x378] sm:$0xff]
        %v656 = vld [vmem:[%s337 + $0x380] sm:$0xff]
        %v657 = vld [vmem:[%s337 + $0x388] sm:$0xff]
        %v658 = vld [vmem:[%s337 + $0x390] sm:$0xff]
        %v659 = vld [vmem:[%s337 + $0x398] sm:$0xff]
        %v660 = vld [vmem:[%s337 + $0x3a0] sm:$0xff]
        %v661 = vld [vmem:[%s337 + $0x3a8] sm:$0xff]
        %v662 = vld [vmem:[%s337 + $0x3b0] sm:$0xff]
        %v663 = vld [vmem:[%s337 + $0x3b8] sm:$0xff]
        %v664 = vld [vmem:[%s337 + $0x3c0] sm:$0xff]
        %v665 = vld [vmem:[%s337 + $0x3c8] sm:$0xff]
        %v666 = vld [vmem:[%s337 + $0x3d0] sm:$0xff]
        %v667 = vld [vmem:[%s337 + $0x3d8] sm:$0xff]
        %v668 = vld [vmem:[%s337 + $0x3e0] sm:$0xff]
        %v669 = vld [vmem:[%s337 + $0x3e8] sm:$0xff]
        %v670 = vld [vmem:[%s337 + $0x3f0] sm:$0xff]
        %v671 = vld [vmem:[%s337 + $0x3f8] sm:$0xff]
        %v672 = vld [vmem:[%s346] sm:$0xff]
        %v673 = vld [vmem:[%s346 + $0x8] sm:$0xff]
        %v674 = vld [vmem:[%s346 + $0x10] sm:$0xff]
        %v675 = vld [vmem:[%s346 + $0x18] sm:$0xff]
        %v676 = vld [vmem:[%s346 + $0x20] sm:$0xff]
        %v677 = vld [vmem:[%s346 + $0x28] sm:$0xff]
        %v678 = vld [vmem:[%s346 + $0x30] sm:$0xff]
        %v679 = vld [vmem:[%s346 + $0x38] sm:$0xff]
        %v680 = vld [vmem:[%s346 + $0x40] sm:$0xff]
        %v681 = vld [vmem:[%s346 + $0x48] sm:$0xff]
        %v682 = vld [vmem:[%s346 + $0x50] sm:$0xff]
        %v683 = vld [vmem:[%s346 + $0x58] sm:$0xff]
        %v684 = vld [vmem:[%s346 + $0x60] sm:$0xff]
        %v685 = vld [vmem:[%s346 + $0x68] sm:$0xff]
        %v686 = vld [vmem:[%s346 + $0x70] sm:$0xff]
        %v687 = vld [vmem:[%s346 + $0x78] sm:$0xff]
        %v688 = vld [vmem:[%s346 + $0x80] sm:$0xff]
        %v689 = vld [vmem:[%s346 + $0x88] sm:$0xff]
        %v690 = vld [vmem:[%s346 + $0x90] sm:$0xff]
        %v691 = vld [vmem:[%s346 + $0x98] sm:$0xff]
        %v692 = vld [vmem:[%s346 + $0xa0] sm:$0xff]
        %v693 = vld [vmem:[%s346 + $0xa8] sm:$0xff]
        %v694 = vld [vmem:[%s346 + $0xb0] sm:$0xff]
        %v695 = vld [vmem:[%s346 + $0xb8] sm:$0xff]
        %v696 = vld [vmem:[%s346 + $0xc0] sm:$0xff]
        %v697 = vld [vmem:[%s346 + $0xc8] sm:$0xff]
        %v698 = vld [vmem:[%s346 + $0xd0] sm:$0xff]
        %v699 = vld [vmem:[%s346 + $0xd8] sm:$0xff]
        %v700 = vld [vmem:[%s346 + $0xe0] sm:$0xff]
        %v701 = vld [vmem:[%s346 + $0xe8] sm:$0xff]
        %v702 = vld [vmem:[%s346 + $0xf0] sm:$0xff]
        %v703 = vld [vmem:[%s346 + $0xf8] sm:$0xff]
        %v704 = vld [vmem:[%s346 + $0x100] sm:$0xff]
        %v705 = vld [vmem:[%s346 + $0x108] sm:$0xff]
        %v706 = vld [vmem:[%s346 + $0x110] sm:$0xff]
        %v707 = vld [vmem:[%s346 + $0x118] sm:$0xff]
        %v708 = vld [vmem:[%s346 + $0x120] sm:$0xff]
        %v709 = vld [vmem:[%s346 + $0x128] sm:$0xff]
        %v710 = vld [vmem:[%s346 + $0x130] sm:$0xff]
        %v711 = vld [vmem:[%s346 + $0x138] sm:$0xff]
        %v712 = vld [vmem:[%s346 + $0x140] sm:$0xff]
        %v713 = vld [vmem:[%s346 + $0x148] sm:$0xff]
        %v714 = vld [vmem:[%s346 + $0x150] sm:$0xff]
        %v715 = vld [vmem:[%s346 + $0x158] sm:$0xff]
        %v716 = vld [vmem:[%s346 + $0x160] sm:$0xff]
        %v717 = vld [vmem:[%s346 + $0x168] sm:$0xff]
        %v718 = vld [vmem:[%s346 + $0x170] sm:$0xff]
        %v719 = vld [vmem:[%s346 + $0x178] sm:$0xff]
        %v720 = vld [vmem:[%s346 + $0x180] sm:$0xff]
        %v721 = vld [vmem:[%s346 + $0x188] sm:$0xff]
        %v722 = vld [vmem:[%s346 + $0x190] sm:$0xff]
        %v723 = vld [vmem:[%s346 + $0x198] sm:$0xff]
        %v724 = vld [vmem:[%s346 + $0x1a0] sm:$0xff]
        %v725 = vld [vmem:[%s346 + $0x1a8] sm:$0xff]
        %v726 = vld [vmem:[%s346 + $0x1b0] sm:$0xff]
        %v727 = vld [vmem:[%s346 + $0x1b8] sm:$0xff]
        %v728 = vld [vmem:[%s346 + $0x1c0] sm:$0xff]
        %v729 = vld [vmem:[%s346 + $0x1c8] sm:$0xff]
        %v730 = vld [vmem:[%s346 + $0x1d0] sm:$0xff]
        %v731 = vld [vmem:[%s346 + $0x1d8] sm:$0xff]
        %v732 = vld [vmem:[%s346 + $0x1e0] sm:$0xff]
        %v733 = vld [vmem:[%s346 + $0x1e8] sm:$0xff]
        %v734 = vld [vmem:[%s346 + $0x1f0] sm:$0xff]
        %v735 = vld [vmem:[%s346 + $0x1f8] sm:$0xff]
        %v736 = vunpack.c.l.bf16 %v672
        %v737 = vunpack.c.h.bf16 %v672
        %v738 = vunpack.c.l.bf16 %v673
        %v739 = vunpack.c.h.bf16 %v673
        %v740 = vunpack.c.l.bf16 %v674
        %v741 = vunpack.c.h.bf16 %v674
        %v742 = vunpack.c.l.bf16 %v675
        %v743 = vunpack.c.h.bf16 %v675
        %v744 = vunpack.c.l.bf16 %v676
        %v745 = vunpack.c.h.bf16 %v676
        %v746 = vunpack.c.l.bf16 %v677
        %v747 = vunpack.c.h.bf16 %v677
        %v748 = vunpack.c.l.bf16 %v678
        %v749 = vunpack.c.h.bf16 %v678
        %v750 = vunpack.c.l.bf16 %v679
        %v751 = vunpack.c.h.bf16 %v679
        %v752 = vunpack.c.l.bf16 %v680
        %v753 = vunpack.c.h.bf16 %v680
        %v754 = vunpack.c.l.bf16 %v681
        %v755 = vunpack.c.h.bf16 %v681
        %v756 = vunpack.c.l.bf16 %v682
        %v757 = vunpack.c.h.bf16 %v682
        %v758 = vunpack.c.l.bf16 %v683
        %v759 = vunpack.c.h.bf16 %v683
        %v760 = vunpack.c.l.bf16 %v684
        %v761 = vunpack.c.h.bf16 %v684
        %v762 = vunpack.c.l.bf16 %v685
        %v763 = vunpack.c.h.bf16 %v685
        %v764 = vunpack.c.l.bf16 %v686
        %v765 = vunpack.c.h.bf16 %v686
        %v766 = vunpack.c.l.bf16 %v687
        %v767 = vunpack.c.h.bf16 %v687
        %v768 = vunpack.c.l.bf16 %v688
        %v769 = vunpack.c.h.bf16 %v688
        %v770 = vunpack.c.l.bf16 %v689
        %v771 = vunpack.c.h.bf16 %v689
        %v772 = vunpack.c.l.bf16 %v690
        %v773 = vunpack.c.h.bf16 %v690
        %v774 = vunpack.c.l.bf16 %v691
        %v775 = vunpack.c.h.bf16 %v691
        %v776 = vunpack.c.l.bf16 %v692
        %v777 = vunpack.c.h.bf16 %v692
        %v778 = vunpack.c.l.bf16 %v693
        %v779 = vunpack.c.h.bf16 %v693
        %v780 = vunpack.c.l.bf16 %v694
        %v781 = vunpack.c.h.bf16 %v694
        %v782 = vunpack.c.l.bf16 %v695
        %v783 = vunpack.c.h.bf16 %v695
        %v784 = vunpack.c.l.bf16 %v696
        %v785 = vunpack.c.h.bf16 %v696
        %v786 = vunpack.c.l.bf16 %v697
        %v787 = vunpack.c.h.bf16 %v697
        %v788 = vunpack.c.l.bf16 %v698
        %v789 = vunpack.c.h.bf16 %v698
        %v790 = vunpack.c.l.bf16 %v699
        %v791 = vunpack.c.h.bf16 %v699
        %v792 = vunpack.c.l.bf16 %v700
        %v793 = vunpack.c.h.bf16 %v700
        %v794 = vunpack.c.l.bf16 %v701
        %v795 = vunpack.c.h.bf16 %v701
        %v796 = vunpack.c.l.bf16 %v702
        %v797 = vunpack.c.h.bf16 %v702
        %v798 = vunpack.c.l.bf16 %v703
        %v799 = vunpack.c.h.bf16 %v703
        %v800 = vunpack.c.l.bf16 %v704
        %v801 = vunpack.c.h.bf16 %v704
        %v802 = vunpack.c.l.bf16 %v705
        %v803 = vunpack.c.h.bf16 %v705
        %v804 = vunpack.c.l.bf16 %v706
        %v805 = vunpack.c.h.bf16 %v706
        %v806 = vunpack.c.l.bf16 %v707
        %v807 = vunpack.c.h.bf16 %v707
        %v808 = vunpack.c.l.bf16 %v708
        %v809 = vunpack.c.h.bf16 %v708
        %v810 = vunpack.c.l.bf16 %v709
        %v811 = vunpack.c.h.bf16 %v709
        %v812 = vunpack.c.l.bf16 %v710
        %v813 = vunpack.c.h.bf16 %v710
        %v814 = vunpack.c.l.bf16 %v711
        %v815 = vunpack.c.h.bf16 %v711
        %v816 = vunpack.c.l.bf16 %v712
        %v817 = vunpack.c.h.bf16 %v712
        %v818 = vunpack.c.l.bf16 %v713
        %v819 = vunpack.c.h.bf16 %v713
        %v820 = vunpack.c.l.bf16 %v714
        %v821 = vunpack.c.h.bf16 %v714
        %v822 = vunpack.c.l.bf16 %v715
        %v823 = vunpack.c.h.bf16 %v715
        %v824 = vunpack.c.l.bf16 %v716
        %v825 = vunpack.c.h.bf16 %v716
        %v826 = vunpack.c.l.bf16 %v717
        %v827 = vunpack.c.h.bf16 %v717
        %v828 = vunpack.c.l.bf16 %v718
        %v829 = vunpack.c.h.bf16 %v718
        %v830 = vunpack.c.l.bf16 %v719
        %v831 = vunpack.c.h.bf16 %v719
        %v832 = vunpack.c.l.bf16 %v720
        %v833 = vunpack.c.h.bf16 %v720
        %v834 = vunpack.c.l.bf16 %v721
        %v835 = vunpack.c.h.bf16 %v721
        %v836 = vunpack.c.l.bf16 %v722
        %v837 = vunpack.c.h.bf16 %v722
        %v838 = vunpack.c.l.bf16 %v723
        %v839 = vunpack.c.h.bf16 %v723
        %v840 = vunpack.c.l.bf16 %v724
        %v841 = vunpack.c.h.bf16 %v724
        %v842 = vunpack.c.l.bf16 %v725
        %v843 = vunpack.c.h.bf16 %v725
        %v844 = vunpack.c.l.bf16 %v726
        %v845 = vunpack.c.h.bf16 %v726
        %v846 = vunpack.c.l.bf16 %v727
        %v847 = vunpack.c.h.bf16 %v727
        %v848 = vunpack.c.l.bf16 %v728
        %v849 = vunpack.c.h.bf16 %v728
        %v850 = vunpack.c.l.bf16 %v729
        %v851 = vunpack.c.h.bf16 %v729
        %v852 = vunpack.c.l.bf16 %v730
        %v853 = vunpack.c.h.bf16 %v730
        %v854 = vunpack.c.l.bf16 %v731
        %v855 = vunpack.c.h.bf16 %v731
        %v856 = vunpack.c.l.bf16 %v732
        %v857 = vunpack.c.h.bf16 %v732
        %v858 = vunpack.c.l.bf16 %v733
        %v859 = vunpack.c.h.bf16 %v733
        %v860 = vunpack.c.l.bf16 %v734
        %v861 = vunpack.c.h.bf16 %v734
        %v862 = vunpack.c.l.bf16 %v735
        %v863 = vunpack.c.h.bf16 %v735
        %v864 = vld [vmem:[%s355] sm:$0xff]
        %v865 = vld [vmem:[%s355 + $0x8] sm:$0xff]
        %v866 = vld [vmem:[%s355 + $0x10] sm:$0xff]
        %v867 = vld [vmem:[%s355 + $0x18] sm:$0xff]
        %v868 = vld [vmem:[%s355 + $0x20] sm:$0xff]
        %v869 = vld [vmem:[%s355 + $0x28] sm:$0xff]
        %v870 = vld [vmem:[%s355 + $0x30] sm:$0xff]
        %v871 = vld [vmem:[%s355 + $0x38] sm:$0xff]
        %v872 = vld [vmem:[%s355 + $0x40] sm:$0xff]
        %v873 = vld [vmem:[%s355 + $0x48] sm:$0xff]
        %v874 = vld [vmem:[%s355 + $0x50] sm:$0xff]
        %v875 = vld [vmem:[%s355 + $0x58] sm:$0xff]
        %v876 = vld [vmem:[%s355 + $0x60] sm:$0xff]
        %v877 = vld [vmem:[%s355 + $0x68] sm:$0xff]
        %v878 = vld [vmem:[%s355 + $0x70] sm:$0xff]
        %v879 = vld [vmem:[%s355 + $0x78] sm:$0xff]
        %v880 = vld [vmem:[%s355 + $0x80] sm:$0xff]
        %v881 = vld [vmem:[%s355 + $0x88] sm:$0xff]
        %v882 = vld [vmem:[%s355 + $0x90] sm:$0xff]
        %v883 = vld [vmem:[%s355 + $0x98] sm:$0xff]
        %v884 = vld [vmem:[%s355 + $0xa0] sm:$0xff]
        %v885 = vld [vmem:[%s355 + $0xa8] sm:$0xff]
        %v886 = vld [vmem:[%s355 + $0xb0] sm:$0xff]
        %v887 = vld [vmem:[%s355 + $0xb8] sm:$0xff]
        %v888 = vld [vmem:[%s355 + $0xc0] sm:$0xff]
        %v889 = vld [vmem:[%s355 + $0xc8] sm:$0xff]
        %v890 = vld [vmem:[%s355 + $0xd0] sm:$0xff]
        %v891 = vld [vmem:[%s355 + $0xd8] sm:$0xff]
        %v892 = vld [vmem:[%s355 + $0xe0] sm:$0xff]
        %v893 = vld [vmem:[%s355 + $0xe8] sm:$0xff]
        %v894 = vld [vmem:[%s355 + $0xf0] sm:$0xff]
        %v895 = vld [vmem:[%s355 + $0xf8] sm:$0xff]
        %v896 = vld [vmem:[%s355 + $0x100] sm:$0xff]
        %v897 = vld [vmem:[%s355 + $0x108] sm:$0xff]
        %v898 = vld [vmem:[%s355 + $0x110] sm:$0xff]
        %v899 = vld [vmem:[%s355 + $0x118] sm:$0xff]
        %v900 = vld [vmem:[%s355 + $0x120] sm:$0xff]
        %v901 = vld [vmem:[%s355 + $0x128] sm:$0xff]
        %v902 = vld [vmem:[%s355 + $0x130] sm:$0xff]
        %v903 = vld [vmem:[%s355 + $0x138] sm:$0xff]
        %v904 = vld [vmem:[%s355 + $0x140] sm:$0xff]
        %v905 = vld [vmem:[%s355 + $0x148] sm:$0xff]
        %v906 = vld [vmem:[%s355 + $0x150] sm:$0xff]
        %v907 = vld [vmem:[%s355 + $0x158] sm:$0xff]
        %v908 = vld [vmem:[%s355 + $0x160] sm:$0xff]
        %v909 = vld [vmem:[%s355 + $0x168] sm:$0xff]
        %v910 = vld [vmem:[%s355 + $0x170] sm:$0xff]
        %v911 = vld [vmem:[%s355 + $0x178] sm:$0xff]
        %v912 = vld [vmem:[%s355 + $0x180] sm:$0xff]
        %v913 = vld [vmem:[%s355 + $0x188] sm:$0xff]
        %v914 = vld [vmem:[%s355 + $0x190] sm:$0xff]
        %v915 = vld [vmem:[%s355 + $0x198] sm:$0xff]
        %v916 = vld [vmem:[%s355 + $0x1a0] sm:$0xff]
        %v917 = vld [vmem:[%s355 + $0x1a8] sm:$0xff]
        %v918 = vld [vmem:[%s355 + $0x1b0] sm:$0xff]
        %v919 = vld [vmem:[%s355 + $0x1b8] sm:$0xff]
        %v920 = vld [vmem:[%s355 + $0x1c0] sm:$0xff]
        %v921 = vld [vmem:[%s355 + $0x1c8] sm:$0xff]
        %v922 = vld [vmem:[%s355 + $0x1d0] sm:$0xff]
        %v923 = vld [vmem:[%s355 + $0x1d8] sm:$0xff]
        %v924 = vld [vmem:[%s355 + $0x1e0] sm:$0xff]
        %v925 = vld [vmem:[%s355 + $0x1e8] sm:$0xff]
        %v926 = vld [vmem:[%s355 + $0x1f0] sm:$0xff]
        %v927 = vld [vmem:[%s355 + $0x1f8] sm:$0xff]
        %v928 = vld [vmem:[%s355 + $0x200] sm:$0xff]
        %v929 = vld [vmem:[%s355 + $0x208] sm:$0xff]
        %v930 = vld [vmem:[%s355 + $0x210] sm:$0xff]
        %v931 = vld [vmem:[%s355 + $0x218] sm:$0xff]
        %v932 = vld [vmem:[%s355 + $0x220] sm:$0xff]
        %v933 = vld [vmem:[%s355 + $0x228] sm:$0xff]
        %v934 = vld [vmem:[%s355 + $0x230] sm:$0xff]
        %v935 = vld [vmem:[%s355 + $0x238] sm:$0xff]
        %v936 = vld [vmem:[%s355 + $0x240] sm:$0xff]
        %v937 = vld [vmem:[%s355 + $0x248] sm:$0xff]
        %v938 = vld [vmem:[%s355 + $0x250] sm:$0xff]
        %v939 = vld [vmem:[%s355 + $0x258] sm:$0xff]
        %v940 = vld [vmem:[%s355 + $0x260] sm:$0xff]
        %v941 = vld [vmem:[%s355 + $0x268] sm:$0xff]
        %v942 = vld [vmem:[%s355 + $0x270] sm:$0xff]
        %v943 = vld [vmem:[%s355 + $0x278] sm:$0xff]
        %v944 = vld [vmem:[%s355 + $0x280] sm:$0xff]
        %v945 = vld [vmem:[%s355 + $0x288] sm:$0xff]
        %v946 = vld [vmem:[%s355 + $0x290] sm:$0xff]
        %v947 = vld [vmem:[%s355 + $0x298] sm:$0xff]
        %v948 = vld [vmem:[%s355 + $0x2a0] sm:$0xff]
        %v949 = vld [vmem:[%s355 + $0x2a8] sm:$0xff]
        %v950 = vld [vmem:[%s355 + $0x2b0] sm:$0xff]
        %v951 = vld [vmem:[%s355 + $0x2b8] sm:$0xff]
        %v952 = vld [vmem:[%s355 + $0x2c0] sm:$0xff]
        %v953 = vld [vmem:[%s355 + $0x2c8] sm:$0xff]
        %v954 = vld [vmem:[%s355 + $0x2d0] sm:$0xff]
        %v955 = vld [vmem:[%s355 + $0x2d8] sm:$0xff]
        %v956 = vld [vmem:[%s355 + $0x2e0] sm:$0xff]
        %v957 = vld [vmem:[%s355 + $0x2e8] sm:$0xff]
        %v958 = vld [vmem:[%s355 + $0x2f0] sm:$0xff]
        %v959 = vld [vmem:[%s355 + $0x2f8] sm:$0xff]
        %v960 = vld [vmem:[%s355 + $0x300] sm:$0xff]
        %v961 = vld [vmem:[%s355 + $0x308] sm:$0xff]
        %v962 = vld [vmem:[%s355 + $0x310] sm:$0xff]
        %v963 = vld [vmem:[%s355 + $0x318] sm:$0xff]
        %v964 = vld [vmem:[%s355 + $0x320] sm:$0xff]
        %v965 = vld [vmem:[%s355 + $0x328] sm:$0xff]
        %v966 = vld [vmem:[%s355 + $0x330] sm:$0xff]
        %v967 = vld [vmem:[%s355 + $0x338] sm:$0xff]
        %v968 = vld [vmem:[%s355 + $0x340] sm:$0xff]
        %v969 = vld [vmem:[%s355 + $0x348] sm:$0xff]
        %v970 = vld [vmem:[%s355 + $0x350] sm:$0xff]
        %v971 = vld [vmem:[%s355 + $0x358] sm:$0xff]
        %v972 = vld [vmem:[%s355 + $0x360] sm:$0xff]
        %v973 = vld [vmem:[%s355 + $0x368] sm:$0xff]
        %v974 = vld [vmem:[%s355 + $0x370] sm:$0xff]
        %v975 = vld [vmem:[%s355 + $0x378] sm:$0xff]
        %v976 = vld [vmem:[%s355 + $0x380] sm:$0xff]
        %v977 = vld [vmem:[%s355 + $0x388] sm:$0xff]
        %v978 = vld [vmem:[%s355 + $0x390] sm:$0xff]
        %v979 = vld [vmem:[%s355 + $0x398] sm:$0xff]
        %v980 = vld [vmem:[%s355 + $0x3a0] sm:$0xff]
        %v981 = vld [vmem:[%s355 + $0x3a8] sm:$0xff]
        %v982 = vld [vmem:[%s355 + $0x3b0] sm:$0xff]
        %v983 = vld [vmem:[%s355 + $0x3b8] sm:$0xff]
        %v984 = vld [vmem:[%s355 + $0x3c0] sm:$0xff]
        %v985 = vld [vmem:[%s355 + $0x3c8] sm:$0xff]
        %v986 = vld [vmem:[%s355 + $0x3d0] sm:$0xff]
        %v987 = vld [vmem:[%s355 + $0x3d8] sm:$0xff]
        %v988 = vld [vmem:[%s355 + $0x3e0] sm:$0xff]
        %v989 = vld [vmem:[%s355 + $0x3e8] sm:$0xff]
        %v990 = vld [vmem:[%s355 + $0x3f0] sm:$0xff]
        %v991 = vld [vmem:[%s355 + $0x3f8] sm:$0xff]
        %v992 = vmul.f32 %v736, %v544
        %v993 = vmul.f32 %v737, %v545
        %v994 = vmul.f32 %v738, %v546
        %v995 = vmul.f32 %v739, %v547
        %v996 = vmul.f32 %v740, %v548
        %v997 = vmul.f32 %v741, %v549
        %v998 = vmul.f32 %v742, %v550
        %v999 = vmul.f32 %v743, %v551
        %v1000 = vmul.f32 %v744, %v552
        %v1001 = vmul.f32 %v745, %v553
        %v1002 = vmul.f32 %v746, %v554
        %v1003 = vmul.f32 %v747, %v555
        %v1004 = vmul.f32 %v748, %v556
        %v1005 = vmul.f32 %v749, %v557
        %v1006 = vmul.f32 %v750, %v558
        %v1007 = vmul.f32 %v751, %v559
        %v1008 = vmul.f32 %v752, %v560
        %v1009 = vmul.f32 %v753, %v561
        %v1010 = vmul.f32 %v754, %v562
        %v1011 = vmul.f32 %v755, %v563
        %v1012 = vmul.f32 %v756, %v564
        %v1013 = vmul.f32 %v757, %v565
        %v1014 = vmul.f32 %v758, %v566
        %v1015 = vmul.f32 %v759, %v567
        %v1016 = vmul.f32 %v760, %v568
        %v1017 = vmul.f32 %v761, %v569
        %v1018 = vmul.f32 %v762, %v570
        %v1019 = vmul.f32 %v763, %v571
        %v1020 = vmul.f32 %v764, %v572
        %v1021 = vmul.f32 %v765, %v573
        %v1022 = vmul.f32 %v766, %v574
        %v1023 = vmul.f32 %v767, %v575
        %v1024 = vmul.f32 %v768, %v576
        %v1025 = vmul.f32 %v769, %v577
        %v1026 = vmul.f32 %v770, %v578
        %v1027 = vmul.f32 %v771, %v579
        %v1028 = vmul.f32 %v772, %v580
        %v1029 = vmul.f32 %v773, %v581
        %v1030 = vmul.f32 %v774, %v582
        %v1031 = vmul.f32 %v775, %v583
        %v1032 = vmul.f32 %v776, %v584
        %v1033 = vmul.f32 %v777, %v585
        %v1034 = vmul.f32 %v778, %v586
        %v1035 = vmul.f32 %v779, %v587
        %v1036 = vmul.f32 %v780, %v588
        %v1037 = vmul.f32 %v781, %v589
        %v1038 = vmul.f32 %v782, %v590
        %v1039 = vmul.f32 %v783, %v591
        %v1040 = vmul.f32 %v784, %v592
        %v1041 = vmul.f32 %v785, %v593
        %v1042 = vmul.f32 %v786, %v594
        %v1043 = vmul.f32 %v787, %v595
        %v1044 = vmul.f32 %v788, %v596
        %v1045 = vmul.f32 %v789, %v597
        %v1046 = vmul.f32 %v790, %v598
        %v1047 = vmul.f32 %v791, %v599
        %v1048 = vmul.f32 %v792, %v600
        %v1049 = vmul.f32 %v793, %v601
        %v1050 = vmul.f32 %v794, %v602
        %v1051 = vmul.f32 %v795, %v603
        %v1052 = vmul.f32 %v796, %v604
        %v1053 = vmul.f32 %v797, %v605
        %v1054 = vmul.f32 %v798, %v606
        %v1055 = vmul.f32 %v799, %v607
        %v1056 = vmul.f32 %v800, %v608
        %v1057 = vmul.f32 %v801, %v609
        %v1058 = vmul.f32 %v802, %v610
        %v1059 = vmul.f32 %v803, %v611
        %v1060 = vmul.f32 %v804, %v612
        %v1061 = vmul.f32 %v805, %v613
        %v1062 = vmul.f32 %v806, %v614
        %v1063 = vmul.f32 %v807, %v615
        %v1064 = vmul.f32 %v808, %v616
        %v1065 = vmul.f32 %v809, %v617
        %v1066 = vmul.f32 %v810, %v618
        %v1067 = vmul.f32 %v811, %v619
        %v1068 = vmul.f32 %v812, %v620
        %v1069 = vmul.f32 %v813, %v621
        %v1070 = vmul.f32 %v814, %v622
        %v1071 = vmul.f32 %v815, %v623
        %v1072 = vmul.f32 %v816, %v624
        %v1073 = vmul.f32 %v817, %v625
        %v1074 = vmul.f32 %v818, %v626
        %v1075 = vmul.f32 %v819, %v627
        %v1076 = vmul.f32 %v820, %v628
        %v1077 = vmul.f32 %v821, %v629
        %v1078 = vmul.f32 %v822, %v630
        %v1079 = vmul.f32 %v823, %v631
        %v1080 = vmul.f32 %v824, %v632
        %v1081 = vmul.f32 %v825, %v633
        %v1082 = vmul.f32 %v826, %v634
        %v1083 = vmul.f32 %v827, %v635
        %v1084 = vmul.f32 %v828, %v636
        %v1085 = vmul.f32 %v829, %v637
        %v1086 = vmul.f32 %v830, %v638
        %v1087 = vmul.f32 %v831, %v639
        %v1088 = vmul.f32 %v832, %v640
        %v1089 = vmul.f32 %v833, %v641
        %v1090 = vmul.f32 %v834, %v642
        %v1091 = vmul.f32 %v835, %v643
        %v1092 = vmul.f32 %v836, %v644
        %v1093 = vmul.f32 %v837, %v645
        %v1094 = vmul.f32 %v838, %v646
        %v1095 = vmul.f32 %v839, %v647
        %v1096 = vmul.f32 %v840, %v648
        %v1097 = vmul.f32 %v841, %v649
        %v1098 = vmul.f32 %v842, %v650
        %v1099 = vmul.f32 %v843, %v651
        %v1100 = vmul.f32 %v844, %v652
        %v1101 = vmul.f32 %v845, %v653
        %v1102 = vmul.f32 %v846, %v654
        %v1103 = vmul.f32 %v847, %v655
        %v1104 = vmul.f32 %v848, %v656
        %v1105 = vmul.f32 %v849, %v657
        %v1106 = vmul.f32 %v850, %v658
        %v1107 = vmul.f32 %v851, %v659
        %v1108 = vmul.f32 %v852, %v660
        %v1109 = vmul.f32 %v853, %v661
        %v1110 = vmul.f32 %v854, %v662
        %v1111 = vmul.f32 %v855, %v663
        %v1112 = vmul.f32 %v856, %v664
        %v1113 = vmul.f32 %v857, %v665
        %v1114 = vmul.f32 %v858, %v666
        %v1115 = vmul.f32 %v859, %v667
        %v1116 = vmul.f32 %v860, %v668
        %v1117 = vmul.f32 %v861, %v669
        %v1118 = vmul.f32 %v862, %v670
        %v1119 = vmul.f32 %v863, %v671
        %v1120 = vadd.f32 %v416, %v992
        %v1121 = vadd.f32 %v417, %v993
        %v1122 = vadd.f32 %v418, %v994
        %v1123 = vadd.f32 %v419, %v995
        %v1124 = vadd.f32 %v420, %v996
        %v1125 = vadd.f32 %v421, %v997
        %v1126 = vadd.f32 %v422, %v998
        %v1127 = vadd.f32 %v423, %v999
        %v1128 = vadd.f32 %v424, %v1000
        %v1129 = vadd.f32 %v425, %v1001
        %v1130 = vadd.f32 %v426, %v1002
        %v1131 = vadd.f32 %v427, %v1003
        %v1132 = vadd.f32 %v428, %v1004
        %v1133 = vadd.f32 %v429, %v1005
        %v1134 = vadd.f32 %v430, %v1006
        %v1135 = vadd.f32 %v431, %v1007
        %v1136 = vadd.f32 %v432, %v1008
        %v1137 = vadd.f32 %v433, %v1009
        %v1138 = vadd.f32 %v434, %v1010
        %v1139 = vadd.f32 %v435, %v1011
        %v1140 = vadd.f32 %v436, %v1012
        %v1141 = vadd.f32 %v437, %v1013
        %v1142 = vadd.f32 %v438, %v1014
        %v1143 = vadd.f32 %v439, %v1015
        %v1144 = vadd.f32 %v440, %v1016
        %v1145 = vadd.f32 %v441, %v1017
        %v1146 = vadd.f32 %v442, %v1018
        %v1147 = vadd.f32 %v443, %v1019
        %v1148 = vadd.f32 %v444, %v1020
        %v1149 = vadd.f32 %v445, %v1021
        %v1150 = vadd.f32 %v446, %v1022
        %v1151 = vadd.f32 %v447, %v1023
        %v1152 = vadd.f32 %v448, %v1024
        %v1153 = vadd.f32 %v449, %v1025
        %v1154 = vadd.f32 %v450, %v1026
        %v1155 = vadd.f32 %v451, %v1027
        %v1156 = vadd.f32 %v452, %v1028
        %v1157 = vadd.f32 %v453, %v1029
        %v1158 = vadd.f32 %v454, %v1030
        %v1159 = vadd.f32 %v455, %v1031
        %v1160 = vadd.f32 %v456, %v1032
        %v1161 = vadd.f32 %v457, %v1033
        %v1162 = vadd.f32 %v458, %v1034
        %v1163 = vadd.f32 %v459, %v1035
        %v1164 = vadd.f32 %v460, %v1036
        %v1165 = vadd.f32 %v461, %v1037
        %v1166 = vadd.f32 %v462, %v1038
        %v1167 = vadd.f32 %v463, %v1039
        %v1168 = vadd.f32 %v464, %v1040
        %v1169 = vadd.f32 %v465, %v1041
        %v1170 = vadd.f32 %v466, %v1042
        %v1171 = vadd.f32 %v467, %v1043
        %v1172 = vadd.f32 %v468, %v1044
        %v1173 = vadd.f32 %v469, %v1045
        %v1174 = vadd.f32 %v470, %v1046
        %v1175 = vadd.f32 %v471, %v1047
        %v1176 = vadd.f32 %v472, %v1048
        %v1177 = vadd.f32 %v473, %v1049
        %v1178 = vadd.f32 %v474, %v1050
        %v1179 = vadd.f32 %v475, %v1051
        %v1180 = vadd.f32 %v476, %v1052
        %v1181 = vadd.f32 %v477, %v1053
        %v1182 = vadd.f32 %v478, %v1054
        %v1183 = vadd.f32 %v479, %v1055
        %v1184 = vadd.f32 %v480, %v1056
        %v1185 = vadd.f32 %v481, %v1057
        %v1186 = vadd.f32 %v482, %v1058
        %v1187 = vadd.f32 %v483, %v1059
        %v1188 = vadd.f32 %v484, %v1060
        %v1189 = vadd.f32 %v485, %v1061
        %v1190 = vadd.f32 %v486, %v1062
        %v1191 = vadd.f32 %v487, %v1063
        %v1192 = vadd.f32 %v488, %v1064
        %v1193 = vadd.f32 %v489, %v1065
        %v1194 = vadd.f32 %v490, %v1066
        %v1195 = vadd.f32 %v491, %v1067
        %v1196 = vadd.f32 %v492, %v1068
        %v1197 = vadd.f32 %v493, %v1069
        %v1198 = vadd.f32 %v494, %v1070
        %v1199 = vadd.f32 %v495, %v1071
        %v1200 = vadd.f32 %v496, %v1072
        %v1201 = vadd.f32 %v497, %v1073
        %v1202 = vadd.f32 %v498, %v1074
        %v1203 = vadd.f32 %v499, %v1075
        %v1204 = vadd.f32 %v500, %v1076
        %v1205 = vadd.f32 %v501, %v1077
        %v1206 = vadd.f32 %v502, %v1078
        %v1207 = vadd.f32 %v503, %v1079
        %v1208 = vadd.f32 %v504, %v1080
        %v1209 = vadd.f32 %v505, %v1081
        %v1210 = vadd.f32 %v506, %v1082
        %v1211 = vadd.f32 %v507, %v1083
        %v1212 = vadd.f32 %v508, %v1084
        %v1213 = vadd.f32 %v509, %v1085
        %v1214 = vadd.f32 %v510, %v1086
        %v1215 = vadd.f32 %v511, %v1087
        %v1216 = vadd.f32 %v512, %v1088
        %v1217 = vadd.f32 %v513, %v1089
        %v1218 = vadd.f32 %v514, %v1090
        %v1219 = vadd.f32 %v515, %v1091
        %v1220 = vadd.f32 %v516, %v1092
        %v1221 = vadd.f32 %v517, %v1093
        %v1222 = vadd.f32 %v518, %v1094
        %v1223 = vadd.f32 %v519, %v1095
        %v1224 = vadd.f32 %v520, %v1096
        %v1225 = vadd.f32 %v521, %v1097
        %v1226 = vadd.f32 %v522, %v1098
        %v1227 = vadd.f32 %v523, %v1099
        %v1228 = vadd.f32 %v524, %v1100
        %v1229 = vadd.f32 %v525, %v1101
        %v1230 = vadd.f32 %v526, %v1102
        %v1231 = vadd.f32 %v527, %v1103
        %v1232 = vadd.f32 %v528, %v1104
        %v1233 = vadd.f32 %v529, %v1105
        %v1234 = vadd.f32 %v530, %v1106
        %v1235 = vadd.f32 %v531, %v1107
        %v1236 = vadd.f32 %v532, %v1108
        %v1237 = vadd.f32 %v533, %v1109
        %v1238 = vadd.f32 %v534, %v1110
        %v1239 = vadd.f32 %v535, %v1111
        %v1240 = vadd.f32 %v536, %v1112
        %v1241 = vadd.f32 %v537, %v1113
        %v1242 = vadd.f32 %v538, %v1114
        %v1243 = vadd.f32 %v539, %v1115
        %v1244 = vadd.f32 %v540, %v1116
        %v1245 = vadd.f32 %v541, %v1117
        %v1246 = vadd.f32 %v542, %v1118
        %v1247 = vadd.f32 %v543, %v1119
        %v1248 = vmul.f32 %v864, 0.99
        %v1249 = vmul.f32 %v865, 0.99
        %v1250 = vmul.f32 %v866, 0.99
        %v1251 = vmul.f32 %v867, 0.99
        %v1252 = vmul.f32 %v868, 0.99
        %v1253 = vmul.f32 %v869, 0.99
        %v1254 = vmul.f32 %v870, 0.99
        %v1255 = vmul.f32 %v871, 0.99
        %v1256 = vmul.f32 %v872, 0.99
        %v1257 = vmul.f32 %v873, 0.99
        %v1258 = vmul.f32 %v874, 0.99
        %v1259 = vmul.f32 %v875, 0.99
        %v1260 = vmul.f32 %v876, 0.99
        %v1261 = vmul.f32 %v877, 0.99
        %v1262 = vmul.f32 %v878, 0.99
        %v1263 = vmul.f32 %v879, 0.99
        %v1264 = vmul.f32 %v880, 0.99
        %v1265 = vmul.f32 %v881, 0.99
        %v1266 = vmul.f32 %v882, 0.99
        %v1267 = vmul.f32 %v883, 0.99
        %v1268 = vmul.f32 %v884, 0.99
        %v1269 = vmul.f32 %v885, 0.99
        %v1270 = vmul.f32 %v886, 0.99
        %v1271 = vmul.f32 %v887, 0.99
        %v1272 = vmul.f32 %v888, 0.99
        %v1273 = vmul.f32 %v889, 0.99
        %v1274 = vmul.f32 %v890, 0.99
        %v1275 = vmul.f32 %v891, 0.99
        %v1276 = vmul.f32 %v892, 0.99
        %v1277 = vmul.f32 %v893, 0.99
        %v1278 = vmul.f32 %v894, 0.99
        %v1279 = vmul.f32 %v895, 0.99
        %v1280 = vmul.f32 %v896, 0.99
        %v1281 = vmul.f32 %v897, 0.99
        %v1282 = vmul.f32 %v898, 0.99
        %v1283 = vmul.f32 %v899, 0.99
        %v1284 = vmul.f32 %v900, 0.99
        %v1285 = vmul.f32 %v901, 0.99
        %v1286 = vmul.f32 %v902, 0.99
        %v1287 = vmul.f32 %v903, 0.99
        %v1288 = vmul.f32 %v904, 0.99
        %v1289 = vmul.f32 %v905, 0.99
        %v1290 = vmul.f32 %v906, 0.99
        %v1291 = vmul.f32 %v907, 0.99
        %v1292 = vmul.f32 %v908, 0.99
        %v1293 = vmul.f32 %v909, 0.99
        %v1294 = vmul.f32 %v910, 0.99
        %v1295 = vmul.f32 %v911, 0.99
        %v1296 = vmul.f32 %v912, 0.99
        %v1297 = vmul.f32 %v913, 0.99
        %v1298 = vmul.f32 %v914, 0.99
        %v1299 = vmul.f32 %v915, 0.99
        %v1300 = vmul.f32 %v916, 0.99
        %v1301 = vmul.f32 %v917, 0.99
        %v1302 = vmul.f32 %v918, 0.99
        %v1303 = vmul.f32 %v919, 0.99
        %v1304 = vmul.f32 %v920, 0.99
        %v1305 = vmul.f32 %v921, 0.99
        %v1306 = vmul.f32 %v922, 0.99
        %v1307 = vmul.f32 %v923, 0.99
        %v1308 = vmul.f32 %v924, 0.99
        %v1309 = vmul.f32 %v925, 0.99
        %v1310 = vmul.f32 %v926, 0.99
        %v1311 = vmul.f32 %v927, 0.99
        %v1312 = vmul.f32 %v928, 0.99
        %v1313 = vmul.f32 %v929, 0.99
        %v1314 = vmul.f32 %v930, 0.99
        %v1315 = vmul.f32 %v931, 0.99
        %v1316 = vmul.f32 %v932, 0.99
        %v1317 = vmul.f32 %v933, 0.99
        %v1318 = vmul.f32 %v934, 0.99
        %v1319 = vmul.f32 %v935, 0.99
        %v1320 = vmul.f32 %v936, 0.99
        %v1321 = vmul.f32 %v937, 0.99
        %v1322 = vmul.f32 %v938, 0.99
        %v1323 = vmul.f32 %v939, 0.99
        %v1324 = vmul.f32 %v940, 0.99
        %v1325 = vmul.f32 %v941, 0.99
        %v1326 = vmul.f32 %v942, 0.99
        %v1327 = vmul.f32 %v943, 0.99
        %v1328 = vmul.f32 %v944, 0.99
        %v1329 = vmul.f32 %v945, 0.99
        %v1330 = vmul.f32 %v946, 0.99
        %v1331 = vmul.f32 %v947, 0.99
        %v1332 = vmul.f32 %v948, 0.99
        %v1333 = vmul.f32 %v949, 0.99
        %v1334 = vmul.f32 %v950, 0.99
        %v1335 = vmul.f32 %v951, 0.99
        %v1336 = vmul.f32 %v952, 0.99
        %v1337 = vmul.f32 %v953, 0.99
        %v1338 = vmul.f32 %v954, 0.99
        %v1339 = vmul.f32 %v955, 0.99
        %v1340 = vmul.f32 %v956, 0.99
        %v1341 = vmul.f32 %v957, 0.99
        %v1342 = vmul.f32 %v958, 0.99
        %v1343 = vmul.f32 %v959, 0.99
        %v1344 = vmul.f32 %v960, 0.99
        %v1345 = vmul.f32 %v961, 0.99
        %v1346 = vmul.f32 %v962, 0.99
        %v1347 = vmul.f32 %v963, 0.99
        %v1348 = vmul.f32 %v964, 0.99
        %v1349 = vmul.f32 %v965, 0.99
        %v1350 = vmul.f32 %v966, 0.99
        %v1351 = vmul.f32 %v967, 0.99
        %v1352 = vmul.f32 %v968, 0.99
        %v1353 = vmul.f32 %v969, 0.99
        %v1354 = vmul.f32 %v970, 0.99
        %v1355 = vmul.f32 %v971, 0.99
        %v1356 = vmul.f32 %v972, 0.99
        %v1357 = vmul.f32 %v973, 0.99
        %v1358 = vmul.f32 %v974, 0.99
        %v1359 = vmul.f32 %v975, 0.99
        %v1360 = vmul.f32 %v976, 0.99
        %v1361 = vmul.f32 %v977, 0.99
        %v1362 = vmul.f32 %v978, 0.99
        %v1363 = vmul.f32 %v979, 0.99
        %v1364 = vmul.f32 %v980, 0.99
        %v1365 = vmul.f32 %v981, 0.99
        %v1366 = vmul.f32 %v982, 0.99
        %v1367 = vmul.f32 %v983, 0.99
        %v1368 = vmul.f32 %v984, 0.99
        %v1369 = vmul.f32 %v985, 0.99
        %v1370 = vmul.f32 %v986, 0.99
        %v1371 = vmul.f32 %v987, 0.99
        %v1372 = vmul.f32 %v988, 0.99
        %v1373 = vmul.f32 %v989, 0.99
        %v1374 = vmul.f32 %v990, 0.99
        %v1375 = vmul.f32 %v991, 0.99
        %v1376 = vmul.f32 %v1120, 0.01
        %v1377 = vmul.f32 %v1121, 0.01
        %v1378 = vmul.f32 %v1122, 0.01
        %v1379 = vmul.f32 %v1123, 0.01
        %v1380 = vmul.f32 %v1124, 0.01
        %v1381 = vmul.f32 %v1125, 0.01
        %v1382 = vmul.f32 %v1126, 0.01
        %v1383 = vmul.f32 %v1127, 0.01
        %v1384 = vmul.f32 %v1128, 0.01
        %v1385 = vmul.f32 %v1129, 0.01
        %v1386 = vmul.f32 %v1130, 0.01
        %v1387 = vmul.f32 %v1131, 0.01
        %v1388 = vmul.f32 %v1132, 0.01
        %v1389 = vmul.f32 %v1133, 0.01
        %v1390 = vmul.f32 %v1134, 0.01
        %v1391 = vmul.f32 %v1135, 0.01
        %v1392 = vmul.f32 %v1136, 0.01
        %v1393 = vmul.f32 %v1137, 0.01
        %v1394 = vmul.f32 %v1138, 0.01
        %v1395 = vmul.f32 %v1139, 0.01
        %v1396 = vmul.f32 %v1140, 0.01
        %v1397 = vmul.f32 %v1141, 0.01
        %v1398 = vmul.f32 %v1142, 0.01
        %v1399 = vmul.f32 %v1143, 0.01
        %v1400 = vmul.f32 %v1144, 0.01
        %v1401 = vmul.f32 %v1145, 0.01
        %v1402 = vmul.f32 %v1146, 0.01
        %v1403 = vmul.f32 %v1147, 0.01
        %v1404 = vmul.f32 %v1148, 0.01
        %v1405 = vmul.f32 %v1149, 0.01
        %v1406 = vmul.f32 %v1150, 0.01
        %v1407 = vmul.f32 %v1151, 0.01
        %v1408 = vmul.f32 %v1152, 0.01
        %v1409 = vmul.f32 %v1153, 0.01
        %v1410 = vmul.f32 %v1154, 0.01
        %v1411 = vmul.f32 %v1155, 0.01
        %v1412 = vmul.f32 %v1156, 0.01
        %v1413 = vmul.f32 %v1157, 0.01
        %v1414 = vmul.f32 %v1158, 0.01
        %v1415 = vmul.f32 %v1159, 0.01
        %v1416 = vmul.f32 %v1160, 0.01
        %v1417 = vmul.f32 %v1161, 0.01
        %v1418 = vmul.f32 %v1162, 0.01
        %v1419 = vmul.f32 %v1163, 0.01
        %v1420 = vmul.f32 %v1164, 0.01
        %v1421 = vmul.f32 %v1165, 0.01
        %v1422 = vmul.f32 %v1166, 0.01
        %v1423 = vmul.f32 %v1167, 0.01
        %v1424 = vmul.f32 %v1168, 0.01
        %v1425 = vmul.f32 %v1169, 0.01
        %v1426 = vmul.f32 %v1170, 0.01
        %v1427 = vmul.f32 %v1171, 0.01
        %v1428 = vmul.f32 %v1172, 0.01
        %v1429 = vmul.f32 %v1173, 0.01
        %v1430 = vmul.f32 %v1174, 0.01
        %v1431 = vmul.f32 %v1175, 0.01
        %v1432 = vmul.f32 %v1176, 0.01
        %v1433 = vmul.f32 %v1177, 0.01
        %v1434 = vmul.f32 %v1178, 0.01
        %v1435 = vmul.f32 %v1179, 0.01
        %v1436 = vmul.f32 %v1180, 0.01
        %v1437 = vmul.f32 %v1181, 0.01
        %v1438 = vmul.f32 %v1182, 0.01
        %v1439 = vmul.f32 %v1183, 0.01
        %v1440 = vmul.f32 %v1184, 0.01
        %v1441 = vmul.f32 %v1185, 0.01
        %v1442 = vmul.f32 %v1186, 0.01
        %v1443 = vmul.f32 %v1187, 0.01
        %v1444 = vmul.f32 %v1188, 0.01
        %v1445 = vmul.f32 %v1189, 0.01
        %v1446 = vmul.f32 %v1190, 0.01
        %v1447 = vmul.f32 %v1191, 0.01
        %v1448 = vmul.f32 %v1192, 0.01
        %v1449 = vmul.f32 %v1193, 0.01
        %v1450 = vmul.f32 %v1194, 0.01
        %v1451 = vmul.f32 %v1195, 0.01
        %v1452 = vmul.f32 %v1196, 0.01
        %v1453 = vmul.f32 %v1197, 0.01
        %v1454 = vmul.f32 %v1198, 0.01
        %v1455 = vmul.f32 %v1199, 0.01
        %v1456 = vmul.f32 %v1200, 0.01
        %v1457 = vmul.f32 %v1201, 0.01
        %v1458 = vmul.f32 %v1202, 0.01
        %v1459 = vmul.f32 %v1203, 0.01
        %v1460 = vmul.f32 %v1204, 0.01
        %v1461 = vmul.f32 %v1205, 0.01
        %v1462 = vmul.f32 %v1206, 0.01
        %v1463 = vmul.f32 %v1207, 0.01
        %v1464 = vmul.f32 %v1208, 0.01
        %v1465 = vmul.f32 %v1209, 0.01
        %v1466 = vmul.f32 %v1210, 0.01
        %v1467 = vmul.f32 %v1211, 0.01
        %v1468 = vmul.f32 %v1212, 0.01
        %v1469 = vmul.f32 %v1213, 0.01
        %v1470 = vmul.f32 %v1214, 0.01
        %v1471 = vmul.f32 %v1215, 0.01
        %v1472 = vmul.f32 %v1216, 0.01
        %v1473 = vmul.f32 %v1217, 0.01
        %v1474 = vmul.f32 %v1218, 0.01
        %v1475 = vmul.f32 %v1219, 0.01
        %v1476 = vmul.f32 %v1220, 0.01
        %v1477 = vmul.f32 %v1221, 0.01
        %v1478 = vmul.f32 %v1222, 0.01
        %v1479 = vmul.f32 %v1223, 0.01
        %v1480 = vmul.f32 %v1224, 0.01
        %v1481 = vmul.f32 %v1225, 0.01
        %v1482 = vmul.f32 %v1226, 0.01
        %v1483 = vmul.f32 %v1227, 0.01
        %v1484 = vmul.f32 %v1228, 0.01
        %v1485 = vmul.f32 %v1229, 0.01
        %v1486 = vmul.f32 %v1230, 0.01
        %v1487 = vmul.f32 %v1231, 0.01
        %v1488 = vmul.f32 %v1232, 0.01
        %v1489 = vmul.f32 %v1233, 0.01
        %v1490 = vmul.f32 %v1234, 0.01
        %v1491 = vmul.f32 %v1235, 0.01
        %v1492 = vmul.f32 %v1236, 0.01
        %v1493 = vmul.f32 %v1237, 0.01
        %v1494 = vmul.f32 %v1238, 0.01
        %v1495 = vmul.f32 %v1239, 0.01
        %v1496 = vmul.f32 %v1240, 0.01
        %v1497 = vmul.f32 %v1241, 0.01
        %v1498 = vmul.f32 %v1242, 0.01
        %v1499 = vmul.f32 %v1243, 0.01
        %v1500 = vmul.f32 %v1244, 0.01
        %v1501 = vmul.f32 %v1245, 0.01
        %v1502 = vmul.f32 %v1246, 0.01
        %v1503 = vmul.f32 %v1247, 0.01
        %v1504 = vmul.f32 %v1376, %v1120
        %v1505 = vmul.f32 %v1377, %v1121
        %v1506 = vmul.f32 %v1378, %v1122
        %v1507 = vmul.f32 %v1379, %v1123
        %v1508 = vmul.f32 %v1380, %v1124
        %v1509 = vmul.f32 %v1381, %v1125
        %v1510 = vmul.f32 %v1382, %v1126
        %v1511 = vmul.f32 %v1383, %v1127
        %v1512 = vmul.f32 %v1384, %v1128
        %v1513 = vmul.f32 %v1385, %v1129
        %v1514 = vmul.f32 %v1386, %v1130
        %v1515 = vmul.f32 %v1387, %v1131
        %v1516 = vmul.f32 %v1388, %v1132
        %v1517 = vmul.f32 %v1389, %v1133
        %v1518 = vmul.f32 %v1390, %v1134
        %v1519 = vmul.f32 %v1391, %v1135
        %v1520 = vmul.f32 %v1392, %v1136
        %v1521 = vmul.f32 %v1393, %v1137
        %v1522 = vmul.f32 %v1394, %v1138
        %v1523 = vmul.f32 %v1395, %v1139
        %v1524 = vmul.f32 %v1396, %v1140
        %v1525 = vmul.f32 %v1397, %v1141
        %v1526 = vmul.f32 %v1398, %v1142
        %v1527 = vmul.f32 %v1399, %v1143
        %v1528 = vmul.f32 %v1400, %v1144
        %v1529 = vmul.f32 %v1401, %v1145
        %v1530 = vmul.f32 %v1402, %v1146
        %v1531 = vmul.f32 %v1403, %v1147
        %v1532 = vmul.f32 %v1404, %v1148
        %v1533 = vmul.f32 %v1405, %v1149
        %v1534 = vmul.f32 %v1406, %v1150
        %v1535 = vmul.f32 %v1407, %v1151
        %v1536 = vmul.f32 %v1408, %v1152
        %v1537 = vmul.f32 %v1409, %v1153
        %v1538 = vmul.f32 %v1410, %v1154
        %v1539 = vmul.f32 %v1411, %v1155
        %v1540 = vmul.f32 %v1412, %v1156
        %v1541 = vmul.f32 %v1413, %v1157
        %v1542 = vmul.f32 %v1414, %v1158
        %v1543 = vmul.f32 %v1415, %v1159
        %v1544 = vmul.f32 %v1416, %v1160
        %v1545 = vmul.f32 %v1417, %v1161
        %v1546 = vmul.f32 %v1418, %v1162
        %v1547 = vmul.f32 %v1419, %v1163
        %v1548 = vmul.f32 %v1420, %v1164
        %v1549 = vmul.f32 %v1421, %v1165
        %v1550 = vmul.f32 %v1422, %v1166
        %v1551 = vmul.f32 %v1423, %v1167
        %v1552 = vmul.f32 %v1424, %v1168
        %v1553 = vmul.f32 %v1425, %v1169
        %v1554 = vmul.f32 %v1426, %v1170
        %v1555 = vmul.f32 %v1427, %v1171
        %v1556 = vmul.f32 %v1428, %v1172
        %v1557 = vmul.f32 %v1429, %v1173
        %v1558 = vmul.f32 %v1430, %v1174
        %v1559 = vmul.f32 %v1431, %v1175
        %v1560 = vmul.f32 %v1432, %v1176
        %v1561 = vmul.f32 %v1433, %v1177
        %v1562 = vmul.f32 %v1434, %v1178
        %v1563 = vmul.f32 %v1435, %v1179
        %v1564 = vmul.f32 %v1436, %v1180
        %v1565 = vmul.f32 %v1437, %v1181
        %v1566 = vmul.f32 %v1438, %v1182
        %v1567 = vmul.f32 %v1439, %v1183
        %v1568 = vmul.f32 %v1440, %v1184
        %v1569 = vmul.f32 %v1441, %v1185
        %v1570 = vmul.f32 %v1442, %v1186
        %v1571 = vmul.f32 %v1443, %v1187
        %v1572 = vmul.f32 %v1444, %v1188
        %v1573 = vmul.f32 %v1445, %v1189
        %v1574 = vmul.f32 %v1446, %v1190
        %v1575 = vmul.f32 %v1447, %v1191
        %v1576 = vmul.f32 %v1448, %v1192
        %v1577 = vmul.f32 %v1449, %v1193
        %v1578 = vmul.f32 %v1450, %v1194
        %v1579 = vmul.f32 %v1451, %v1195
        %v1580 = vmul.f32 %v1452, %v1196
        %v1581 = vmul.f32 %v1453, %v1197
        %v1582 = vmul.f32 %v1454, %v1198
        %v1583 = vmul.f32 %v1455, %v1199
        %v1584 = vmul.f32 %v1456, %v1200
        %v1585 = vmul.f32 %v1457, %v1201
        %v1586 = vmul.f32 %v1458, %v1202
        %v1587 = vmul.f32 %v1459, %v1203
        %v1588 = vmul.f32 %v1460, %v1204
        %v1589 = vmul.f32 %v1461, %v1205
        %v1590 = vmul.f32 %v1462, %v1206
        %v1591 = vmul.f32 %v1463, %v1207
        %v1592 = vmul.f32 %v1464, %v1208
        %v1593 = vmul.f32 %v1465, %v1209
        %v1594 = vmul.f32 %v1466, %v1210
        %v1595 = vmul.f32 %v1467, %v1211
        %v1596 = vmul.f32 %v1468, %v1212
        %v1597 = vmul.f32 %v1469, %v1213
        %v1598 = vmul.f32 %v1470, %v1214
        %v1599 = vmul.f32 %v1471, %v1215
        %v1600 = vmul.f32 %v1472, %v1216
        %v1601 = vmul.f32 %v1473, %v1217
        %v1602 = vmul.f32 %v1474, %v1218
        %v1603 = vmul.f32 %v1475, %v1219
        %v1604 = vmul.f32 %v1476, %v1220
        %v1605 = vmul.f32 %v1477, %v1221
        %v1606 = vmul.f32 %v1478, %v1222
        %v1607 = vmul.f32 %v1479, %v1223
        %v1608 = vmul.f32 %v1480, %v1224
        %v1609 = vmul.f32 %v1481, %v1225
        %v1610 = vmul.f32 %v1482, %v1226
        %v1611 = vmul.f32 %v1483, %v1227
        %v1612 = vmul.f32 %v1484, %v1228
        %v1613 = vmul.f32 %v1485, %v1229
        %v1614 = vmul.f32 %v1486, %v1230
        %v1615 = vmul.f32 %v1487, %v1231
        %v1616 = vmul.f32 %v1488, %v1232
        %v1617 = vmul.f32 %v1489, %v1233
        %v1618 = vmul.f32 %v1490, %v1234
        %v1619 = vmul.f32 %v1491, %v1235
        %v1620 = vmul.f32 %v1492, %v1236
        %v1621 = vmul.f32 %v1493, %v1237
        %v1622 = vmul.f32 %v1494, %v1238
        %v1623 = vmul.f32 %v1495, %v1239
        %v1624 = vmul.f32 %v1496, %v1240
        %v1625 = vmul.f32 %v1497, %v1241
        %v1626 = vmul.f32 %v1498, %v1242
        %v1627 = vmul.f32 %v1499, %v1243
        %v1628 = vmul.f32 %v1500, %v1244
        %v1629 = vmul.f32 %v1501, %v1245
        %v1630 = vmul.f32 %v1502, %v1246
        %v1631 = vmul.f32 %v1503, %v1247
        %v1632 = vadd.f32 %v1248, %v1504
        %v1633 = vadd.f32 %v1249, %v1505
        %v1634 = vadd.f32 %v1250, %v1506
        %v1635 = vadd.f32 %v1251, %v1507
        %v1636 = vadd.f32 %v1252, %v1508
        %v1637 = vadd.f32 %v1253, %v1509
        %v1638 = vadd.f32 %v1254, %v1510
        %v1639 = vadd.f32 %v1255, %v1511
        %v1640 = vadd.f32 %v1256, %v1512
        %v1641 = vadd.f32 %v1257, %v1513
        %v1642 = vadd.f32 %v1258, %v1514
        %v1643 = vadd.f32 %v1259, %v1515
        %v1644 = vadd.f32 %v1260, %v1516
        %v1645 = vadd.f32 %v1261, %v1517
        %v1646 = vadd.f32 %v1262, %v1518
        %v1647 = vadd.f32 %v1263, %v1519
        %v1648 = vadd.f32 %v1264, %v1520
        %v1649 = vadd.f32 %v1265, %v1521
        %v1650 = vadd.f32 %v1266, %v1522
        %v1651 = vadd.f32 %v1267, %v1523
        %v1652 = vadd.f32 %v1268, %v1524
        %v1653 = vadd.f32 %v1269, %v1525
        %v1654 = vadd.f32 %v1270, %v1526
        %v1655 = vadd.f32 %v1271, %v1527
        %v1656 = vadd.f32 %v1272, %v1528
        %v1657 = vadd.f32 %v1273, %v1529
        %v1658 = vadd.f32 %v1274, %v1530
        %v1659 = vadd.f32 %v1275, %v1531
        %v1660 = vadd.f32 %v1276, %v1532
        %v1661 = vadd.f32 %v1277, %v1533
        %v1662 = vadd.f32 %v1278, %v1534
        %v1663 = vadd.f32 %v1279, %v1535
        %v1664 = vadd.f32 %v1280, %v1536
        %v1665 = vadd.f32 %v1281, %v1537
        %v1666 = vadd.f32 %v1282, %v1538
        %v1667 = vadd.f32 %v1283, %v1539
        %v1668 = vadd.f32 %v1284, %v1540
        %v1669 = vadd.f32 %v1285, %v1541
        %v1670 = vadd.f32 %v1286, %v1542
        %v1671 = vadd.f32 %v1287, %v1543
        %v1672 = vadd.f32 %v1288, %v1544
        %v1673 = vadd.f32 %v1289, %v1545
        %v1674 = vadd.f32 %v1290, %v1546
        %v1675 = vadd.f32 %v1291, %v1547
        %v1676 = vadd.f32 %v1292, %v1548
        %v1677 = vadd.f32 %v1293, %v1549
        %v1678 = vadd.f32 %v1294, %v1550
        %v1679 = vadd.f32 %v1295, %v1551
        %v1680 = vadd.f32 %v1296, %v1552
        %v1681 = vadd.f32 %v1297, %v1553
        %v1682 = vadd.f32 %v1298, %v1554
        %v1683 = vadd.f32 %v1299, %v1555
        %v1684 = vadd.f32 %v1300, %v1556
        %v1685 = vadd.f32 %v1301, %v1557
        %v1686 = vadd.f32 %v1302, %v1558
        %v1687 = vadd.f32 %v1303, %v1559
        %v1688 = vadd.f32 %v1304, %v1560
        %v1689 = vadd.f32 %v1305, %v1561
        %v1690 = vadd.f32 %v1306, %v1562
        %v1691 = vadd.f32 %v1307, %v1563
        %v1692 = vadd.f32 %v1308, %v1564
        %v1693 = vadd.f32 %v1309, %v1565
        %v1694 = vadd.f32 %v1310, %v1566
        %v1695 = vadd.f32 %v1311, %v1567
        %v1696 = vadd.f32 %v1312, %v1568
        %v1697 = vadd.f32 %v1313, %v1569
        %v1698 = vadd.f32 %v1314, %v1570
        %v1699 = vadd.f32 %v1315, %v1571
        %v1700 = vadd.f32 %v1316, %v1572
        %v1701 = vadd.f32 %v1317, %v1573
        %v1702 = vadd.f32 %v1318, %v1574
        %v1703 = vadd.f32 %v1319, %v1575
        %v1704 = vadd.f32 %v1320, %v1576
        %v1705 = vadd.f32 %v1321, %v1577
        %v1706 = vadd.f32 %v1322, %v1578
        %v1707 = vadd.f32 %v1323, %v1579
        %v1708 = vadd.f32 %v1324, %v1580
        %v1709 = vadd.f32 %v1325, %v1581
        %v1710 = vadd.f32 %v1326, %v1582
        %v1711 = vadd.f32 %v1327, %v1583
        %v1712 = vadd.f32 %v1328, %v1584
        %v1713 = vadd.f32 %v1329, %v1585
        %v1714 = vadd.f32 %v1330, %v1586
        %v1715 = vadd.f32 %v1331, %v1587
        %v1716 = vadd.f32 %v1332, %v1588
        %v1717 = vadd.f32 %v1333, %v1589
        %v1718 = vadd.f32 %v1334, %v1590
        %v1719 = vadd.f32 %v1335, %v1591
        %v1720 = vadd.f32 %v1336, %v1592
        %v1721 = vadd.f32 %v1337, %v1593
        %v1722 = vadd.f32 %v1338, %v1594
        %v1723 = vadd.f32 %v1339, %v1595
        %v1724 = vadd.f32 %v1340, %v1596
        %v1725 = vadd.f32 %v1341, %v1597
        %v1726 = vadd.f32 %v1342, %v1598
        %v1727 = vadd.f32 %v1343, %v1599
        %v1728 = vadd.f32 %v1344, %v1600
        %v1729 = vadd.f32 %v1345, %v1601
        %v1730 = vadd.f32 %v1346, %v1602
        %v1731 = vadd.f32 %v1347, %v1603
        %v1732 = vadd.f32 %v1348, %v1604
        %v1733 = vadd.f32 %v1349, %v1605
        %v1734 = vadd.f32 %v1350, %v1606
        %v1735 = vadd.f32 %v1351, %v1607
        %v1736 = vadd.f32 %v1352, %v1608
        %v1737 = vadd.f32 %v1353, %v1609
        %v1738 = vadd.f32 %v1354, %v1610
        %v1739 = vadd.f32 %v1355, %v1611
        %v1740 = vadd.f32 %v1356, %v1612
        %v1741 = vadd.f32 %v1357, %v1613
        %v1742 = vadd.f32 %v1358, %v1614
        %v1743 = vadd.f32 %v1359, %v1615
        %v1744 = vadd.f32 %v1360, %v1616
        %v1745 = vadd.f32 %v1361, %v1617
        %v1746 = vadd.f32 %v1362, %v1618
        %v1747 = vadd.f32 %v1363, %v1619
        %v1748 = vadd.f32 %v1364, %v1620
        %v1749 = vadd.f32 %v1365, %v1621
        %v1750 = vadd.f32 %v1366, %v1622
        %v1751 = vadd.f32 %v1367, %v1623
        %v1752 = vadd.f32 %v1368, %v1624
        %v1753 = vadd.f32 %v1369, %v1625
        %v1754 = vadd.f32 %v1370, %v1626
        %v1755 = vadd.f32 %v1371, %v1627
        %v1756 = vadd.f32 %v1372, %v1628
        %v1757 = vadd.f32 %v1373, %v1629
        %v1758 = vadd.f32 %v1374, %v1630
        %v1759 = vadd.f32 %v1375, %v1631
        %vm1760 = vcmp.lt.f32.partialorder %v1632, 0.01
        %vm1761 = vcmp.lt.f32.partialorder %v1633, 0.01
        %vm1762 = vcmp.lt.f32.partialorder %v1634, 0.01
        %vm1763 = vcmp.lt.f32.partialorder %v1635, 0.01
        %vm1764 = vcmp.lt.f32.partialorder %v1636, 0.01
        %vm1765 = vcmp.lt.f32.partialorder %v1637, 0.01
        %vm1766 = vcmp.lt.f32.partialorder %v1638, 0.01
        %vm1767 = vcmp.lt.f32.partialorder %v1639, 0.01
        %vm1768 = vcmp.lt.f32.partialorder %v1640, 0.01
        %vm1769 = vcmp.lt.f32.partialorder %v1641, 0.01
        %vm1770 = vcmp.lt.f32.partialorder %v1642, 0.01
        %vm1771 = vcmp.lt.f32.partialorder %v1643, 0.01
        %vm1772 = vcmp.lt.f32.partialorder %v1644, 0.01
        %vm1773 = vcmp.lt.f32.partialorder %v1645, 0.01
        %vm1774 = vcmp.lt.f32.partialorder %v1646, 0.01
        %vm1775 = vcmp.lt.f32.partialorder %v1647, 0.01
        %vm1776 = vcmp.lt.f32.partialorder %v1648, 0.01
        %vm1777 = vcmp.lt.f32.partialorder %v1649, 0.01
        %vm1778 = vcmp.lt.f32.partialorder %v1650, 0.01
        %vm1779 = vcmp.lt.f32.partialorder %v1651, 0.01
        %vm1780 = vcmp.lt.f32.partialorder %v1652, 0.01
        %vm1781 = vcmp.lt.f32.partialorder %v1653, 0.01
        %vm1782 = vcmp.lt.f32.partialorder %v1654, 0.01
        %vm1783 = vcmp.lt.f32.partialorder %v1655, 0.01
        %vm1784 = vcmp.lt.f32.partialorder %v1656, 0.01
        %vm1785 = vcmp.lt.f32.partialorder %v1657, 0.01
        %vm1786 = vcmp.lt.f32.partialorder %v1658, 0.01
        %vm1787 = vcmp.lt.f32.partialorder %v1659, 0.01
        %vm1788 = vcmp.lt.f32.partialorder %v1660, 0.01
        %vm1789 = vcmp.lt.f32.partialorder %v1661, 0.01
        %vm1790 = vcmp.lt.f32.partialorder %v1662, 0.01
        %vm1791 = vcmp.lt.f32.partialorder %v1663, 0.01
        %vm1792 = vcmp.lt.f32.partialorder %v1664, 0.01
        %vm1793 = vcmp.lt.f32.partialorder %v1665, 0.01
        %vm1794 = vcmp.lt.f32.partialorder %v1666, 0.01
        %vm1795 = vcmp.lt.f32.partialorder %v1667, 0.01
        %vm1796 = vcmp.lt.f32.partialorder %v1668, 0.01
        %vm1797 = vcmp.lt.f32.partialorder %v1669, 0.01
        %vm1798 = vcmp.lt.f32.partialorder %v1670, 0.01
        %vm1799 = vcmp.lt.f32.partialorder %v1671, 0.01
        %vm1800 = vcmp.lt.f32.partialorder %v1672, 0.01
        %vm1801 = vcmp.lt.f32.partialorder %v1673, 0.01
        %vm1802 = vcmp.lt.f32.partialorder %v1674, 0.01
        %vm1803 = vcmp.lt.f32.partialorder %v1675, 0.01
        %vm1804 = vcmp.lt.f32.partialorder %v1676, 0.01
        %vm1805 = vcmp.lt.f32.partialorder %v1677, 0.01
        %vm1806 = vcmp.lt.f32.partialorder %v1678, 0.01
        %vm1807 = vcmp.lt.f32.partialorder %v1679, 0.01
        %vm1808 = vcmp.lt.f32.partialorder %v1680, 0.01
        %vm1809 = vcmp.lt.f32.partialorder %v1681, 0.01
        %vm1810 = vcmp.lt.f32.partialorder %v1682, 0.01
        %vm1811 = vcmp.lt.f32.partialorder %v1683, 0.01
        %vm1812 = vcmp.lt.f32.partialorder %v1684, 0.01
        %vm1813 = vcmp.lt.f32.partialorder %v1685, 0.01
        %vm1814 = vcmp.lt.f32.partialorder %v1686, 0.01
        %vm1815 = vcmp.lt.f32.partialorder %v1687, 0.01
        %vm1816 = vcmp.lt.f32.partialorder %v1688, 0.01
        %vm1817 = vcmp.lt.f32.partialorder %v1689, 0.01
        %vm1818 = vcmp.lt.f32.partialorder %v1690, 0.01
        %vm1819 = vcmp.lt.f32.partialorder %v1691, 0.01
        %vm1820 = vcmp.lt.f32.partialorder %v1692, 0.01
        %vm1821 = vcmp.lt.f32.partialorder %v1693, 0.01
        %vm1822 = vcmp.lt.f32.partialorder %v1694, 0.01
        %vm1823 = vcmp.lt.f32.partialorder %v1695, 0.01
        %vm1824 = vcmp.lt.f32.partialorder %v1696, 0.01
        %vm1825 = vcmp.lt.f32.partialorder %v1697, 0.01
        %vm1826 = vcmp.lt.f32.partialorder %v1698, 0.01
        %vm1827 = vcmp.lt.f32.partialorder %v1699, 0.01
        %vm1828 = vcmp.lt.f32.partialorder %v1700, 0.01
        %vm1829 = vcmp.lt.f32.partialorder %v1701, 0.01
        %vm1830 = vcmp.lt.f32.partialorder %v1702, 0.01
        %vm1831 = vcmp.lt.f32.partialorder %v1703, 0.01
        %vm1832 = vcmp.lt.f32.partialorder %v1704, 0.01
        %vm1833 = vcmp.lt.f32.partialorder %v1705, 0.01
        %vm1834 = vcmp.lt.f32.partialorder %v1706, 0.01
        %vm1835 = vcmp.lt.f32.partialorder %v1707, 0.01
        %vm1836 = vcmp.lt.f32.partialorder %v1708, 0.01
        %vm1837 = vcmp.lt.f32.partialorder %v1709, 0.01
        %vm1838 = vcmp.lt.f32.partialorder %v1710, 0.01
        %vm1839 = vcmp.lt.f32.partialorder %v1711, 0.01
        %vm1840 = vcmp.lt.f32.partialorder %v1712, 0.01
        %vm1841 = vcmp.lt.f32.partialorder %v1713, 0.01
        %vm1842 = vcmp.lt.f32.partialorder %v1714, 0.01
        %vm1843 = vcmp.lt.f32.partialorder %v1715, 0.01
        %vm1844 = vcmp.lt.f32.partialorder %v1716, 0.01
        %vm1845 = vcmp.lt.f32.partialorder %v1717, 0.01
        %vm1846 = vcmp.lt.f32.partialorder %v1718, 0.01
        %vm1847 = vcmp.lt.f32.partialorder %v1719, 0.01
        %vm1848 = vcmp.lt.f32.partialorder %v1720, 0.01
        %vm1849 = vcmp.lt.f32.partialorder %v1721, 0.01
        %vm1850 = vcmp.lt.f32.partialorder %v1722, 0.01
        %vm1851 = vcmp.lt.f32.partialorder %v1723, 0.01
        %vm1852 = vcmp.lt.f32.partialorder %v1724, 0.01
        %vm1853 = vcmp.lt.f32.partialorder %v1725, 0.01
        %vm1854 = vcmp.lt.f32.partialorder %v1726, 0.01
        %vm1855 = vcmp.lt.f32.partialorder %v1727, 0.01
        %vm1856 = vcmp.lt.f32.partialorder %v1728, 0.01
        %vm1857 = vcmp.lt.f32.partialorder %v1729, 0.01
        %vm1858 = vcmp.lt.f32.partialorder %v1730, 0.01
        %vm1859 = vcmp.lt.f32.partialorder %v1731, 0.01
        %vm1860 = vcmp.lt.f32.partialorder %v1732, 0.01
        %vm1861 = vcmp.lt.f32.partialorder %v1733, 0.01
        %vm1862 = vcmp.lt.f32.partialorder %v1734, 0.01
        %vm1863 = vcmp.lt.f32.partialorder %v1735, 0.01
        %vm1864 = vcmp.lt.f32.partialorder %v1736, 0.01
        %vm1865 = vcmp.lt.f32.partialorder %v1737, 0.01
        %vm1866 = vcmp.lt.f32.partialorder %v1738, 0.01
        %vm1867 = vcmp.lt.f32.partialorder %v1739, 0.01
        %vm1868 = vcmp.lt.f32.partialorder %v1740, 0.01
        %vm1869 = vcmp.lt.f32.partialorder %v1741, 0.01
        %vm1870 = vcmp.lt.f32.partialorder %v1742, 0.01
        %vm1871 = vcmp.lt.f32.partialorder %v1743, 0.01
        %vm1872 = vcmp.lt.f32.partialorder %v1744, 0.01
        %vm1873 = vcmp.lt.f32.partialorder %v1745, 0.01
        %vm1874 = vcmp.lt.f32.partialorder %v1746, 0.01
        %vm1875 = vcmp.lt.f32.partialorder %v1747, 0.01
        %vm1876 = vcmp.lt.f32.partialorder %v1748, 0.01
        %vm1877 = vcmp.lt.f32.partialorder %v1749, 0.01
        %vm1878 = vcmp.lt.f32.partialorder %v1750, 0.01
        %vm1879 = vcmp.lt.f32.partialorder %v1751, 0.01
        %vm1880 = vcmp.lt.f32.partialorder %v1752, 0.01
        %vm1881 = vcmp.lt.f32.partialorder %v1753, 0.01
        %vm1882 = vcmp.lt.f32.partialorder %v1754, 0.01
        %vm1883 = vcmp.lt.f32.partialorder %v1755, 0.01
        %vm1884 = vcmp.lt.f32.partialorder %v1756, 0.01
        %vm1885 = vcmp.lt.f32.partialorder %v1757, 0.01
        %vm1886 = vcmp.lt.f32.partialorder %v1758, 0.01
        %vm1887 = vcmp.lt.f32.partialorder %v1759, 0.01
        %v1888 = vmul.f32 %v736, 10.0
        %v1889 = vmul.f32 %v737, 10.0
        %v1890 = vmul.f32 %v738, 10.0
        %v1891 = vmul.f32 %v739, 10.0
        %v1892 = vmul.f32 %v740, 10.0
        %v1893 = vmul.f32 %v741, 10.0
        %v1894 = vmul.f32 %v742, 10.0
        %v1895 = vmul.f32 %v743, 10.0
        %v1896 = vmul.f32 %v744, 10.0
        %v1897 = vmul.f32 %v745, 10.0
        %v1898 = vmul.f32 %v746, 10.0
        %v1899 = vmul.f32 %v747, 10.0
        %v1900 = vmul.f32 %v748, 10.0
        %v1901 = vmul.f32 %v749, 10.0
        %v1902 = vmul.f32 %v750, 10.0
        %v1903 = vmul.f32 %v751, 10.0
        %v1904 = vmul.f32 %v752, 10.0
        %v1905 = vmul.f32 %v753, 10.0
        %v1906 = vmul.f32 %v754, 10.0
        %v1907 = vmul.f32 %v755, 10.0
        %v1908 = vmul.f32 %v756, 10.0
        %v1909 = vmul.f32 %v757, 10.0
        %v1910 = vmul.f32 %v758, 10.0
        %v1911 = vmul.f32 %v759, 10.0
        %v1912 = vmul.f32 %v760, 10.0
        %v1913 = vmul.f32 %v761, 10.0
        %v1914 = vmul.f32 %v762, 10.0
        %v1915 = vmul.f32 %v763, 10.0
        %v1916 = vmul.f32 %v764, 10.0
        %v1917 = vmul.f32 %v765, 10.0
        %v1918 = vmul.f32 %v766, 10.0
        %v1919 = vmul.f32 %v767, 10.0
        %v1920 = vmul.f32 %v768, 10.0
        %v1921 = vmul.f32 %v769, 10.0
        %v1922 = vmul.f32 %v770, 10.0
        %v1923 = vmul.f32 %v771, 10.0
        %v1924 = vmul.f32 %v772, 10.0
        %v1925 = vmul.f32 %v773, 10.0
        %v1926 = vmul.f32 %v774, 10.0
        %v1927 = vmul.f32 %v775, 10.0
        %v1928 = vmul.f32 %v776, 10.0
        %v1929 = vmul.f32 %v777, 10.0
        %v1930 = vmul.f32 %v778, 10.0
        %v1931 = vmul.f32 %v779, 10.0
        %v1932 = vmul.f32 %v780, 10.0
        %v1933 = vmul.f32 %v781, 10.0
        %v1934 = vmul.f32 %v782, 10.0
        %v1935 = vmul.f32 %v783, 10.0
        %v1936 = vmul.f32 %v784, 10.0
        %v1937 = vmul.f32 %v785, 10.0
        %v1938 = vmul.f32 %v786, 10.0
        %v1939 = vmul.f32 %v787, 10.0
        %v1940 = vmul.f32 %v788, 10.0
        %v1941 = vmul.f32 %v789, 10.0
        %v1942 = vmul.f32 %v790, 10.0
        %v1943 = vmul.f32 %v791, 10.0
        %v1944 = vmul.f32 %v792, 10.0
        %v1945 = vmul.f32 %v793, 10.0
        %v1946 = vmul.f32 %v794, 10.0
        %v1947 = vmul.f32 %v795, 10.0
        %v1948 = vmul.f32 %v796, 10.0
        %v1949 = vmul.f32 %v797, 10.0
        %v1950 = vmul.f32 %v798, 10.0
        %v1951 = vmul.f32 %v799, 10.0
        %v1952 = vmul.f32 %v800, 10.0
        %v1953 = vmul.f32 %v801, 10.0
        %v1954 = vmul.f32 %v802, 10.0
        %v1955 = vmul.f32 %v803, 10.0
        %v1956 = vmul.f32 %v804, 10.0
        %v1957 = vmul.f32 %v805, 10.0
        %v1958 = vmul.f32 %v806, 10.0
        %v1959 = vmul.f32 %v807, 10.0
        %v1960 = vmul.f32 %v808, 10.0
        %v1961 = vmul.f32 %v809, 10.0
        %v1962 = vmul.f32 %v810, 10.0
        %v1963 = vmul.f32 %v811, 10.0
        %v1964 = vmul.f32 %v812, 10.0
        %v1965 = vmul.f32 %v813, 10.0
        %v1966 = vmul.f32 %v814, 10.0
        %v1967 = vmul.f32 %v815, 10.0
        %v1968 = vmul.f32 %v816, 10.0
        %v1969 = vmul.f32 %v817, 10.0
        %v1970 = vmul.f32 %v818, 10.0
        %v1971 = vmul.f32 %v819, 10.0
        %v1972 = vmul.f32 %v820, 10.0
        %v1973 = vmul.f32 %v821, 10.0
        %v1974 = vmul.f32 %v822, 10.0
        %v1975 = vmul.f32 %v823, 10.0
        %v1976 = vmul.f32 %v824, 10.0
        %v1977 = vmul.f32 %v825, 10.0
        %v1978 = vmul.f32 %v826, 10.0
        %v1979 = vmul.f32 %v827, 10.0
        %v1980 = vmul.f32 %v828, 10.0
        %v1981 = vmul.f32 %v829, 10.0
        %v1982 = vmul.f32 %v830, 10.0
        %v1983 = vmul.f32 %v831, 10.0
        %v1984 = vmul.f32 %v832, 10.0
        %v1985 = vmul.f32 %v833, 10.0
        %v1986 = vmul.f32 %v834, 10.0
        %v1987 = vmul.f32 %v835, 10.0
        %v1988 = vmul.f32 %v836, 10.0
        %v1989 = vmul.f32 %v837, 10.0
        %v1990 = vmul.f32 %v838, 10.0
        %v1991 = vmul.f32 %v839, 10.0
        %v1992 = vmul.f32 %v840, 10.0
        %v1993 = vmul.f32 %v841, 10.0
        %v1994 = vmul.f32 %v842, 10.0
        %v1995 = vmul.f32 %v843, 10.0
        %v1996 = vmul.f32 %v844, 10.0
        %v1997 = vmul.f32 %v845, 10.0
        %v1998 = vmul.f32 %v846, 10.0
        %v1999 = vmul.f32 %v847, 10.0
        %v2000 = vmul.f32 %v848, 10.0
        %v2001 = vmul.f32 %v849, 10.0
        %v2002 = vmul.f32 %v850, 10.0
        %v2003 = vmul.f32 %v851, 10.0
        %v2004 = vmul.f32 %v852, 10.0
        %v2005 = vmul.f32 %v853, 10.0
        %v2006 = vmul.f32 %v854, 10.0
        %v2007 = vmul.f32 %v855, 10.0
        %v2008 = vmul.f32 %v856, 10.0
        %v2009 = vmul.f32 %v857, 10.0
        %v2010 = vmul.f32 %v858, 10.0
        %v2011 = vmul.f32 %v859, 10.0
        %v2012 = vmul.f32 %v860, 10.0
        %v2013 = vmul.f32 %v861, 10.0
        %v2014 = vmul.f32 %v862, 10.0
        %v2015 = vmul.f32 %v863, 10.0
        %v2016 = vsel %vm1760, %v1888, %v736
        %v2017 = vsel %vm1761, %v1889, %v737
        %v2018 = vsel %vm1762, %v1890, %v738
        %v2019 = vsel %vm1763, %v1891, %v739
        %v2020 = vsel %vm1764, %v1892, %v740
        %v2021 = vsel %vm1765, %v1893, %v741
        %v2022 = vsel %vm1766, %v1894, %v742
        %v2023 = vsel %vm1767, %v1895, %v743
        %v2024 = vsel %vm1768, %v1896, %v744
        %v2025 = vsel %vm1769, %v1897, %v745
        %v2026 = vsel %vm1770, %v1898, %v746
        %v2027 = vsel %vm1771, %v1899, %v747
        %v2028 = vsel %vm1772, %v1900, %v748
        %v2029 = vsel %vm1773, %v1901, %v749
        %v2030 = vsel %vm1774, %v1902, %v750
        %v2031 = vsel %vm1775, %v1903, %v751
        %v2032 = vsel %vm1776, %v1904, %v752
        %v2033 = vsel %vm1777, %v1905, %v753
        %v2034 = vsel %vm1778, %v1906, %v754
        %v2035 = vsel %vm1779, %v1907, %v755
        %v2036 = vsel %vm1780, %v1908, %v756
        %v2037 = vsel %vm1781, %v1909, %v757
        %v2038 = vsel %vm1782, %v1910, %v758
        %v2039 = vsel %vm1783, %v1911, %v759
        %v2040 = vsel %vm1784, %v1912, %v760
        %v2041 = vsel %vm1785, %v1913, %v761
        %v2042 = vsel %vm1786, %v1914, %v762
        %v2043 = vsel %vm1787, %v1915, %v763
        %v2044 = vsel %vm1788, %v1916, %v764
        %v2045 = vsel %vm1789, %v1917, %v765
        %v2046 = vsel %vm1790, %v1918, %v766
        %v2047 = vsel %vm1791, %v1919, %v767
        %v2048 = vsel %vm1792, %v1920, %v768
        %v2049 = vsel %vm1793, %v1921, %v769
        %v2050 = vsel %vm1794, %v1922, %v770
        %v2051 = vsel %vm1795, %v1923, %v771
        %v2052 = vsel %vm1796, %v1924, %v772
        %v2053 = vsel %vm1797, %v1925, %v773
        %v2054 = vsel %vm1798, %v1926, %v774
        %v2055 = vsel %vm1799, %v1927, %v775
        %v2056 = vsel %vm1800, %v1928, %v776
        %v2057 = vsel %vm1801, %v1929, %v777
        %v2058 = vsel %vm1802, %v1930, %v778
        %v2059 = vsel %vm1803, %v1931, %v779
        %v2060 = vsel %vm1804, %v1932, %v780
        %v2061 = vsel %vm1805, %v1933, %v781
        %v2062 = vsel %vm1806, %v1934, %v782
        %v2063 = vsel %vm1807, %v1935, %v783
        %v2064 = vsel %vm1808, %v1936, %v784
        %v2065 = vsel %vm1809, %v1937, %v785
        %v2066 = vsel %vm1810, %v1938, %v786
        %v2067 = vsel %vm1811, %v1939, %v787
        %v2068 = vsel %vm1812, %v1940, %v788
        %v2069 = vsel %vm1813, %v1941, %v789
        %v2070 = vsel %vm1814, %v1942, %v790
        %v2071 = vsel %vm1815, %v1943, %v791
        %v2072 = vsel %vm1816, %v1944, %v792
        %v2073 = vsel %vm1817, %v1945, %v793
        %v2074 = vsel %vm1818, %v1946, %v794
        %v2075 = vsel %vm1819, %v1947, %v795
        %v2076 = vsel %vm1820, %v1948, %v796
        %v2077 = vsel %vm1821, %v1949, %v797
        %v2078 = vsel %vm1822, %v1950, %v798
        %v2079 = vsel %vm1823, %v1951, %v799
        %v2080 = vsel %vm1824, %v1952, %v800
        %v2081 = vsel %vm1825, %v1953, %v801
        %v2082 = vsel %vm1826, %v1954, %v802
        %v2083 = vsel %vm1827, %v1955, %v803
        %v2084 = vsel %vm1828, %v1956, %v804
        %v2085 = vsel %vm1829, %v1957, %v805
        %v2086 = vsel %vm1830, %v1958, %v806
        %v2087 = vsel %vm1831, %v1959, %v807
        %v2088 = vsel %vm1832, %v1960, %v808
        %v2089 = vsel %vm1833, %v1961, %v809
        %v2090 = vsel %vm1834, %v1962, %v810
        %v2091 = vsel %vm1835, %v1963, %v811
        %v2092 = vsel %vm1836, %v1964, %v812
        %v2093 = vsel %vm1837, %v1965, %v813
        %v2094 = vsel %vm1838, %v1966, %v814
        %v2095 = vsel %vm1839, %v1967, %v815
        %v2096 = vsel %vm1840, %v1968, %v816
        %v2097 = vsel %vm1841, %v1969, %v817
        %v2098 = vsel %vm1842, %v1970, %v818
        %v2099 = vsel %vm1843, %v1971, %v819
        %v2100 = vsel %vm1844, %v1972, %v820
        %v2101 = vsel %vm1845, %v1973, %v821
        %v2102 = vsel %vm1846, %v1974, %v822
        %v2103 = vsel %vm1847, %v1975, %v823
        %v2104 = vsel %vm1848, %v1976, %v824
        %v2105 = vsel %vm1849, %v1977, %v825
        %v2106 = vsel %vm1850, %v1978, %v826
        %v2107 = vsel %vm1851, %v1979, %v827
        %v2108 = vsel %vm1852, %v1980, %v828
        %v2109 = vsel %vm1853, %v1981, %v829
        %v2110 = vsel %vm1854, %v1982, %v830
        %v2111 = vsel %vm1855, %v1983, %v831
        %v2112 = vsel %vm1856, %v1984, %v832
        %v2113 = vsel %vm1857, %v1985, %v833
        %v2114 = vsel %vm1858, %v1986, %v834
        %v2115 = vsel %vm1859, %v1987, %v835
        %v2116 = vsel %vm1860, %v1988, %v836
        %v2117 = vsel %vm1861, %v1989, %v837
        %v2118 = vsel %vm1862, %v1990, %v838
        %v2119 = vsel %vm1863, %v1991, %v839
        %v2120 = vsel %vm1864, %v1992, %v840
        %v2121 = vsel %vm1865, %v1993, %v841
        %v2122 = vsel %vm1866, %v1994, %v842
        %v2123 = vsel %vm1867, %v1995, %v843
        %v2124 = vsel %vm1868, %v1996, %v844
        %v2125 = vsel %vm1869, %v1997, %v845
        %v2126 = vsel %vm1870, %v1998, %v846
        %v2127 = vsel %vm1871, %v1999, %v847
        %v2128 = vsel %vm1872, %v2000, %v848
        %v2129 = vsel %vm1873, %v2001, %v849
        %v2130 = vsel %vm1874, %v2002, %v850
        %v2131 = vsel %vm1875, %v2003, %v851
        %v2132 = vsel %vm1876, %v2004, %v852
        %v2133 = vsel %vm1877, %v2005, %v853
        %v2134 = vsel %vm1878, %v2006, %v854
        %v2135 = vsel %vm1879, %v2007, %v855
        %v2136 = vsel %vm1880, %v2008, %v856
        %v2137 = vsel %vm1881, %v2009, %v857
        %v2138 = vsel %vm1882, %v2010, %v858
        %v2139 = vsel %vm1883, %v2011, %v859
        %v2140 = vsel %vm1884, %v2012, %v860
        %v2141 = vsel %vm1885, %v2013, %v861
        %v2142 = vsel %vm1886, %v2014, %v862
        %v2143 = vsel %vm1887, %v2015, %v863
        %2144 = vst [vmem:[%s394] sm:$0xff] %v1120
        %2145 = vst [vmem:[%s394 + $0x8] sm:$0xff] %v1121
        %2146 = vst [vmem:[%s394 + $0x10] sm:$0xff] %v1122
        %2147 = vst [vmem:[%s394 + $0x18] sm:$0xff] %v1123
        %2148 = vst [vmem:[%s394 + $0x20] sm:$0xff] %v1124
        %2149 = vst [vmem:[%s394 + $0x28] sm:$0xff] %v1125
        %2150 = vst [vmem:[%s394 + $0x30] sm:$0xff] %v1126
        %2151 = vst [vmem:[%s394 + $0x38] sm:$0xff] %v1127
        %2152 = vst [vmem:[%s394 + $0x40] sm:$0xff] %v1128
        %2153 = vst [vmem:[%s394 + $0x48] sm:$0xff] %v1129
        %2154 = vst [vmem:[%s394 + $0x50] sm:$0xff] %v1130
        %2155 = vst [vmem:[%s394 + $0x58] sm:$0xff] %v1131
        %2156 = vst [vmem:[%s394 + $0x60] sm:$0xff] %v1132
        %2157 = vst [vmem:[%s394 + $0x68] sm:$0xff] %v1133
        %2158 = vst [vmem:[%s394 + $0x70] sm:$0xff] %v1134
        %2159 = vst [vmem:[%s394 + $0x78] sm:$0xff] %v1135
        %2160 = vst [vmem:[%s394 + $0x80] sm:$0xff] %v1136
        %2161 = vst [vmem:[%s394 + $0x88] sm:$0xff] %v1137
        %2162 = vst [vmem:[%s394 + $0x90] sm:$0xff] %v1138
        %2163 = vst [vmem:[%s394 + $0x98] sm:$0xff] %v1139
        %2164 = vst [vmem:[%s394 + $0xa0] sm:$0xff] %v1140
        %2165 = vst [vmem:[%s394 + $0xa8] sm:$0xff] %v1141
        %2166 = vst [vmem:[%s394 + $0xb0] sm:$0xff] %v1142
        %2167 = vst [vmem:[%s394 + $0xb8] sm:$0xff] %v1143
        %2168 = vst [vmem:[%s394 + $0xc0] sm:$0xff] %v1144
        %2169 = vst [vmem:[%s394 + $0xc8] sm:$0xff] %v1145
        %2170 = vst [vmem:[%s394 + $0xd0] sm:$0xff] %v1146
        %2171 = vst [vmem:[%s394 + $0xd8] sm:$0xff] %v1147
        %2172 = vst [vmem:[%s394 + $0xe0] sm:$0xff] %v1148
        %2173 = vst [vmem:[%s394 + $0xe8] sm:$0xff] %v1149
        %2174 = vst [vmem:[%s394 + $0xf0] sm:$0xff] %v1150
        %2175 = vst [vmem:[%s394 + $0xf8] sm:$0xff] %v1151
        %2176 = vst [vmem:[%s394 + $0x100] sm:$0xff] %v1152
        %2177 = vst [vmem:[%s394 + $0x108] sm:$0xff] %v1153
        %2178 = vst [vmem:[%s394 + $0x110] sm:$0xff] %v1154
        %2179 = vst [vmem:[%s394 + $0x118] sm:$0xff] %v1155
        %2180 = vst [vmem:[%s394 + $0x120] sm:$0xff] %v1156
        %2181 = vst [vmem:[%s394 + $0x128] sm:$0xff] %v1157
        %2182 = vst [vmem:[%s394 + $0x130] sm:$0xff] %v1158
        %2183 = vst [vmem:[%s394 + $0x138] sm:$0xff] %v1159
        %2184 = vst [vmem:[%s394 + $0x140] sm:$0xff] %v1160
        %2185 = vst [vmem:[%s394 + $0x148] sm:$0xff] %v1161
        %2186 = vst [vmem:[%s394 + $0x150] sm:$0xff] %v1162
        %2187 = vst [vmem:[%s394 + $0x158] sm:$0xff] %v1163
        %2188 = vst [vmem:[%s394 + $0x160] sm:$0xff] %v1164
        %2189 = vst [vmem:[%s394 + $0x168] sm:$0xff] %v1165
        %2190 = vst [vmem:[%s394 + $0x170] sm:$0xff] %v1166
        %2191 = vst [vmem:[%s394 + $0x178] sm:$0xff] %v1167
        %2192 = vst [vmem:[%s394 + $0x180] sm:$0xff] %v1168
        %2193 = vst [vmem:[%s394 + $0x188] sm:$0xff] %v1169
        %2194 = vst [vmem:[%s394 + $0x190] sm:$0xff] %v1170
        %2195 = vst [vmem:[%s394 + $0x198] sm:$0xff] %v1171
        %2196 = vst [vmem:[%s394 + $0x1a0] sm:$0xff] %v1172
        %2197 = vst [vmem:[%s394 + $0x1a8] sm:$0xff] %v1173
        %2198 = vst [vmem:[%s394 + $0x1b0] sm:$0xff] %v1174
        %2199 = vst [vmem:[%s394 + $0x1b8] sm:$0xff] %v1175
        %2200 = vst [vmem:[%s394 + $0x1c0] sm:$0xff] %v1176
        %2201 = vst [vmem:[%s394 + $0x1c8] sm:$0xff] %v1177
        %2202 = vst [vmem:[%s394 + $0x1d0] sm:$0xff] %v1178
        %2203 = vst [vmem:[%s394 + $0x1d8] sm:$0xff] %v1179
        %2204 = vst [vmem:[%s394 + $0x1e0] sm:$0xff] %v1180
        %2205 = vst [vmem:[%s394 + $0x1e8] sm:$0xff] %v1181
        %2206 = vst [vmem:[%s394 + $0x1f0] sm:$0xff] %v1182
        %2207 = vst [vmem:[%s394 + $0x1f8] sm:$0xff] %v1183
        %2208 = vst [vmem:[%s394 + $0x200] sm:$0xff] %v1184
        %2209 = vst [vmem:[%s394 + $0x208] sm:$0xff] %v1185
        %2210 = vst [vmem:[%s394 + $0x210] sm:$0xff] %v1186
        %2211 = vst [vmem:[%s394 + $0x218] sm:$0xff] %v1187
        %2212 = vst [vmem:[%s394 + $0x220] sm:$0xff] %v1188
        %2213 = vst [vmem:[%s394 + $0x228] sm:$0xff] %v1189
        %2214 = vst [vmem:[%s394 + $0x230] sm:$0xff] %v1190
        %2215 = vst [vmem:[%s394 + $0x238] sm:$0xff] %v1191
        %2216 = vst [vmem:[%s394 + $0x240] sm:$0xff] %v1192
        %2217 = vst [vmem:[%s394 + $0x248] sm:$0xff] %v1193
        %2218 = vst [vmem:[%s394 + $0x250] sm:$0xff] %v1194
        %2219 = vst [vmem:[%s394 + $0x258] sm:$0xff] %v1195
        %2220 = vst [vmem:[%s394 + $0x260] sm:$0xff] %v1196
        %2221 = vst [vmem:[%s394 + $0x268] sm:$0xff] %v1197
        %2222 = vst [vmem:[%s394 + $0x270] sm:$0xff] %v1198
        %2223 = vst [vmem:[%s394 + $0x278] sm:$0xff] %v1199
        %2224 = vst [vmem:[%s394 + $0x280] sm:$0xff] %v1200
        %2225 = vst [vmem:[%s394 + $0x288] sm:$0xff] %v1201
        %2226 = vst [vmem:[%s394 + $0x290] sm:$0xff] %v1202
        %2227 = vst [vmem:[%s394 + $0x298] sm:$0xff] %v1203
        %2228 = vst [vmem:[%s394 + $0x2a0] sm:$0xff] %v1204
        %2229 = vst [vmem:[%s394 + $0x2a8] sm:$0xff] %v1205
        %2230 = vst [vmem:[%s394 + $0x2b0] sm:$0xff] %v1206
        %2231 = vst [vmem:[%s394 + $0x2b8] sm:$0xff] %v1207
        %2232 = vst [vmem:[%s394 + $0x2c0] sm:$0xff] %v1208
        %2233 = vst [vmem:[%s394 + $0x2c8] sm:$0xff] %v1209
        %2234 = vst [vmem:[%s394 + $0x2d0] sm:$0xff] %v1210
        %2235 = vst [vmem:[%s394 + $0x2d8] sm:$0xff] %v1211
        %2236 = vst [vmem:[%s394 + $0x2e0] sm:$0xff] %v1212
        %2237 = vst [vmem:[%s394 + $0x2e8] sm:$0xff] %v1213
        %2238 = vst [vmem:[%s394 + $0x2f0] sm:$0xff] %v1214
        %2239 = vst [vmem:[%s394 + $0x2f8] sm:$0xff] %v1215
        %2240 = vst [vmem:[%s394 + $0x300] sm:$0xff] %v1216
        %2241 = vst [vmem:[%s394 + $0x308] sm:$0xff] %v1217
        %2242 = vst [vmem:[%s394 + $0x310] sm:$0xff] %v1218
        %2243 = vst [vmem:[%s394 + $0x318] sm:$0xff] %v1219
        %2244 = vst [vmem:[%s394 + $0x320] sm:$0xff] %v1220
        %2245 = vst [vmem:[%s394 + $0x328] sm:$0xff] %v1221
        %2246 = vst [vmem:[%s394 + $0x330] sm:$0xff] %v1222
        %2247 = vst [vmem:[%s394 + $0x338] sm:$0xff] %v1223
        %2248 = vst [vmem:[%s394 + $0x340] sm:$0xff] %v1224
        %2249 = vst [vmem:[%s394 + $0x348] sm:$0xff] %v1225
        %2250 = vst [vmem:[%s394 + $0x350] sm:$0xff] %v1226
        %2251 = vst [vmem:[%s394 + $0x358] sm:$0xff] %v1227
        %2252 = vst [vmem:[%s394 + $0x360] sm:$0xff] %v1228
        %2253 = vst [vmem:[%s394 + $0x368] sm:$0xff] %v1229
        %2254 = vst [vmem:[%s394 + $0x370] sm:$0xff] %v1230
        %2255 = vst [vmem:[%s394 + $0x378] sm:$0xff] %v1231
        %2256 = vst [vmem:[%s394 + $0x380] sm:$0xff] %v1232
        %2257 = vst [vmem:[%s394 + $0x388] sm:$0xff] %v1233
        %2258 = vst [vmem:[%s394 + $0x390] sm:$0xff] %v1234
        %2259 = vst [vmem:[%s394 + $0x398] sm:$0xff] %v1235
        %2260 = vst [vmem:[%s394 + $0x3a0] sm:$0xff] %v1236
        %2261 = vst [vmem:[%s394 + $0x3a8] sm:$0xff] %v1237
        %2262 = vst [vmem:[%s394 + $0x3b0] sm:$0xff] %v1238
        %2263 = vst [vmem:[%s394 + $0x3b8] sm:$0xff] %v1239
        %2264 = vst [vmem:[%s394 + $0x3c0] sm:$0xff] %v1240
        %2265 = vst [vmem:[%s394 + $0x3c8] sm:$0xff] %v1241
        %2266 = vst [vmem:[%s394 + $0x3d0] sm:$0xff] %v1242
        %2267 = vst [vmem:[%s394 + $0x3d8] sm:$0xff] %v1243
        %2268 = vst [vmem:[%s394 + $0x3e0] sm:$0xff] %v1244
        %2269 = vst [vmem:[%s394 + $0x3e8] sm:$0xff] %v1245
        %2270 = vst [vmem:[%s394 + $0x3f0] sm:$0xff] %v1246
        %2271 = vst [vmem:[%s394 + $0x3f8] sm:$0xff] %v1247
        %2272 = vst [vmem:[%s401] sm:$0xff] %v1632
        %2273 = vst [vmem:[%s401 + $0x8] sm:$0xff] %v1633
        %2274 = vst [vmem:[%s401 + $0x10] sm:$0xff] %v1634
        %2275 = vst [vmem:[%s401 + $0x18] sm:$0xff] %v1635
        %2276 = vst [vmem:[%s401 + $0x20] sm:$0xff] %v1636
        %2277 = vst [vmem:[%s401 + $0x28] sm:$0xff] %v1637
        %2278 = vst [vmem:[%s401 + $0x30] sm:$0xff] %v1638
        %2279 = vst [vmem:[%s401 + $0x38] sm:$0xff] %v1639
        %2280 = vst [vmem:[%s401 + $0x40] sm:$0xff] %v1640
        %2281 = vst [vmem:[%s401 + $0x48] sm:$0xff] %v1641
        %2282 = vst [vmem:[%s401 + $0x50] sm:$0xff] %v1642
        %2283 = vst [vmem:[%s401 + $0x58] sm:$0xff] %v1643
        %2284 = vst [vmem:[%s401 + $0x60] sm:$0xff] %v1644
        %2285 = vst [vmem:[%s401 + $0x68] sm:$0xff] %v1645
        %2286 = vst [vmem:[%s401 + $0x70] sm:$0xff] %v1646
        %2287 = vst [vmem:[%s401 + $0x78] sm:$0xff] %v1647
        %2288 = vst [vmem:[%s401 + $0x80] sm:$0xff] %v1648
        %2289 = vst [vmem:[%s401 + $0x88] sm:$0xff] %v1649
        %2290 = vst [vmem:[%s401 + $0x90] sm:$0xff] %v1650
        %2291 = vst [vmem:[%s401 + $0x98] sm:$0xff] %v1651
        %2292 = vst [vmem:[%s401 + $0xa0] sm:$0xff] %v1652
        %2293 = vst [vmem:[%s401 + $0xa8] sm:$0xff] %v1653
        %2294 = vst [vmem:[%s401 + $0xb0] sm:$0xff] %v1654
        %2295 = vst [vmem:[%s401 + $0xb8] sm:$0xff] %v1655
        %2296 = vst [vmem:[%s401 + $0xc0] sm:$0xff] %v1656
        %2297 = vst [vmem:[%s401 + $0xc8] sm:$0xff] %v1657
        %2298 = vst [vmem:[%s401 + $0xd0] sm:$0xff] %v1658
        %2299 = vst [vmem:[%s401 + $0xd8] sm:$0xff] %v1659
        %2300 = vst [vmem:[%s401 + $0xe0] sm:$0xff] %v1660
        %2301 = vst [vmem:[%s401 + $0xe8] sm:$0xff] %v1661
        %2302 = vst [vmem:[%s401 + $0xf0] sm:$0xff] %v1662
        %2303 = vst [vmem:[%s401 + $0xf8] sm:$0xff] %v1663
        %2304 = vst [vmem:[%s401 + $0x100] sm:$0xff] %v1664
        %2305 = vst [vmem:[%s401 + $0x108] sm:$0xff] %v1665
        %2306 = vst [vmem:[%s401 + $0x110] sm:$0xff] %v1666
        %2307 = vst [vmem:[%s401 + $0x118] sm:$0xff] %v1667
        %2308 = vst [vmem:[%s401 + $0x120] sm:$0xff] %v1668
        %2309 = vst [vmem:[%s401 + $0x128] sm:$0xff] %v1669
        %2310 = vst [vmem:[%s401 + $0x130] sm:$0xff] %v1670
        %2311 = vst [vmem:[%s401 + $0x138] sm:$0xff] %v1671
        %2312 = vst [vmem:[%s401 + $0x140] sm:$0xff] %v1672
        %2313 = vst [vmem:[%s401 + $0x148] sm:$0xff] %v1673
        %2314 = vst [vmem:[%s401 + $0x150] sm:$0xff] %v1674
        %2315 = vst [vmem:[%s401 + $0x158] sm:$0xff] %v1675
        %2316 = vst [vmem:[%s401 + $0x160] sm:$0xff] %v1676
        %2317 = vst [vmem:[%s401 + $0x168] sm:$0xff] %v1677
        %2318 = vst [vmem:[%s401 + $0x170] sm:$0xff] %v1678
        %2319 = vst [vmem:[%s401 + $0x178] sm:$0xff] %v1679
        %2320 = vst [vmem:[%s401 + $0x180] sm:$0xff] %v1680
        %2321 = vst [vmem:[%s401 + $0x188] sm:$0xff] %v1681
        %2322 = vst [vmem:[%s401 + $0x190] sm:$0xff] %v1682
        %2323 = vst [vmem:[%s401 + $0x198] sm:$0xff] %v1683
        %2324 = vst [vmem:[%s401 + $0x1a0] sm:$0xff] %v1684
        %2325 = vst [vmem:[%s401 + $0x1a8] sm:$0xff] %v1685
        %2326 = vst [vmem:[%s401 + $0x1b0] sm:$0xff] %v1686
        %2327 = vst [vmem:[%s401 + $0x1b8] sm:$0xff] %v1687
        %2328 = vst [vmem:[%s401 + $0x1c0] sm:$0xff] %v1688
        %2329 = vst [vmem:[%s401 + $0x1c8] sm:$0xff] %v1689
        %2330 = vst [vmem:[%s401 + $0x1d0] sm:$0xff] %v1690
        %2331 = vst [vmem:[%s401 + $0x1d8] sm:$0xff] %v1691
        %2332 = vst [vmem:[%s401 + $0x1e0] sm:$0xff] %v1692
        %2333 = vst [vmem:[%s401 + $0x1e8] sm:$0xff] %v1693
        %2334 = vst [vmem:[%s401 + $0x1f0] sm:$0xff] %v1694
        %2335 = vst [vmem:[%s401 + $0x1f8] sm:$0xff] %v1695
        %2336 = vst [vmem:[%s401 + $0x200] sm:$0xff] %v1696
        %2337 = vst [vmem:[%s401 + $0x208] sm:$0xff] %v1697
        %2338 = vst [vmem:[%s401 + $0x210] sm:$0xff] %v1698
        %2339 = vst [vmem:[%s401 + $0x218] sm:$0xff] %v1699
        %2340 = vst [vmem:[%s401 + $0x220] sm:$0xff] %v1700
        %2341 = vst [vmem:[%s401 + $0x228] sm:$0xff] %v1701
        %2342 = vst [vmem:[%s401 + $0x230] sm:$0xff] %v1702
        %2343 = vst [vmem:[%s401 + $0x238] sm:$0xff] %v1703
        %2344 = vst [vmem:[%s401 + $0x240] sm:$0xff] %v1704
        %2345 = vst [vmem:[%s401 + $0x248] sm:$0xff] %v1705
        %2346 = vst [vmem:[%s401 + $0x250] sm:$0xff] %v1706
        %2347 = vst [vmem:[%s401 + $0x258] sm:$0xff] %v1707
        %2348 = vst [vmem:[%s401 + $0x260] sm:$0xff] %v1708
        %2349 = vst [vmem:[%s401 + $0x268] sm:$0xff] %v1709
        %2350 = vst [vmem:[%s401 + $0x270] sm:$0xff] %v1710
        %2351 = vst [vmem:[%s401 + $0x278] sm:$0xff] %v1711
        %2352 = vst [vmem:[%s401 + $0x280] sm:$0xff] %v1712
        %2353 = vst [vmem:[%s401 + $0x288] sm:$0xff] %v1713
        %2354 = vst [vmem:[%s401 + $0x290] sm:$0xff] %v1714
        %2355 = vst [vmem:[%s401 + $0x298] sm:$0xff] %v1715
        %2356 = vst [vmem:[%s401 + $0x2a0] sm:$0xff] %v1716
        %2357 = vst [vmem:[%s401 + $0x2a8] sm:$0xff] %v1717
        %2358 = vst [vmem:[%s401 + $0x2b0] sm:$0xff] %v1718
        %2359 = vst [vmem:[%s401 + $0x2b8] sm:$0xff] %v1719
        %2360 = vst [vmem:[%s401 + $0x2c0] sm:$0xff] %v1720
        %2361 = vst [vmem:[%s401 + $0x2c8] sm:$0xff] %v1721
        %2362 = vst [vmem:[%s401 + $0x2d0] sm:$0xff] %v1722
        %2363 = vst [vmem:[%s401 + $0x2d8] sm:$0xff] %v1723
        %2364 = vst [vmem:[%s401 + $0x2e0] sm:$0xff] %v1724
        %2365 = vst [vmem:[%s401 + $0x2e8] sm:$0xff] %v1725
        %2366 = vst [vmem:[%s401 + $0x2f0] sm:$0xff] %v1726
        %2367 = vst [vmem:[%s401 + $0x2f8] sm:$0xff] %v1727
        %2368 = vst [vmem:[%s401 + $0x300] sm:$0xff] %v1728
        %2369 = vst [vmem:[%s401 + $0x308] sm:$0xff] %v1729
        %2370 = vst [vmem:[%s401 + $0x310] sm:$0xff] %v1730
        %2371 = vst [vmem:[%s401 + $0x318] sm:$0xff] %v1731
        %2372 = vst [vmem:[%s401 + $0x320] sm:$0xff] %v1732
        %2373 = vst [vmem:[%s401 + $0x328] sm:$0xff] %v1733
        %2374 = vst [vmem:[%s401 + $0x330] sm:$0xff] %v1734
        %2375 = vst [vmem:[%s401 + $0x338] sm:$0xff] %v1735
        %2376 = vst [vmem:[%s401 + $0x340] sm:$0xff] %v1736
        %2377 = vst [vmem:[%s401 + $0x348] sm:$0xff] %v1737
        %2378 = vst [vmem:[%s401 + $0x350] sm:$0xff] %v1738
        %2379 = vst [vmem:[%s401 + $0x358] sm:$0xff] %v1739
        %2380 = vst [vmem:[%s401 + $0x360] sm:$0xff] %v1740
        %2381 = vst [vmem:[%s401 + $0x368] sm:$0xff] %v1741
        %2382 = vst [vmem:[%s401 + $0x370] sm:$0xff] %v1742
        %2383 = vst [vmem:[%s401 + $0x378] sm:$0xff] %v1743
        %2384 = vst [vmem:[%s401 + $0x380] sm:$0xff] %v1744
        %2385 = vst [vmem:[%s401 + $0x388] sm:$0xff] %v1745
        %2386 = vst [vmem:[%s401 + $0x390] sm:$0xff] %v1746
        %2387 = vst [vmem:[%s401 + $0x398] sm:$0xff] %v1747
        %2388 = vst [vmem:[%s401 + $0x3a0] sm:$0xff] %v1748
        %2389 = vst [vmem:[%s401 + $0x3a8] sm:$0xff] %v1749
        %2390 = vst [vmem:[%s401 + $0x3b0] sm:$0xff] %v1750
        %2391 = vst [vmem:[%s401 + $0x3b8] sm:$0xff] %v1751
        %2392 = vst [vmem:[%s401 + $0x3c0] sm:$0xff] %v1752
        %2393 = vst [vmem:[%s401 + $0x3c8] sm:$0xff] %v1753
        %2394 = vst [vmem:[%s401 + $0x3d0] sm:$0xff] %v1754
        %2395 = vst [vmem:[%s401 + $0x3d8] sm:$0xff] %v1755
        %2396 = vst [vmem:[%s401 + $0x3e0] sm:$0xff] %v1756
        %2397 = vst [vmem:[%s401 + $0x3e8] sm:$0xff] %v1757
        %2398 = vst [vmem:[%s401 + $0x3f0] sm:$0xff] %v1758
        %2399 = vst [vmem:[%s401 + $0x3f8] sm:$0xff] %v1759
        %v2400 = vpack.c.bf16 %v2020, %v2016
        %v2401 = vpack.c.bf16 %v2021, %v2017
        %v2402 = vpack.c.bf16 %v2022, %v2018
        %v2403 = vpack.c.bf16 %v2023, %v2019
        %v2404 = vpack.c.bf16 %v2028, %v2024
        %v2405 = vpack.c.bf16 %v2029, %v2025
        %v2406 = vpack.c.bf16 %v2030, %v2026
        %v2407 = vpack.c.bf16 %v2031, %v2027
        %v2408 = vpack.c.bf16 %v2036, %v2032
        %v2409 = vpack.c.bf16 %v2037, %v2033
        %v2410 = vpack.c.bf16 %v2038, %v2034
        %v2411 = vpack.c.bf16 %v2039, %v2035
        %v2412 = vpack.c.bf16 %v2044, %v2040
        %v2413 = vpack.c.bf16 %v2045, %v2041
        %v2414 = vpack.c.bf16 %v2046, %v2042
        %v2415 = vpack.c.bf16 %v2047, %v2043
        %v2416 = vpack.c.bf16 %v2052, %v2048
        %v2417 = vpack.c.bf16 %v2053, %v2049
        %v2418 = vpack.c.bf16 %v2054, %v2050
        %v2419 = vpack.c.bf16 %v2055, %v2051
        %v2420 = vpack.c.bf16 %v2060, %v2056
        %v2421 = vpack.c.bf16 %v2061, %v2057
        %v2422 = vpack.c.bf16 %v2062, %v2058
        %v2423 = vpack.c.bf16 %v2063, %v2059
        %v2424 = vpack.c.bf16 %v2068, %v2064
        %v2425 = vpack.c.bf16 %v2069, %v2065
        %v2426 = vpack.c.bf16 %v2070, %v2066
        %v2427 = vpack.c.bf16 %v2071, %v2067
        %v2428 = vpack.c.bf16 %v2076, %v2072
        %v2429 = vpack.c.bf16 %v2077, %v2073
        %v2430 = vpack.c.bf16 %v2078, %v2074
        %v2431 = vpack.c.bf16 %v2079, %v2075
        %v2432 = vpack.c.bf16 %v2084, %v2080
        %v2433 = vpack.c.bf16 %v2085, %v2081
        %v2434 = vpack.c.bf16 %v2086, %v2082
        %v2435 = vpack.c.bf16 %v2087, %v2083
        %v2436 = vpack.c.bf16 %v2092, %v2088
        %v2437 = vpack.c.bf16 %v2093, %v2089
        %v2438 = vpack.c.bf16 %v2094, %v2090
        %v2439 = vpack.c.bf16 %v2095, %v2091
        %v2440 = vpack.c.bf16 %v2100, %v2096
        %v2441 = vpack.c.bf16 %v2101, %v2097
        %v2442 = vpack.c.bf16 %v2102, %v2098
        %v2443 = vpack.c.bf16 %v2103, %v2099
        %v2444 = vpack.c.bf16 %v2108, %v2104
        %v2445 = vpack.c.bf16 %v2109, %v2105
        %v2446 = vpack.c.bf16 %v2110, %v2106
        %v2447 = vpack.c.bf16 %v2111, %v2107
        %v2448 = vpack.c.bf16 %v2116, %v2112
        %v2449 = vpack.c.bf16 %v2117, %v2113
        %v2450 = vpack.c.bf16 %v2118, %v2114
        %v2451 = vpack.c.bf16 %v2119, %v2115
        %v2452 = vpack.c.bf16 %v2124, %v2120
        %v2453 = vpack.c.bf16 %v2125, %v2121
        %v2454 = vpack.c.bf16 %v2126, %v2122
        %v2455 = vpack.c.bf16 %v2127, %v2123
        %v2456 = vpack.c.bf16 %v2132, %v2128
        %v2457 = vpack.c.bf16 %v2133, %v2129
        %v2458 = vpack.c.bf16 %v2134, %v2130
        %v2459 = vpack.c.bf16 %v2135, %v2131
        %v2460 = vpack.c.bf16 %v2140, %v2136
        %v2461 = vpack.c.bf16 %v2141, %v2137
        %v2462 = vpack.c.bf16 %v2142, %v2138
        %v2463 = vpack.c.bf16 %v2143, %v2139
        %v2528 = vunpack.c.l.b16 %v2400
        %v2529 = vunpack.c.l.b16 %v2401
        %v2530 = vunpack.c.l.b16 %v2402
        %v2531 = vunpack.c.l.b16 %v2403
        %v2532 = vunpack.c.h.b16 %v2400
        %v2533 = vunpack.c.h.b16 %v2401
        %v2534 = vunpack.c.h.b16 %v2402
        %v2535 = vunpack.c.h.b16 %v2403
        %v2536 = vunpack.c.l.b16 %v2404
        %v2537 = vunpack.c.l.b16 %v2405
        %v2538 = vunpack.c.l.b16 %v2406
        %v2539 = vunpack.c.l.b16 %v2407
        %v2540 = vunpack.c.h.b16 %v2404
        %v2541 = vunpack.c.h.b16 %v2405
        %v2542 = vunpack.c.h.b16 %v2406
        %v2543 = vunpack.c.h.b16 %v2407
        %v2544 = vunpack.c.l.b16 %v2408
        %v2545 = vunpack.c.l.b16 %v2409
        %v2546 = vunpack.c.l.b16 %v2410
        %v2547 = vunpack.c.l.b16 %v2411
        %v2548 = vunpack.c.h.b16 %v2408
        %v2549 = vunpack.c.h.b16 %v2409
        %v2550 = vunpack.c.h.b16 %v2410
        %v2551 = vunpack.c.h.b16 %v2411
        %v2552 = vunpack.c.l.b16 %v2412
        %v2553 = vunpack.c.l.b16 %v2413
        %v2554 = vunpack.c.l.b16 %v2414
        %v2555 = vunpack.c.l.b16 %v2415
        %v2556 = vunpack.c.h.b16 %v2412
        %v2557 = vunpack.c.h.b16 %v2413
        %v2558 = vunpack.c.h.b16 %v2414
        %v2559 = vunpack.c.h.b16 %v2415
        %v2560 = vunpack.c.l.b16 %v2416
        %v2561 = vunpack.c.l.b16 %v2417
        %v2562 = vunpack.c.l.b16 %v2418
        %v2563 = vunpack.c.l.b16 %v2419
        %v2564 = vunpack.c.h.b16 %v2416
        %v2565 = vunpack.c.h.b16 %v2417
        %v2566 = vunpack.c.h.b16 %v2418
        %v2567 = vunpack.c.h.b16 %v2419
        %v2568 = vunpack.c.l.b16 %v2420
        %v2569 = vunpack.c.l.b16 %v2421
        %v2570 = vunpack.c.l.b16 %v2422
        %v2571 = vunpack.c.l.b16 %v2423
        %v2572 = vunpack.c.h.b16 %v2420
        %v2573 = vunpack.c.h.b16 %v2421
        %v2574 = vunpack.c.h.b16 %v2422
        %v2575 = vunpack.c.h.b16 %v2423
        %v2576 = vunpack.c.l.b16 %v2424
        %v2577 = vunpack.c.l.b16 %v2425
        %v2578 = vunpack.c.l.b16 %v2426
        %v2579 = vunpack.c.l.b16 %v2427
        %v2580 = vunpack.c.h.b16 %v2424
        %v2581 = vunpack.c.h.b16 %v2425
        %v2582 = vunpack.c.h.b16 %v2426
        %v2583 = vunpack.c.h.b16 %v2427
        %v2584 = vunpack.c.l.b16 %v2428
        %v2585 = vunpack.c.l.b16 %v2429
        %v2586 = vunpack.c.l.b16 %v2430
        %v2587 = vunpack.c.l.b16 %v2431
        %v2588 = vunpack.c.h.b16 %v2428
        %v2589 = vunpack.c.h.b16 %v2429
        %v2590 = vunpack.c.h.b16 %v2430
        %v2591 = vunpack.c.h.b16 %v2431
        %v2592 = vunpack.c.l.b16 %v2432
        %v2593 = vunpack.c.l.b16 %v2433
        %v2594 = vunpack.c.l.b16 %v2434
        %v2595 = vunpack.c.l.b16 %v2435
        %v2596 = vunpack.c.h.b16 %v2432
        %v2597 = vunpack.c.h.b16 %v2433
        %v2598 = vunpack.c.h.b16 %v2434
        %v2599 = vunpack.c.h.b16 %v2435
        %v2600 = vunpack.c.l.b16 %v2436
        %v2601 = vunpack.c.l.b16 %v2437
        %v2602 = vunpack.c.l.b16 %v2438
        %v2603 = vunpack.c.l.b16 %v2439
        %v2604 = vunpack.c.h.b16 %v2436
        %v2605 = vunpack.c.h.b16 %v2437
        %v2606 = vunpack.c.h.b16 %v2438
        %v2607 = vunpack.c.h.b16 %v2439
        %v2608 = vunpack.c.l.b16 %v2440
        %v2609 = vunpack.c.l.b16 %v2441
        %v2610 = vunpack.c.l.b16 %v2442
        %v2611 = vunpack.c.l.b16 %v2443
        %v2612 = vunpack.c.h.b16 %v2440
        %v2613 = vunpack.c.h.b16 %v2441
        %v2614 = vunpack.c.h.b16 %v2442
        %v2615 = vunpack.c.h.b16 %v2443
        %v2616 = vunpack.c.l.b16 %v2444
        %v2617 = vunpack.c.l.b16 %v2445
        %v2618 = vunpack.c.l.b16 %v2446
        %v2619 = vunpack.c.l.b16 %v2447
        %v2620 = vunpack.c.h.b16 %v2444
        %v2621 = vunpack.c.h.b16 %v2445
        %v2622 = vunpack.c.h.b16 %v2446
        %v2623 = vunpack.c.h.b16 %v2447
        %v2624 = vunpack.c.l.b16 %v2448
        %v2625 = vunpack.c.l.b16 %v2449
        %v2626 = vunpack.c.l.b16 %v2450
        %v2627 = vunpack.c.l.b16 %v2451
        %v2628 = vunpack.c.h.b16 %v2448
        %v2629 = vunpack.c.h.b16 %v2449
        %v2630 = vunpack.c.h.b16 %v2450
        %v2631 = vunpack.c.h.b16 %v2451
        %v2632 = vunpack.c.l.b16 %v2452
        %v2633 = vunpack.c.l.b16 %v2453
        %v2634 = vunpack.c.l.b16 %v2454
        %v2635 = vunpack.c.l.b16 %v2455
        %v2636 = vunpack.c.h.b16 %v2452
        %v2637 = vunpack.c.h.b16 %v2453
        %v2638 = vunpack.c.h.b16 %v2454
        %v2639 = vunpack.c.h.b16 %v2455
        %v2640 = vunpack.c.l.b16 %v2456
        %v2641 = vunpack.c.l.b16 %v2457
        %v2642 = vunpack.c.l.b16 %v2458
        %v2643 = vunpack.c.l.b16 %v2459
        %v2644 = vunpack.c.h.b16 %v2456
        %v2645 = vunpack.c.h.b16 %v2457
        %v2646 = vunpack.c.h.b16 %v2458
        %v2647 = vunpack.c.h.b16 %v2459
        %v2648 = vunpack.c.l.b16 %v2460
        %v2649 = vunpack.c.l.b16 %v2461
        %v2650 = vunpack.c.l.b16 %v2462
        %v2651 = vunpack.c.l.b16 %v2463
        %v2652 = vunpack.c.h.b16 %v2460
        %v2653 = vunpack.c.h.b16 %v2461
        %v2654 = vunpack.c.h.b16 %v2462
        %v2655 = vunpack.c.h.b16 %v2463
        %v2656 = vpack.c.b16 %v2529, %v2528
        %v2657 = vpack.c.b16 %v2531, %v2530
        %v2658 = vpack.c.b16 %v2533, %v2532
        %v2659 = vpack.c.b16 %v2535, %v2534
        %v2660 = vpack.c.b16 %v2537, %v2536
        %v2661 = vpack.c.b16 %v2539, %v2538
        %v2662 = vpack.c.b16 %v2541, %v2540
        %v2663 = vpack.c.b16 %v2543, %v2542
        %v2664 = vpack.c.b16 %v2545, %v2544
        %v2665 = vpack.c.b16 %v2547, %v2546
        %v2666 = vpack.c.b16 %v2549, %v2548
        %v2667 = vpack.c.b16 %v2551, %v2550
        %v2668 = vpack.c.b16 %v2553, %v2552
        %v2669 = vpack.c.b16 %v2555, %v2554
        %v2670 = vpack.c.b16 %v2557, %v2556
        %v2671 = vpack.c.b16 %v2559, %v2558
        %v2672 = vpack.c.b16 %v2561, %v2560
        %v2673 = vpack.c.b16 %v2563, %v2562
        %v2674 = vpack.c.b16 %v2565, %v2564
        %v2675 = vpack.c.b16 %v2567, %v2566
        %v2676 = vpack.c.b16 %v2569, %v2568
        %v2677 = vpack.c.b16 %v2571, %v2570
        %v2678 = vpack.c.b16 %v2573, %v2572
        %v2679 = vpack.c.b16 %v2575, %v2574
        %v2680 = vpack.c.b16 %v2577, %v2576
        %v2681 = vpack.c.b16 %v2579, %v2578
        %v2682 = vpack.c.b16 %v2581, %v2580
        %v2683 = vpack.c.b16 %v2583, %v2582
        %v2684 = vpack.c.b16 %v2585, %v2584
        %v2685 = vpack.c.b16 %v2587, %v2586
        %v2686 = vpack.c.b16 %v2589, %v2588
        %v2687 = vpack.c.b16 %v2591, %v2590
        %v2688 = vpack.c.b16 %v2593, %v2592
        %v2689 = vpack.c.b16 %v2595, %v2594
        %v2690 = vpack.c.b16 %v2597, %v2596
        %v2691 = vpack.c.b16 %v2599, %v2598
        %v2692 = vpack.c.b16 %v2601, %v2600
        %v2693 = vpack.c.b16 %v2603, %v2602
        %v2694 = vpack.c.b16 %v2605, %v2604
        %v2695 = vpack.c.b16 %v2607, %v2606
        %v2696 = vpack.c.b16 %v2609, %v2608
        %v2697 = vpack.c.b16 %v2611, %v2610
        %v2698 = vpack.c.b16 %v2613, %v2612
        %v2699 = vpack.c.b16 %v2615, %v2614
        %v2700 = vpack.c.b16 %v2617, %v2616
        %v2701 = vpack.c.b16 %v2619, %v2618
        %v2702 = vpack.c.b16 %v2621, %v2620
        %v2703 = vpack.c.b16 %v2623, %v2622
        %v2704 = vpack.c.b16 %v2625, %v2624
        %v2705 = vpack.c.b16 %v2627, %v2626
        %v2706 = vpack.c.b16 %v2629, %v2628
        %v2707 = vpack.c.b16 %v2631, %v2630
        %v2708 = vpack.c.b16 %v2633, %v2632
        %v2709 = vpack.c.b16 %v2635, %v2634
        %v2710 = vpack.c.b16 %v2637, %v2636
        %v2711 = vpack.c.b16 %v2639, %v2638
        %v2712 = vpack.c.b16 %v2641, %v2640
        %v2713 = vpack.c.b16 %v2643, %v2642
        %v2714 = vpack.c.b16 %v2645, %v2644
        %v2715 = vpack.c.b16 %v2647, %v2646
        %v2716 = vpack.c.b16 %v2649, %v2648
        %v2717 = vpack.c.b16 %v2651, %v2650
        %v2718 = vpack.c.b16 %v2653, %v2652
        %v2719 = vpack.c.b16 %v2655, %v2654
        %2784 = vst [vmem:[%s408] sm:$0xff] %v2656
        %2785 = vst [vmem:[%s408 + $0x8] sm:$0xff] %v2657
        %2786 = vst [vmem:[%s408 + $0x10] sm:$0xff] %v2658
        %2787 = vst [vmem:[%s408 + $0x18] sm:$0xff] %v2659
        %2788 = vst [vmem:[%s408 + $0x20] sm:$0xff] %v2660
        %2789 = vst [vmem:[%s408 + $0x28] sm:$0xff] %v2661
        %2790 = vst [vmem:[%s408 + $0x30] sm:$0xff] %v2662
        %2791 = vst [vmem:[%s408 + $0x38] sm:$0xff] %v2663
        %2792 = vst [vmem:[%s408 + $0x40] sm:$0xff] %v2664
        %2793 = vst [vmem:[%s408 + $0x48] sm:$0xff] %v2665
        %2794 = vst [vmem:[%s408 + $0x50] sm:$0xff] %v2666
        %2795 = vst [vmem:[%s408 + $0x58] sm:$0xff] %v2667
        %2796 = vst [vmem:[%s408 + $0x60] sm:$0xff] %v2668
        %2797 = vst [vmem:[%s408 + $0x68] sm:$0xff] %v2669
        %2798 = vst [vmem:[%s408 + $0x70] sm:$0xff] %v2670
        %2799 = vst [vmem:[%s408 + $0x78] sm:$0xff] %v2671
        %2800 = vst [vmem:[%s408 + $0x80] sm:$0xff] %v2672
        %2801 = vst [vmem:[%s408 + $0x88] sm:$0xff] %v2673
        %2802 = vst [vmem:[%s408 + $0x90] sm:$0xff] %v2674
        %2803 = vst [vmem:[%s408 + $0x98] sm:$0xff] %v2675
        %2804 = vst [vmem:[%s408 + $0xa0] sm:$0xff] %v2676
        %2805 = vst [vmem:[%s408 + $0xa8] sm:$0xff] %v2677
        %2806 = vst [vmem:[%s408 + $0xb0] sm:$0xff] %v2678
        %2807 = vst [vmem:[%s408 + $0xb8] sm:$0xff] %v2679
        %2808 = vst [vmem:[%s408 + $0xc0] sm:$0xff] %v2680
        %2809 = vst [vmem:[%s408 + $0xc8] sm:$0xff] %v2681
        %2810 = vst [vmem:[%s408 + $0xd0] sm:$0xff] %v2682
        %2811 = vst [vmem:[%s408 + $0xd8] sm:$0xff] %v2683
        %2812 = vst [vmem:[%s408 + $0xe0] sm:$0xff] %v2684
        %2813 = vst [vmem:[%s408 + $0xe8] sm:$0xff] %v2685
        %2814 = vst [vmem:[%s408 + $0xf0] sm:$0xff] %v2686
        %2815 = vst [vmem:[%s408 + $0xf8] sm:$0xff] %v2687
        %2816 = vst [vmem:[%s408 + $0x100] sm:$0xff] %v2688
        %2817 = vst [vmem:[%s408 + $0x108] sm:$0xff] %v2689
        %2818 = vst [vmem:[%s408 + $0x110] sm:$0xff] %v2690
        %2819 = vst [vmem:[%s408 + $0x118] sm:$0xff] %v2691
        %2820 = vst [vmem:[%s408 + $0x120] sm:$0xff] %v2692
        %2821 = vst [vmem:[%s408 + $0x128] sm:$0xff] %v2693
        %2822 = vst [vmem:[%s408 + $0x130] sm:$0xff] %v2694
        %2823 = vst [vmem:[%s408 + $0x138] sm:$0xff] %v2695
        %2824 = vst [vmem:[%s408 + $0x140] sm:$0xff] %v2696
        %2825 = vst [vmem:[%s408 + $0x148] sm:$0xff] %v2697
        %2826 = vst [vmem:[%s408 + $0x150] sm:$0xff] %v2698
        %2827 = vst [vmem:[%s408 + $0x158] sm:$0xff] %v2699
        %2828 = vst [vmem:[%s408 + $0x160] sm:$0xff] %v2700
        %2829 = vst [vmem:[%s408 + $0x168] sm:$0xff] %v2701
        %2830 = vst [vmem:[%s408 + $0x170] sm:$0xff] %v2702
        %2831 = vst [vmem:[%s408 + $0x178] sm:$0xff] %v2703
        %2832 = vst [vmem:[%s408 + $0x180] sm:$0xff] %v2704
        %2833 = vst [vmem:[%s408 + $0x188] sm:$0xff] %v2705
        %2834 = vst [vmem:[%s408 + $0x190] sm:$0xff] %v2706
        %2835 = vst [vmem:[%s408 + $0x198] sm:$0xff] %v2707
        %2836 = vst [vmem:[%s408 + $0x1a0] sm:$0xff] %v2708
        %2837 = vst [vmem:[%s408 + $0x1a8] sm:$0xff] %v2709
        %2838 = vst [vmem:[%s408 + $0x1b0] sm:$0xff] %v2710
        %2839 = vst [vmem:[%s408 + $0x1b8] sm:$0xff] %v2711
        %2840 = vst [vmem:[%s408 + $0x1c0] sm:$0xff] %v2712
        %2841 = vst [vmem:[%s408 + $0x1c8] sm:$0xff] %v2713
        %2842 = vst [vmem:[%s408 + $0x1d0] sm:$0xff] %v2714
        %2843 = vst [vmem:[%s408 + $0x1d8] sm:$0xff] %v2715
        %2844 = vst [vmem:[%s408 + $0x1e0] sm:$0xff] %v2716
        %2845 = vst [vmem:[%s408 + $0x1e8] sm:$0xff] %v2717
        %2846 = vst [vmem:[%s408 + $0x1f0] sm:$0xff] %v2718
        %2847 = vst [vmem:[%s408 + $0x1f8] sm:$0xff] %v2719
        %s2848 = sand.u32 %s145, 1
        %s2849 = scalar_lea.sflag [#allocation4], %s2848
        %s2850 = sand.u32 %s145, 1
        %s2851 = smul.addr %s2850, 1024
        %s2852 = scalar_lea.vmem [#allocation10], %s2851
        %s2853 = sand.u32 %s33, 1
        %s2854 = scalar_lea.sflag [#allocation12], %s2853
        %s2855 = sand.u32 %s171, 1
        %s2856 = smul.addr %s2855, 1024
        %s2857 = scalar_lea.vmem [#allocation11], %s2856
        %s2858 = sand.u32 %s33, 1
        %s2859 = scalar_lea.sflag [#allocation12], %s2858
        %s2860 = sand.u32 %s197, 1
        %s2861 = smul.addr %s2860, 512
        %s2862 = scalar_lea.vmem [#allocation13], %s2861
        // Predicated region
        $region53: #{adareg_update.1} parent=35 // pred_check
          %p2863 = pneg %p155
        $region54: #{adareg_update.1} parent=35 // pred_check_branch
          %2865 = sbr.rel (%p2863) target = $region56
        $region55: #{adareg_update.1} parent=35 // pred_region
          %s2866 = smul.u32 32, %s33
          %s2868 = ssub.s32 16384, 16384
          %2869 = vsyncadd %s2849, %s2868
          %s2870 = smul.addr %s2866, 4
          %s2871 = smul.addr %s2870, 128
          %s2872 = scalar_lea.hbm %s4, %s2871
          %s2873 = sshll.u32 %s2852, 4
          %s2874 = int_to_ptr.vmem [resolvable:$true] %s2873
          %2879 = dma.vmem_to_hbm [thread:$0]  %s2874, 16384, %s2872, %s2849, 512, 512, 32
        $region56: #{adareg_update.1} parent=35 // pred_fallthru
          _
        // Predicated region
        $region57: #{adareg_update.1} parent=35 // pred_check
          %p2880 = pneg %p181
        $region58: #{adareg_update.1} parent=35 // pred_check_branch
          %2882 = sbr.rel (%p2880) target = $region60
        $region59: #{adareg_update.1} parent=35 // pred_region
          %s2883 = smul.u32 32, %s33
          %s2885 = ssub.s32 16384, 16384
          %2886 = vsyncadd %s2854, %s2885
          %s2887 = smul.addr %s2883, 4
          %s2888 = smul.addr %s2887, 128
          %s2889 = scalar_lea.hbm %s5, %s2888
          %s2890 = sshll.u32 %s2857, 4
          %s2891 = int_to_ptr.vmem [resolvable:$true] %s2890
          %2896 = dma.vmem_to_hbm [thread:$0]  %s2891, 16384, %s2889, %s2854, 512, 512, 32
        $region60: #{adareg_update.1} parent=35 // pred_fallthru
          _
        // Predicated region
        $region61: #{adareg_update.1} parent=35 // pred_check
          %p2897 = pneg %p207
        $region62: #{adareg_update.1} parent=35 // pred_check_branch
          %2899 = sbr.rel (%p2897) target = $region64
        $region63: #{adareg_update.1} parent=35 // pred_region
          %s2900 = smul.u32 32, %s33
          %s2902 = ssub.s32 8192, 8192
          %2903 = vsyncadd %s2859, %s2902
          %s2904 = smul.addr %s2900, 4
          %s2905 = smul.addr %s2904, 64
          %s2906 = scalar_lea.hbm %s6, %s2905
          %s2907 = sshll.u32 %s2862, 4
          %s2908 = int_to_ptr.vmem [resolvable:$true] %s2907
          %2913 = dma.vmem_to_hbm [thread:$0]  %s2908, 8192, %s2906, %s2859, 256, 256, 16
        $region64: #{adareg_update.1} parent=35 // pred_fallthru
          _
      $region36: #{adareg_update.1} parent=5 // pred_fallthru
        _
      %p2914 = scmp.le.s32.totalorder 2, %s28
      // Predicated region
      $region65: #{adareg_update.1} parent=5 // pred_check
        %p2915 = pneg %p2914
      $region66: #{adareg_update.1} parent=5 // pred_check_branch
        %2917 = sbr.rel (%p2915) target = $region68
      $region67: #{adareg_update.1} parent=5 // pred_region
        %s2918 = ssub.s32 %s28, 2
        // Predicated region
        $region69: #{adareg_update.1} parent=67 // pred_check
          %p2919 = pneg %p161
        $region70: #{adareg_update.1} parent=67 // pred_check_branch
          %2921 = sbr.rel (%p2919) target = $region72
        $region71: #{adareg_update.1} parent=67 // pred_region
          %s2922 = sand.u32 %s146, 1
          %s2923 = scalar_lea.sflag [#allocation4], %s2922
          %s2924 = sand.u32 %s146, 1
          %s2925 = smul.addr %s2924, 1024
          %s2926 = scalar_lea.vmem [#allocation10], %s2925
          %2927 = dma.done %s2923, 16384
        $region72: #{adareg_update.1} parent=67 // pred_fallthru
          _
        // Predicated region
        $region73: #{adareg_update.1} parent=67 // pred_check
          %p2928 = pneg %p187
        $region74: #{adareg_update.1} parent=67 // pred_check_branch
          %2930 = sbr.rel (%p2928) target = $region76
        $region75: #{adareg_update.1} parent=67 // pred_region
          %s2931 = sand.u32 %s34, 1
          %s2932 = scalar_lea.sflag [#allocation12], %s2931
          %s2933 = sand.u32 %s172, 1
          %s2934 = smul.addr %s2933, 1024
          %s2935 = scalar_lea.vmem [#allocation11], %s2934
          %2936 = dma.done %s2932, 16384
        $region76: #{adareg_update.1} parent=67 // pred_fallthru
          _
        // Predicated region
        $region77: #{adareg_update.1} parent=67 // pred_check
          %p2937 = pneg %p213
        $region78: #{adareg_update.1} parent=67 // pred_check_branch
          %2939 = sbr.rel (%p2937) target = $region80
        $region79: #{adareg_update.1} parent=67 // pred_region
          %s2940 = sand.u32 %s34, 1
          %s2941 = scalar_lea.sflag [#allocation12], %s2940
          %s2942 = sand.u32 %s198, 1
          %s2943 = smul.addr %s2942, 512
          %s2944 = scalar_lea.vmem [#allocation13], %s2943
          %2945 = dma.done %s2941, 8192
        $region80: #{adareg_update.1} parent=67 // pred_fallthru
          _
      $region68: #{adareg_update.1} parent=5 // pred_fallthru
        _
    $region6: #{adareg_update.1} parent=1 // loop_footer
      %s32 = sadd.s32 1, %s28
    $region7: #{adareg_update.1} parent=1 // loop_footer_branch
      %27 = sbr.rel target = $region3
    $region8: #{adareg_update.1} parent=1 // loop_exit
      _
    %2946 = vsyncpa [#allocation3], 1
    %s2947 = scalar_lea.sflag [#allocation3], 1
    %2948 = vsyncpa %s2947, 1
    %2949 = vsyncpa [#allocation6], 1
    %s2950 = scalar_lea.sflag [#allocation6], 1
    %2951 = vsyncpa %s2950, 1
    %2952 = vsyncpa [#allocation9], 1
    %s2953 = scalar_lea.sflag [#allocation9], 1
    %2954 = vsyncpa %s2953, 1
    %2955 = vsyncpa [#allocation4], 1
    %s2956 = scalar_lea.sflag [#allocation4], 1
    %2957 = vsyncpa %s2956, 1
    %2958 = vsyncpa [#allocation12], 1
    %s2959 = scalar_lea.sflag [#allocation12], 1
    %2960 = vsyncpa %s2959, 1

</llo_original>
